<compile_context>
chip_gen: v6e
topology: v6e:2x2x1
jax: 0.10.0
libtpu: 0.0.40
codegen_flags: <defaults>
</compile_context>

<pallas_src>
import jax
import jax.numpy as jnp
import numpy as np
from jax import lax
from jax.experimental import pallas as pl
from jax.experimental.pallas import tpu as pltpu

NUM_CLASSES = 7
HIDDEN = 64          # hidden_size
CONV_SIZE = 22       # LSTM input feature size
NUM_LAYERS = 2
RULER = 27
EPS = 1e-5
OUT_PAD = 128        # lane-dense merged output width (type | anom | zero pad)


def _lstm_head_kernel(x_ref, ruler_ref, h0_ref, c0_ref,
                      wih0_ref, whh0_ref, b0_ref,
                      w1f_ref, b1_ref,
                      w0a_ref, w0b_ref, bl0_ref,
                      w1_ref, bl1_ref,
                      w2_ref, bl2_ref,
                      whead_ref, bhead_ref,
                      out_ref,
                      xp_ref):
    H = HIDDEN
    B = ruler_ref.shape[0]
    T = x_ref.shape[0] // B

    # ---- hoisted, non-recurrent work -------------------------------------
    # Layer-0 input projection for every timestep in one MXU matmul
    # ((T*B, 22) @ (22, 256)), layer-0 bias (b_ih + b_hh) folded in.
    # Parked in VMEM scratch so it does not occupy 16 vregs across the loop.
    xp_ref[...] = (jnp.dot(x_ref[...], wih0_ref[...],
                           preferred_element_type=jnp.float32)
                   + b0_ref[...])                              # (T*B, 4H)

    def activations(gates, c):
        # PyTorch gate order i, f, g, o stacked along lanes of a (B, 4H) tile.
        # i|f occupy lanes [0:128] -> one sigmoid push covers both gates.
        sif = jax.nn.sigmoid(gates[:, 0:2 * H])
        i = sif[:, 0:H]
        f = sif[:, H:2 * H]
        g = jnp.tanh(gates[:, 2 * H:3 * H])
        o = jax.nn.sigmoid(gates[:, 3 * H:4 * H])
        c_new = f * c + i * g
        h_new = o * jnp.tanh(c_new)
        return h_new, c_new

    h_a, c_a = h0_ref[0], c0_ref[0]
    h_b, c_b = h0_ref[1], c0_ref[1]

    # ---- recurrent chain: T small & static -> full unroll ------------------
    # Weights are re-read from VMEM at each use (3 vld/cycle has slack); do NOT
    # hoist them into values here or the unrolled loop spills vregs.
    for t in range(T):
        pre0 = xp_ref[pl.ds(t * B, B), :]                      # static, aligned slice
        g0 = pre0 + jnp.dot(h_a, whh0_ref[...],
                            preferred_element_type=jnp.float32)
        h_a, c_a = activations(g0, c_a)

        # Fused layer-1 matmul: [h_a | h_b] (B,128) @ W1f (128,256).
        hcat = jnp.concatenate([h_a, h_b], axis=-1)
        g1 = (jnp.dot(hcat, w1f_ref[...],
                      preferred_element_type=jnp.float32)
              + b1_ref[...])
        h_b, c_b = activations(g1, c_b)

    out = h_b                                                  # == out[:, -1, :], (B, H)

    # ---- MLP head ----------------------------------------------------------
    # linear0 over concat([out, ruler], -1): split as out@W0a + ruler@W0b + b
    h = (jnp.dot(out, w0a_ref[...], preferred_element_type=jnp.float32)
         + jnp.dot(ruler_ref[...], w0b_ref[...], preferred_element_type=jnp.float32)
         + bl0_ref[...])
    h = jnp.dot(h, w1_ref[...], preferred_element_type=jnp.float32) + bl1_ref[...]
    h = jnp.dot(h, w2_ref[...], preferred_element_type=jnp.float32) + bl2_ref[...]

    # Fused + lane-padded head: [linearDiog | linearDect | 0...] as one
    # (16, 128) matmul -> logits are already a full-lane tile, lanes >= 9 are 0.
    logits = (jnp.dot(h, whead_ref[...], preferred_element_type=jnp.float32)
              + bhead_ref[...])                                # (B, 128)

    def bn_stats(v):
        # BatchNorm1d(num_features=1), training mode, gamma=1, beta=0:
        # normalize over all (batch, length) elements of the single channel.
        mean = jnp.mean(v, keepdims=True)
        var = jnp.mean((v - mean) ** 2, keepdims=True)
        return mean, lax.rsqrt(var + EPS)

    t_mean, t_rstd = bn_stats(logits[:, :NUM_CLASSES])
    a_mean, a_rstd = bn_stats(logits[:, NUM_CLASSES:NUM_CLASSES + 2])

    # Per-lane select of the right (mean, rstd) -> single full-vreg normalize
    # and ONE unmasked (B,128) store / output DMA (pad lanes come out 0).
    lane = lax.broadcasted_iota(jnp.int32, (B, OUT_PAD), 1)
    mean_vec = jnp.where(lane < NUM_CLASSES, t_mean,
                         jnp.where(lane < NUM_CLASSES + 2, a_mean, 0.0))
    rstd_vec = jnp.where(lane < NUM_CLASSES, t_rstd,
                         jnp.where(lane < NUM_CLASSES + 2, a_rstd, 0.0))
    out_ref[...] = (logits - mean_vec) * rstd_vec


def lstm_forward(x, ruler, params, h0, c0):
    """x: (B, T, 22) f32, ruler: reshapeable to (B, 27)."""
    B, T, _ = x.shape
    # time-major flatten: row t*B + b corresponds to (t, b)
    x_tm = jnp.transpose(x, (1, 0, 2)).reshape(T * B, CONV_SIZE)
    ruler = ruler.reshape(-1, RULER)

    args = (x_tm, ruler, h0, c0,
            params["wih0"], params["whh0"], params["b0"],
            params["w1f"], params["b1"],
            params["w0a"], params["w0b"], params["bl0"],
            params["w1"], params["bl1"],
            params["w2"], params["bl2"],
            params["whead"], params["bhead"])

    vmem = pl.BlockSpec(memory_space=pltpu.MemorySpace.VMEM)
    out = pl.pallas_call(
        _lstm_head_kernel,
        out_shape=jax.ShapeDtypeStruct((B, OUT_PAD), jnp.float32),
        in_specs=[vmem] * len(args),
        out_specs=vmem,
        scratch_shapes=[pltpu.VMEM((T * B, 4 * HIDDEN), jnp.float32)],
    )(*args)
    # Split the merged lane-padded output in the wrapper.
    return out[:, :NUM_CLASSES], out[:, NUM_CLASSES:NUM_CLASSES + 2]


def reference_forward(x, ruler, params, h0, c0):
    """Plain-JAX reference (same fused [i|f|g|o] / stacked-layer-1 layout)."""
    B, T, _ = x.shape
    H = HIDDEN

    def act(g, c):
        i = jax.nn.sigmoid(g[:, 0:H])
        f = jax.nn.sigmoid(g[:, H:2 * H])
        gg = jnp.tanh(g[:, 2 * H:3 * H])
        o = jax.nn.sigmoid(g[:, 3 * H:4 * H])
        c = f * c + i * gg
        return o * jnp.tanh(c), c

    h_a, c_a, h_b, c_b = h0[0], c0[0], h0[1], c0[1]
    for t in range(T):
        g0 = x[:, t, :] @ params["wih0"] + h_a @ params["whh0"] + params["b0"]
        h_a, c_a = act(g0, c_a)
        g1 = jnp.concatenate([h_a, h_b], -1) @ params["w1f"] + params["b1"]
        h_b, c_b = act(g1, c_b)
    out = h_b

    ruler = ruler.reshape(-1, RULER)
    h = out @ params["w0a"] + ruler @ params["w0b"] + params["bl0"]
    h = h @ params["w1"] + params["bl1"]
    h = h @ params["w2"] + params["bl2"]
    logits = (h @ params["whead"] + params["bhead"])[:, :NUM_CLASSES + 2]
    tl = logits[:, :NUM_CLASSES]
    al = logits[:, NUM_CLASSES:]

    def bn(v):
        m = jnp.mean(v)
        var = jnp.mean((v - m) ** 2)
        return (v - m) / jnp.sqrt(var + EPS)

    return bn(tl), bn(al)


def make_params(key):
    ks = jax.random.split(key, 16)

    def u(k, shape, scale=0.1):
        return jax.random.uniform(k, shape, jnp.float32, -scale, scale)

    H4 = 4 * HIDDEN
    # Fused head [linearDiog (16->7) | linearDect (16->2)], zero-padded to 128
    # output lanes so the kernel's head matmul produces a lane-dense tile.
    whead = jnp.zeros((HIDDEN // 4, OUT_PAD), jnp.float32)
    whead = whead.at[:, :NUM_CLASSES + 2].set(u(ks[13], (HIDDEN // 4, NUM_CLASSES + 2)))
    bhead = jnp.zeros((1, OUT_PAD), jnp.float32)
    bhead = bhead.at[:, :NUM_CLASSES + 2].set(u(ks[14], (1, NUM_CLASSES + 2)))

    return {
        # LSTM layer 0 (input 22 -> hidden 64); fused gates [i|f|g|o] along
        # the output dim, weights pre-transposed to (in, 4H).
        "wih0": u(ks[0], (CONV_SIZE, H4)),
        "whh0": u(ks[1], (HIDDEN, H4)),
        "b0":   u(ks[2], (1, H4)),              # b_ih + b_hh combined
        # LSTM layer 1 (hidden 64 -> hidden 64): wih1 and whh1 stacked along K
        # -> one (128, 256) matmul per timestep with LHS [h_layer0 | h_layer1].
        "w1f":  jnp.concatenate([u(ks[3], (HIDDEN, H4)),
                                 u(ks[4], (HIDDEN, H4))], axis=0),
        "b1":   u(ks[5], (1, H4)),
        # linear0: in = 64 + 27, split into the two matmul halves
        "w0a":  u(ks[6], (HIDDEN, HIDDEN)),
        "w0b":  u(ks[7], (RULER, HIDDEN)),
        "bl0":  u(ks[8], (1, HIDDEN)),
        # linear1: 64 -> 32
        "w1":   u(ks[9], (HIDDEN, HIDDEN // 2)),
        "bl1":  u(ks[10], (1, HIDDEN // 2)),
        # linear2: 32 -> 16
        "w2":   u(ks[11], (HIDDEN // 2, HIDDEN // 4)),
        "bl2":  u(ks[12], (1, HIDDEN // 4)),
        # fused, lane-padded head
        "whead": whead,
        "bhead": bhead,
    }


if __name__ == "__main__":
    B, T = 16, 8
    key = jax.random.PRNGKey(0)
    k_p, k_x, k_r, k_h, k_c = jax.random.split(key, 5)

    params = make_params(k_p)
    x = jax.random.normal(k_x, (B, T, CONV_SIZE), jnp.float32)
    ruler = jax.random.normal(k_r, (B, RULER), jnp.float32)
    # torch.randn initial states -> deterministic normal draws
    h0 = jax.random.normal(k_h, (NUM_LAYERS, B, HIDDEN), jnp.float32)
    c0 = jax.random.normal(k_c, (NUM_LAYERS, B, HIDDEN), jnp.float32)

    out_type, out_anom = lstm_forward(x, ruler, params, h0, c0)
    jax.block_until_ready((out_type, out_anom))

    ref_type, ref_anom = reference_forward(x, ruler, params, h0, c0)
    assert out_type.shape == (B, NUM_CLASSES) and out_anom.shape == (B, 2)
    np.testing.assert_allclose(np.asarray(out_type), np.asarray(ref_type),
                               atol=1e-3, rtol=1e-3)
    np.testing.assert_allclose(np.asarray(out_anom), np.asarray(ref_anom),
                               atol=1e-3, rtol=1e-3)

    print("KERNEL_OK")
</pallas_src>

<mosaic_0001>
module attributes {stable_mosaic.version = 11 : i64} {
  func.func @_lstm_head_kernel(%arg0: memref<128x22xf32, #tpu.memory_space<vmem>>, %arg1: memref<16x27xf32, #tpu.memory_space<vmem>>, %arg2: memref<2x16x64xf32, #tpu.memory_space<vmem>>, %arg3: memref<2x16x64xf32, #tpu.memory_space<vmem>>, %arg4: memref<22x256xf32, #tpu.memory_space<vmem>>, %arg5: memref<64x256xf32, #tpu.memory_space<vmem>>, %arg6: memref<1x256xf32, #tpu.memory_space<vmem>>, %arg7: memref<128x256xf32, #tpu.memory_space<vmem>>, %arg8: memref<1x256xf32, #tpu.memory_space<vmem>>, %arg9: memref<64x64xf32, #tpu.memory_space<vmem>>, %arg10: memref<27x64xf32, #tpu.memory_space<vmem>>, %arg11: memref<1x64xf32, #tpu.memory_space<vmem>>, %arg12: memref<64x32xf32, #tpu.memory_space<vmem>>, %arg13: memref<1x32xf32, #tpu.memory_space<vmem>>, %arg14: memref<32x16xf32, #tpu.memory_space<vmem>>, %arg15: memref<1x16xf32, #tpu.memory_space<vmem>>, %arg16: memref<16x128xf32, #tpu.memory_space<vmem>>, %arg17: memref<1x128xf32, #tpu.memory_space<vmem>>, %arg18: memref<16x128xf32, #tpu.memory_space<vmem>>, %arg19: memref<128x256xf32, #tpu.memory_space<vmem>>) attributes {dimension_semantics = [], scalar_prefetch = 0 : i64, scratch_operands = 1 : i64, tpu.core_type = #tpu.core_type<tc>} {
    %c0 = arith.constant 0 : index
    %c0_0 = arith.constant 0 : index
    %0 = vector.load %arg0[%c0, %c0_0] : memref<128x22xf32, #tpu.memory_space<vmem>>, vector<128x22xf32>
    %c0_1 = arith.constant 0 : index
    %c0_2 = arith.constant 0 : index
    %1 = vector.load %arg4[%c0_1, %c0_2] : memref<22x256xf32, #tpu.memory_space<vmem>>, vector<22x256xf32>
    %cst = arith.constant dense<0.000000e+00> : vector<128x256xf32>
    %2 = tpu.matmul %0, %1, %cst {dimension_numbers = #tpu.dot_dimension_numbers<[1], [0], [0], [1], [0, 0, 1, 1], [], []>} : vector<128x22xf32>, vector<22x256xf32>, vector<128x256xf32> -> vector<128x256xf32>
    %c0_3 = arith.constant 0 : index
    %c0_4 = arith.constant 0 : index
    %3 = vector.load %arg6[%c0_3, %c0_4] : memref<1x256xf32, #tpu.memory_space<vmem>>, vector<1x256xf32>
    %4 = vector.broadcast %3 : vector<1x256xf32> to vector<128x256xf32>
    %5 = arith.addf %2, %4 : vector<128x256xf32>
    %c0_5 = arith.constant 0 : index
    %c0_6 = arith.constant 0 : index
    %6 = vector.load %arg19[%c0_5, %c0_6] : memref<128x256xf32, #tpu.memory_space<vmem>>, vector<128x256xf32>
    tpu.vector_store %arg19[%c0_5, %c0_6], %5 {strides = array<i32>} : memref<128x256xf32, #tpu.memory_space<vmem>>, vector<128x256xf32>,
    %c0_7 = arith.constant 0 : index
    %c0_8 = arith.constant 0 : index
    %c0_9 = arith.constant 0 : index
    %7 = vector.load %arg2[%c0_7, %c0_8, %c0_9] : memref<2x16x64xf32, #tpu.memory_space<vmem>>, vector<1x16x64xf32>
    %8 = vector.shape_cast %7 : vector<1x16x64xf32> to vector<16x64xf32>
    %c0_10 = arith.constant 0 : index
    %c0_11 = arith.constant 0 : index
    %c0_12 = arith.constant 0 : index
    %9 = vector.load %arg3[%c0_10, %c0_11, %c0_12] : memref<2x16x64xf32, #tpu.memory_space<vmem>>, vector<1x16x64xf32>
    %10 = vector.shape_cast %9 : vector<1x16x64xf32> to vector<16x64xf32>
    %c1 = arith.constant 1 : index
    %c0_13 = arith.constant 0 : index
    %c0_14 = arith.constant 0 : index
    %11 = vector.load %arg2[%c1, %c0_13, %c0_14] : memref<2x16x64xf32, #tpu.memory_space<vmem>>, vector<1x16x64xf32>
    %12 = vector.shape_cast %11 : vector<1x16x64xf32> to vector<16x64xf32>
    %c1_15 = arith.constant 1 : index
    %c0_16 = arith.constant 0 : index
    %c0_17 = arith.constant 0 : index
    %13 = vector.load %arg3[%c1_15, %c0_16, %c0_17] : memref<2x16x64xf32, #tpu.memory_space<vmem>>, vector<1x16x64xf32>
    %14 = vector.shape_cast %13 : vector<1x16x64xf32> to vector<16x64xf32>
    %c0_18 = arith.constant 0 : index
    %c0_19 = arith.constant 0 : index
    %15 = vector.load %arg19[%c0_18, %c0_19] : memref<128x256xf32, #tpu.memory_space<vmem>>, vector<16x256xf32>
    %c0_20 = arith.constant 0 : index
    %c0_21 = arith.constant 0 : index
    %16 = vector.load %arg5[%c0_20, %c0_21] : memref<64x256xf32, #tpu.memory_space<vmem>>, vector<64x256xf32>
    %cst_22 = arith.constant dense<0.000000e+00> : vector<16x256xf32>
    %17 = tpu.matmul %8, %16, %cst_22 {dimension_numbers = #tpu.dot_dimension_numbers<[1], [0], [0], [1], [0, 0, 1, 1], [], []>} : vector<16x64xf32>, vector<64x256xf32>, vector<16x256xf32> -> vector<16x256xf32>
    %18 = arith.addf %15, %17 : vector<16x256xf32>
    %19 = vector.extract_strided_slice %18 {offsets = [0, 0], sizes = [16, 128], strides = [1, 1]} : vector<16x256xf32> to vector<16x128xf32>
    %20 = arith.negf %19 : vector<16x128xf32>
    %21 = math.exp %20 : vector<16x128xf32>
    %cst_23 = arith.constant 1.000000e+00 : f32
    %22 = vector.broadcast %cst_23 : f32 to vector<16x128xf32>
    %23 = arith.addf %22, %21 : vector<16x128xf32>
    %24 = arith.divf %22, %23 : vector<16x128xf32>
    %25 = vector.extract_strided_slice %24 {offsets = [0, 0], sizes = [16, 64], strides = [1, 1]} : vector<16x128xf32> to vector<16x64xf32>
    %26 = vector.extract_strided_slice %24 {offsets = [0, 64], sizes = [16, 64], strides = [1, 1]} : vector<16x128xf32> to vector<16x64xf32>
    %27 = vector.extract_strided_slice %18 {offsets = [0, 128], sizes = [16, 64], strides = [1, 1]} : vector<16x256xf32> to vector<16x64xf32>
    %28 = math.tanh %27 : vector<16x64xf32>
    %29 = vector.extract_strided_slice %18 {offsets = [0, 192], sizes = [16, 64], strides = [1, 1]} : vector<16x256xf32> to vector<16x64xf32>
    %30 = arith.negf %29 : vector<16x64xf32>
    %31 = math.exp %30 : vector<16x64xf32>
    %cst_24 = arith.constant 1.000000e+00 : f32
    %32 = vector.broadcast %cst_24 : f32 to vector<16x64xf32>
    %33 = arith.addf %32, %31 : vector<16x64xf32>
    %34 = arith.divf %32, %33 : vector<16x64xf32>
    %35 = arith.mulf %26, %10 : vector<16x64xf32>
    %36 = arith.mulf %25, %28 : vector<16x64xf32>
    %37 = arith.addf %35, %36 : vector<16x64xf32>
    %38 = math.tanh %37 : vector<16x64xf32>
    %39 = arith.mulf %34, %38 : vector<16x64xf32>
    %40 = tpu.concatenate %39, %12 in 1 : vector<16x64xf32>, vector<16x64xf32> -> vector<16x128xf32>
    %c0_25 = arith.constant 0 : index
    %c0_26 = arith.constant 0 : index
    %41 = vector.load %arg7[%c0_25, %c0_26] : memref<128x256xf32, #tpu.memory_space<vmem>>, vector<128x256xf32>
    %cst_27 = arith.constant dense<0.000000e+00> : vector<16x256xf32>
    %42 = tpu.matmul %40, %41, %cst_27 {dimension_numbers = #tpu.dot_dimension_numbers<[1], [0], [0], [1], [0, 0, 1, 1], [], []>} : vector<16x128xf32>, vector<128x256xf32>, vector<16x256xf32> -> vector<16x256xf32>
    %c0_28 = arith.constant 0 : index
    %c0_29 = arith.constant 0 : index
    %43 = vector.load %arg8[%c0_28, %c0_29] : memref<1x256xf32, #tpu.memory_space<vmem>>, vector<1x256xf32>
    %44 = vector.broadcast %43 : vector<1x256xf32> to vector<16x256xf32>
    %45 = arith.addf %42, %44 : vector<16x256xf32>
    %46 = vector.extract_strided_slice %45 {offsets = [0, 0], sizes = [16, 128], strides = [1, 1]} : vector<16x256xf32> to vector<16x128xf32>
    %47 = arith.negf %46 : vector<16x128xf32>
    %48 = math.exp %47 : vector<16x128xf32>
    %cst_30 = arith.constant 1.000000e+00 : f32
    %49 = vector.broadcast %cst_30 : f32 to vector<16x128xf32>
    %50 = arith.addf %49, %48 : vector<16x128xf32>
    %51 = arith.divf %49, %50 : vector<16x128xf32>
    %52 = vector.extract_strided_slice %51 {offsets = [0, 0], sizes = [16, 64], strides = [1, 1]} : vector<16x128xf32> to vector<16x64xf32>
    %53 = vector.extract_strided_slice %51 {offsets = [0, 64], sizes = [16, 64], strides = [1, 1]} : vector<16x128xf32> to vector<16x64xf32>
    %54 = vector.extract_strided_slice %45 {offsets = [0, 128], sizes = [16, 64], strides = [1, 1]} : vector<16x256xf32> to vector<16x64xf32>
    %55 = math.tanh %54 : vector<16x64xf32>
    %56 = vector.extract_strided_slice %45 {offsets = [0, 192], sizes = [16, 64], strides = [1, 1]} : vector<16x256xf32> to vector<16x64xf32>
    %57 = arith.negf %56 : vector<16x64xf32>
    %58 = math.exp %57 : vector<16x64xf32>
    %cst_31 = arith.constant 1.000000e+00 : f32
    %59 = vector.broadcast %cst_31 : f32 to vector<16x64xf32>
    %60 = arith.addf %59, %58 : vector<16x64xf32>
    %61 = arith.divf %59, %60 : vector<16x64xf32>
    %62 = arith.mulf %53, %14 : vector<16x64xf32>
    %63 = arith.mulf %52, %55 : vector<16x64xf32>
    %64 = arith.addf %62, %63 : vector<16x64xf32>
    %65 = math.tanh %64 : vector<16x64xf32>
    %66 = arith.mulf %61, %65 : vector<16x64xf32>
    %c16 = arith.constant 16 : index
    %c0_32 = arith.constant 0 : index
    %67 = vector.load %arg19[%c16, %c0_32] : memref<128x256xf32, #tpu.memory_space<vmem>>, vector<16x256xf32>
    %c0_33 = arith.constant 0 : index
    %c0_34 = arith.constant 0 : index
    %68 = vector.load %arg5[%c0_33, %c0_34] : memref<64x256xf32, #tpu.memory_space<vmem>>, vector<64x256xf32>
    %cst_35 = arith.constant dense<0.000000e+00> : vector<16x256xf32>
    %69 = tpu.matmul %39, %68, %cst_35 {dimension_numbers = #tpu.dot_dimension_numbers<[1], [0], [0], [1], [0, 0, 1, 1], [], []>} : vector<16x64xf32>, vector<64x256xf32>, vector<16x256xf32> -> vector<16x256xf32>
    %70 = arith.addf %67, %69 : vector<16x256xf32>
    %71 = vector.extract_strided_slice %70 {offsets = [0, 0], sizes = [16, 128], strides = [1, 1]} : vector<16x256xf32> to vector<16x128xf32>
    %72 = arith.negf %71 : vector<16x128xf32>
    %73 = math.exp %72 : vector<16x128xf32>
    %cst_36 = arith.constant 1.000000e+00 : f32
    %74 = vector.broadcast %cst_36 : f32 to vector<16x128xf32>
    %75 = arith.addf %74, %73 : vector<16x128xf32>
    %76 = arith.divf %74, %75 : vector<16x128xf32>
    %77 = vector.extract_strided_slice %76 {offsets = [0, 0], sizes = [16, 64], strides = [1, 1]} : vector<16x128xf32> to vector<16x64xf32>
    %78 = vector.extract_strided_slice %76 {offsets = [0, 64], sizes = [16, 64], strides = [1, 1]} : vector<16x128xf32> to vector<16x64xf32>
    %79 = vector.extract_strided_slice %70 {offsets = [0, 128], sizes = [16, 64], strides = [1, 1]} : vector<16x256xf32> to vector<16x64xf32>
    %80 = math.tanh %79 : vector<16x64xf32>
    %81 = vector.extract_strided_slice %70 {offsets = [0, 192], sizes = [16, 64], strides = [1, 1]} : vector<16x256xf32> to vector<16x64xf32>
    %82 = arith.negf %81 : vector<16x64xf32>
    %83 = math.exp %82 : vector<16x64xf32>
    %cst_37 = arith.constant 1.000000e+00 : f32
    %84 = vector.broadcast %cst_37 : f32 to vector<16x64xf32>
    %85 = arith.addf %84, %83 : vector<16x64xf32>
    %86 = arith.divf %84, %85 : vector<16x64xf32>
    %87 = arith.mulf %78, %37 : vector<16x64xf32>
    %88 = arith.mulf %77, %80 : vector<16x64xf32>
    %89 = arith.addf %87, %88 : vector<16x64xf32>
    %90 = math.tanh %89 : vector<16x64xf32>
    %91 = arith.mulf %86, %90 : vector<16x64xf32>
    %92 = tpu.concatenate %91, %66 in 1 : vector<16x64xf32>, vector<16x64xf32> -> vector<16x128xf32>
    %c0_38 = arith.constant 0 : index
    %c0_39 = arith.constant 0 : index
    %93 = vector.load %arg7[%c0_38, %c0_39] : memref<128x256xf32, #tpu.memory_space<vmem>>, vector<128x256xf32>
    %cst_40 = arith.constant dense<0.000000e+00> : vector<16x256xf32>
    %94 = tpu.matmul %92, %93, %cst_40 {dimension_numbers = #tpu.dot_dimension_numbers<[1], [0], [0], [1], [0, 0, 1, 1], [], []>} : vector<16x128xf32>, vector<128x256xf32>, vector<16x256xf32> -> vector<16x256xf32>
    %c0_41 = arith.constant 0 : index
    %c0_42 = arith.constant 0 : index
    %95 = vector.load %arg8[%c0_41, %c0_42] : memref<1x256xf32, #tpu.memory_space<vmem>>, vector<1x256xf32>
    %96 = vector.broadcast %95 : vector<1x256xf32> to vector<16x256xf32>
    %97 = arith.addf %94, %96 : vector<16x256xf32>
    %98 = vector.extract_strided_slice %97 {offsets = [0, 0], sizes = [16, 128], strides = [1, 1]} : vector<16x256xf32> to vector<16x128xf32>
    %99 = arith.negf %98 : vector<16x128xf32>
    %100 = math.exp %99 : vector<16x128xf32>
    %cst_43 = arith.constant 1.000000e+00 : f32
    %101 = vector.broadcast %cst_43 : f32 to vector<16x128xf32>
    %102 = arith.addf %101, %100 : vector<16x128xf32>
    %103 = arith.divf %101, %102 : vector<16x128xf32>
    %104 = vector.extract_strided_slice %103 {offsets = [0, 0], sizes = [16, 64], strides = [1, 1]} : vector<16x128xf32> to vector<16x64xf32>
    %105 = vector.extract_strided_slice %103 {offsets = [0, 64], sizes = [16, 64], strides = [1, 1]} : vector<16x128xf32> to vector<16x64xf32>
    %106 = vector.extract_strided_slice %97 {offsets = [0, 128], sizes = [16, 64], strides = [1, 1]} : vector<16x256xf32> to vector<16x64xf32>
    %107 = math.tanh %106 : vector<16x64xf32>
    %108 = vector.extract_strided_slice %97 {offsets = [0, 192], sizes = [16, 64], strides = [1, 1]} : vector<16x256xf32> to vector<16x64xf32>
    %109 = arith.negf %108 : vector<16x64xf32>
    %110 = math.exp %109 : vector<16x64xf32>
    %cst_44 = arith.constant 1.000000e+00 : f32
    %111 = vector.broadcast %cst_44 : f32 to vector<16x64xf32>
    %112 = arith.addf %111, %110 : vector<16x64xf32>
    %113 = arith.divf %111, %112 : vector<16x64xf32>
    %114 = arith.mulf %105, %64 : vector<16x64xf32>
    %115 = arith.mulf %104, %107 : vector<16x64xf32>
    %116 = arith.addf %114, %115 : vector<16x64xf32>
    %117 = math.tanh %116 : vector<16x64xf32>
    %118 = arith.mulf %113, %117 : vector<16x64xf32>
    %c32 = arith.constant 32 : index
    %c0_45 = arith.constant 0 : index
    %119 = vector.load %arg19[%c32, %c0_45] : memref<128x256xf32, #tpu.memory_space<vmem>>, vector<16x256xf32>
    %c0_46 = arith.constant 0 : index
    %c0_47 = arith.constant 0 : index
    %120 = vector.load %arg5[%c0_46, %c0_47] : memref<64x256xf32, #tpu.memory_space<vmem>>, vector<64x256xf32>
    %cst_48 = arith.constant dense<0.000000e+00> : vector<16x256xf32>
    %121 = tpu.matmul %91, %120, %cst_48 {dimension_numbers = #tpu.dot_dimension_numbers<[1], [0], [0], [1], [0, 0, 1, 1], [], []>} : vector<16x64xf32>, vector<64x256xf32>, vector<16x256xf32> -> vector<16x256xf32>
    %122 = arith.addf %119, %121 : vector<16x256xf32>
    %123 = vector.extract_strided_slice %122 {offsets = [0, 0], sizes = [16, 128], strides = [1, 1]} : vector<16x256xf32> to vector<16x128xf32>
    %124 = arith.negf %123 : vector<16x128xf32>
    %125 = math.exp %124 : vector<16x128xf32>
    %cst_49 = arith.constant 1.000000e+00 : f32
    %126 = vector.broadcast %cst_49 : f32 to vector<16x128xf32>
    %127 = arith.addf %126, %125 : vector<16x128xf32>
    %128 = arith.divf %126, %127 : vector<16x128xf32>
    %129 = vector.extract_strided_slice %128 {offsets = [0, 0], sizes = [16, 64], strides = [1, 1]} : vector<16x128xf32> to vector<16x64xf32>
    %130 = vector.extract_strided_slice %128 {offsets = [0, 64], sizes = [16, 64], strides = [1, 1]} : vector<16x128xf32> to vector<16x64xf32>
    %131 = vector.extract_strided_slice %122 {offsets = [0, 128], sizes = [16, 64], strides = [1, 1]} : vector<16x256xf32> to vector<16x64xf32>
    %132 = math.tanh %131 : vector<16x64xf32>
    %133 = vector.extract_strided_slice %122 {offsets = [0, 192], sizes = [16, 64], strides = [1, 1]} : vector<16x256xf32> to vector<16x64xf32>
    %134 = arith.negf %133 : vector<16x64xf32>
    %135 = math.exp %134 : vector<16x64xf32>
    %cst_50 = arith.constant 1.000000e+00 : f32
    %136 = vector.broadcast %cst_50 : f32 to vector<16x64xf32>
    %137 = arith.addf %136, %135 : vector<16x64xf32>
    %138 = arith.divf %136, %137 : vector<16x64xf32>
    %139 = arith.mulf %130, %89 : vector<16x64xf32>
    %140 = arith.mulf %129, %132 : vector<16x64xf32>
    %141 = arith.addf %139, %140 : vector<16x64xf32>
    %142 = math.tanh %141 : vector<16x64xf32>
    %143 = arith.mulf %138, %142 : vector<16x64xf32>
    %144 = tpu.concatenate %143, %118 in 1 : vector<16x64xf32>, vector<16x64xf32> -> vector<16x128xf32>
    %c0_51 = arith.constant 0 : index
    %c0_52 = arith.constant 0 : index
    %145 = vector.load %arg7[%c0_51, %c0_52] : memref<128x256xf32, #tpu.memory_space<vmem>>, vector<128x256xf32>
    %cst_53 = arith.constant dense<0.000000e+00> : vector<16x256xf32>
    %146 = tpu.matmul %144, %145, %cst_53 {dimension_numbers = #tpu.dot_dimension_numbers<[1], [0], [0], [1], [0, 0, 1, 1], [], []>} : vector<16x128xf32>, vector<128x256xf32>, vector<16x256xf32> -> vector<16x256xf32>
    %c0_54 = arith.constant 0 : index
    %c0_55 = arith.constant 0 : index
    %147 = vector.load %arg8[%c0_54, %c0_55] : memref<1x256xf32, #tpu.memory_space<vmem>>, vector<1x256xf32>
    %148 = vector.broadcast %147 : vector<1x256xf32> to vector<16x256xf32>
    %149 = arith.addf %146, %148 : vector<16x256xf32>
    %150 = vector.extract_strided_slice %149 {offsets = [0, 0], sizes = [16, 128], strides = [1, 1]} : vector<16x256xf32> to vector<16x128xf32>
    %151 = arith.negf %150 : vector<16x128xf32>
    %152 = math.exp %151 : vector<16x128xf32>
    %cst_56 = arith.constant 1.000000e+00 : f32
    %153 = vector.broadcast %cst_56 : f32 to vector<16x128xf32>
    %154 = arith.addf %153, %152 : vector<16x128xf32>
    %155 = arith.divf %153, %154 : vector<16x128xf32>
    %156 = vector.extract_strided_slice %155 {offsets = [0, 0], sizes = [16, 64], strides = [1, 1]} : vector<16x128xf32> to vector<16x64xf32>
    %157 = vector.extract_strided_slice %155 {offsets = [0, 64], sizes = [16, 64], strides = [1, 1]} : vector<16x128xf32> to vector<16x64xf32>
    %158 = vector.extract_strided_slice %149 {offsets = [0, 128], sizes = [16, 64], strides = [1, 1]} : vector<16x256xf32> to vector<16x64xf32>
    %159 = math.tanh %158 : vector<16x64xf32>
    %160 = vector.extract_strided_slice %149 {offsets = [0, 192], sizes = [16, 64], strides = [1, 1]} : vector<16x256xf32> to vector<16x64xf32>
    %161 = arith.negf %160 : vector<16x64xf32>
    %162 = math.exp %161 : vector<16x64xf32>
    %cst_57 = arith.constant 1.000000e+00 : f32
    %163 = vector.broadcast %cst_57 : f32 to vector<16x64xf32>
    %164 = arith.addf %163, %162 : vector<16x64xf32>
    %165 = arith.divf %163, %164 : vector<16x64xf32>
    %166 = arith.mulf %157, %116 : vector<16x64xf32>
    %167 = arith.mulf %156, %159 : vector<16x64xf32>
    %168 = arith.addf %166, %167 : vector<16x64xf32>
    %169 = math.tanh %168 : vector<16x64xf32>
    %170 = arith.mulf %165, %169 : vector<16x64xf32>
    %c48 = arith.constant 48 : index
    %c0_58 = arith.constant 0 : index
    %171 = vector.load %arg19[%c48, %c0_58] : memref<128x256xf32, #tpu.memory_space<vmem>>, vector<16x256xf32>
    %c0_59 = arith.constant 0 : index
    %c0_60 = arith.constant 0 : index
    %172 = vector.load %arg5[%c0_59, %c0_60] : memref<64x256xf32, #tpu.memory_space<vmem>>, vector<64x256xf32>
    %cst_61 = arith.constant dense<0.000000e+00> : vector<16x256xf32>
    %173 = tpu.matmul %143, %172, %cst_61 {dimension_numbers = #tpu.dot_dimension_numbers<[1], [0], [0], [1], [0, 0, 1, 1], [], []>} : vector<16x64xf32>, vector<64x256xf32>, vector<16x256xf32> -> vector<16x256xf32>
    %174 = arith.addf %171, %173 : vector<16x256xf32>
    %175 = vector.extract_strided_slice %174 {offsets = [0, 0], sizes = [16, 128], strides = [1, 1]} : vector<16x256xf32> to vector<16x128xf32>
    %176 = arith.negf %175 : vector<16x128xf32>
    %177 = math.exp %176 : vector<16x128xf32>
    %cst_62 = arith.constant 1.000000e+00 : f32
    %178 = vector.broadcast %cst_62 : f32 to vector<16x128xf32>
    %179 = arith.addf %178, %177 : vector<16x128xf32>
    %180 = arith.divf %178, %179 : vector<16x128xf32>
    %181 = vector.extract_strided_slice %180 {offsets = [0, 0], sizes = [16, 64], strides = [1, 1]} : vector<16x128xf32> to vector<16x64xf32>
    %182 = vector.extract_strided_slice %180 {offsets = [0, 64], sizes = [16, 64], strides = [1, 1]} : vector<16x128xf32> to vector<16x64xf32>
    %183 = vector.extract_strided_slice %174 {offsets = [0, 128], sizes = [16, 64], strides = [1, 1]} : vector<16x256xf32> to vector<16x64xf32>
    %184 = math.tanh %183 : vector<16x64xf32>
    %185 = vector.extract_strided_slice %174 {offsets = [0, 192], sizes = [16, 64], strides = [1, 1]} : vector<16x256xf32> to vector<16x64xf32>
    %186 = arith.negf %185 : vector<16x64xf32>
    %187 = math.exp %186 : vector<16x64xf32>
    %cst_63 = arith.constant 1.000000e+00 : f32
    %188 = vector.broadcast %cst_63 : f32 to vector<16x64xf32>
    %189 = arith.addf %188, %187 : vector<16x64xf32>
    %190 = arith.divf %188, %189 : vector<16x64xf32>
    %191 = arith.mulf %182, %141 : vector<16x64xf32>
    %192 = arith.mulf %181, %184 : vector<16x64xf32>
    %193 = arith.addf %191, %192 : vector<16x64xf32>
    %194 = math.tanh %193 : vector<16x64xf32>
    %195 = arith.mulf %190, %194 : vector<16x64xf32>
    %196 = tpu.concatenate %195, %170 in 1 : vector<16x64xf32>, vector<16x64xf32> -> vector<16x128xf32>
    %c0_64 = arith.constant 0 : index
    %c0_65 = arith.constant 0 : index
    %197 = vector.load %arg7[%c0_64, %c0_65] : memref<128x256xf32, #tpu.memory_space<vmem>>, vector<128x256xf32>
    %cst_66 = arith.constant dense<0.000000e+00> : vector<16x256xf32>
    %198 = tpu.matmul %196, %197, %cst_66 {dimension_numbers = #tpu.dot_dimension_numbers<[1], [0], [0], [1], [0, 0, 1, 1], [], []>} : vector<16x128xf32>, vector<128x256xf32>, vector<16x256xf32> -> vector<16x256xf32>
    %c0_67 = arith.constant 0 : index
    %c0_68 = arith.constant 0 : index
    %199 = vector.load %arg8[%c0_67, %c0_68] : memref<1x256xf32, #tpu.memory_space<vmem>>, vector<1x256xf32>
    %200 = vector.broadcast %199 : vector<1x256xf32> to vector<16x256xf32>
    %201 = arith.addf %198, %200 : vector<16x256xf32>
    %202 = vector.extract_strided_slice %201 {offsets = [0, 0], sizes = [16, 128], strides = [1, 1]} : vector<16x256xf32> to vector<16x128xf32>
    %203 = arith.negf %202 : vector<16x128xf32>
    %204 = math.exp %203 : vector<16x128xf32>
    %cst_69 = arith.constant 1.000000e+00 : f32
    %205 = vector.broadcast %cst_69 : f32 to vector<16x128xf32>
    %206 = arith.addf %205, %204 : vector<16x128xf32>
    %207 = arith.divf %205, %206 : vector<16x128xf32>
    %208 = vector.extract_strided_slice %207 {offsets = [0, 0], sizes = [16, 64], strides = [1, 1]} : vector<16x128xf32> to vector<16x64xf32>
    %209 = vector.extract_strided_slice %207 {offsets = [0, 64], sizes = [16, 64], strides = [1, 1]} : vector<16x128xf32> to vector<16x64xf32>
    %210 = vector.extract_strided_slice %201 {offsets = [0, 128], sizes = [16, 64], strides = [1, 1]} : vector<16x256xf32> to vector<16x64xf32>
    %211 = math.tanh %210 : vector<16x64xf32>
    %212 = vector.extract_strided_slice %201 {offsets = [0, 192], sizes = [16, 64], strides = [1, 1]} : vector<16x256xf32> to vector<16x64xf32>
    %213 = arith.negf %212 : vector<16x64xf32>
    %214 = math.exp %213 : vector<16x64xf32>
    %cst_70 = arith.constant 1.000000e+00 : f32
    %215 = vector.broadcast %cst_70 : f32 to vector<16x64xf32>
    %216 = arith.addf %215, %214 : vector<16x64xf32>
    %217 = arith.divf %215, %216 : vector<16x64xf32>
    %218 = arith.mulf %209, %168 : vector<16x64xf32>
    %219 = arith.mulf %208, %211 : vector<16x64xf32>
    %220 = arith.addf %218, %219 : vector<16x64xf32>
    %221 = math.tanh %220 : vector<16x64xf32>
    %222 = arith.mulf %217, %221 : vector<16x64xf32>
    %c64 = arith.constant 64 : index
    %c0_71 = arith.constant 0 : index
    %223 = vector.load %arg19[%c64, %c0_71] : memref<128x256xf32, #tpu.memory_space<vmem>>, vector<16x256xf32>
    %c0_72 = arith.constant 0 : index
    %c0_73 = arith.constant 0 : index
    %224 = vector.load %arg5[%c0_72, %c0_73] : memref<64x256xf32, #tpu.memory_space<vmem>>, vector<64x256xf32>
    %cst_74 = arith.constant dense<0.000000e+00> : vector<16x256xf32>
    %225 = tpu.matmul %195, %224, %cst_74 {dimension_numbers = #tpu.dot_dimension_numbers<[1], [0], [0], [1], [0, 0, 1, 1], [], []>} : vector<16x64xf32>, vector<64x256xf32>, vector<16x256xf32> -> vector<16x256xf32>
    %226 = arith.addf %223, %225 : vector<16x256xf32>
    %227 = vector.extract_strided_slice %226 {offsets = [0, 0], sizes = [16, 128], strides = [1, 1]} : vector<16x256xf32> to vector<16x128xf32>
    %228 = arith.negf %227 : vector<16x128xf32>
    %229 = math.exp %228 : vector<16x128xf32>
    %cst_75 = arith.constant 1.000000e+00 : f32
    %230 = vector.broadcast %cst_75 : f32 to vector<16x128xf32>
    %231 = arith.addf %230, %229 : vector<16x128xf32>
    %232 = arith.divf %230, %231 : vector<16x128xf32>
    %233 = vector.extract_strided_slice %232 {offsets = [0, 0], sizes = [16, 64], strides = [1, 1]} : vector<16x128xf32> to vector<16x64xf32>
    %234 = vector.extract_strided_slice %232 {offsets = [0, 64], sizes = [16, 64], strides = [1, 1]} : vector<16x128xf32> to vector<16x64xf32>
    %235 = vector.extract_strided_slice %226 {offsets = [0, 128], sizes = [16, 64], strides = [1, 1]} : vector<16x256xf32> to vector<16x64xf32>
    %236 = math.tanh %235 : vector<16x64xf32>
    %237 = vector.extract_strided_slice %226 {offsets = [0, 192], sizes = [16, 64], strides = [1, 1]} : vector<16x256xf32> to vector<16x64xf32>
    %238 = arith.negf %237 : vector<16x64xf32>
    %239 = math.exp %238 : vector<16x64xf32>
    %cst_76 = arith.constant 1.000000e+00 : f32
    %240 = vector.broadcast %cst_76 : f32 to vector<16x64xf32>
    %241 = arith.addf %240, %239 : vector<16x64xf32>
    %242 = arith.divf %240, %241 : vector<16x64xf32>
    %243 = arith.mulf %234, %193 : vector<16x64xf32>
    %244 = arith.mulf %233, %236 : vector<16x64xf32>
    %245 = arith.addf %243, %244 : vector<16x64xf32>
    %246 = math.tanh %245 : vector<16x64xf32>
    %247 = arith.mulf %242, %246 : vector<16x64xf32>
    %248 = tpu.concatenate %247, %222 in 1 : vector<16x64xf32>, vector<16x64xf32> -> vector<16x128xf32>
    %c0_77 = arith.constant 0 : index
    %c0_78 = arith.constant 0 : index
    %249 = vector.load %arg7[%c0_77, %c0_78] : memref<128x256xf32, #tpu.memory_space<vmem>>, vector<128x256xf32>
    %cst_79 = arith.constant dense<0.000000e+00> : vector<16x256xf32>
    %250 = tpu.matmul %248, %249, %cst_79 {dimension_numbers = #tpu.dot_dimension_numbers<[1], [0], [0], [1], [0, 0, 1, 1], [], []>} : vector<16x128xf32>, vector<128x256xf32>, vector<16x256xf32> -> vector<16x256xf32>
    %c0_80 = arith.constant 0 : index
    %c0_81 = arith.constant 0 : index
    %251 = vector.load %arg8[%c0_80, %c0_81] : memref<1x256xf32, #tpu.memory_space<vmem>>, vector<1x256xf32>
    %252 = vector.broadcast %251 : vector<1x256xf32> to vector<16x256xf32>
    %253 = arith.addf %250, %252 : vector<16x256xf32>
    %254 = vector.extract_strided_slice %253 {offsets = [0, 0], sizes = [16, 128], strides = [1, 1]} : vector<16x256xf32> to vector<16x128xf32>
    %255 = arith.negf %254 : vector<16x128xf32>
    %256 = math.exp %255 : vector<16x128xf32>
    %cst_82 = arith.constant 1.000000e+00 : f32
    %257 = vector.broadcast %cst_82 : f32 to vector<16x128xf32>
    %258 = arith.addf %257, %256 : vector<16x128xf32>
    %259 = arith.divf %257, %258 : vector<16x128xf32>
    %260 = vector.extract_strided_slice %259 {offsets = [0, 0], sizes = [16, 64], strides = [1, 1]} : vector<16x128xf32> to vector<16x64xf32>
    %261 = vector.extract_strided_slice %259 {offsets = [0, 64], sizes = [16, 64], strides = [1, 1]} : vector<16x128xf32> to vector<16x64xf32>
    %262 = vector.extract_strided_slice %253 {offsets = [0, 128], sizes = [16, 64], strides = [1, 1]} : vector<16x256xf32> to vector<16x64xf32>
    %263 = math.tanh %262 : vector<16x64xf32>
    %264 = vector.extract_strided_slice %253 {offsets = [0, 192], sizes = [16, 64], strides = [1, 1]} : vector<16x256xf32> to vector<16x64xf32>
    %265 = arith.negf %264 : vector<16x64xf32>
    %266 = math.exp %265 : vector<16x64xf32>
    %cst_83 = arith.constant 1.000000e+00 : f32
    %267 = vector.broadcast %cst_83 : f32 to vector<16x64xf32>
    %268 = arith.addf %267, %266 : vector<16x64xf32>
    %269 = arith.divf %267, %268 : vector<16x64xf32>
    %270 = arith.mulf %261, %220 : vector<16x64xf32>
    %271 = arith.mulf %260, %263 : vector<16x64xf32>
    %272 = arith.addf %270, %271 : vector<16x64xf32>
    %273 = math.tanh %272 : vector<16x64xf32>
    %274 = arith.mulf %269, %273 : vector<16x64xf32>
    %c80 = arith.constant 80 : index
    %c0_84 = arith.constant 0 : index
    %275 = vector.load %arg19[%c80, %c0_84] : memref<128x256xf32, #tpu.memory_space<vmem>>, vector<16x256xf32>
    %c0_85 = arith.constant 0 : index
    %c0_86 = arith.constant 0 : index
    %276 = vector.load %arg5[%c0_85, %c0_86] : memref<64x256xf32, #tpu.memory_space<vmem>>, vector<64x256xf32>
    %cst_87 = arith.constant dense<0.000000e+00> : vector<16x256xf32>
    %277 = tpu.matmul %247, %276, %cst_87 {dimension_numbers = #tpu.dot_dimension_numbers<[1], [0], [0], [1], [0, 0, 1, 1], [], []>} : vector<16x64xf32>, vector<64x256xf32>, vector<16x256xf32> -> vector<16x256xf32>
    %278 = arith.addf %275, %277 : vector<16x256xf32>
    %279 = vector.extract_strided_slice %278 {offsets = [0, 0], sizes = [16, 128], strides = [1, 1]} : vector<16x256xf32> to vector<16x128xf32>
    %280 = arith.negf %279 : vector<16x128xf32>
    %281 = math.exp %280 : vector<16x128xf32>
    %cst_88 = arith.constant 1.000000e+00 : f32
    %282 = vector.broadcast %cst_88 : f32 to vector<16x128xf32>
    %283 = arith.addf %282, %281 : vector<16x128xf32>
    %284 = arith.divf %282, %283 : vector<16x128xf32>
    %285 = vector.extract_strided_slice %284 {offsets = [0, 0], sizes = [16, 64], strides = [1, 1]} : vector<16x128xf32> to vector<16x64xf32>
    %286 = vector.extract_strided_slice %284 {offsets = [0, 64], sizes = [16, 64], strides = [1, 1]} : vector<16x128xf32> to vector<16x64xf32>
    %287 = vector.extract_strided_slice %278 {offsets = [0, 128], sizes = [16, 64], strides = [1, 1]} : vector<16x256xf32> to vector<16x64xf32>
    %288 = math.tanh %287 : vector<16x64xf32>
    %289 = vector.extract_strided_slice %278 {offsets = [0, 192], sizes = [16, 64], strides = [1, 1]} : vector<16x256xf32> to vector<16x64xf32>
    %290 = arith.negf %289 : vector<16x64xf32>
    %291 = math.exp %290 : vector<16x64xf32>
    %cst_89 = arith.constant 1.000000e+00 : f32
    %292 = vector.broadcast %cst_89 : f32 to vector<16x64xf32>
    %293 = arith.addf %292, %291 : vector<16x64xf32>
    %294 = arith.divf %292, %293 : vector<16x64xf32>
    %295 = arith.mulf %286, %245 : vector<16x64xf32>
    %296 = arith.mulf %285, %288 : vector<16x64xf32>
    %297 = arith.addf %295, %296 : vector<16x64xf32>
    %298 = math.tanh %297 : vector<16x64xf32>
    %299 = arith.mulf %294, %298 : vector<16x64xf32>
    %300 = tpu.concatenate %299, %274 in 1 : vector<16x64xf32>, vector<16x64xf32> -> vector<16x128xf32>
    %c0_90 = arith.constant 0 : index
    %c0_91 = arith.constant 0 : index
    %301 = vector.load %arg7[%c0_90, %c0_91] : memref<128x256xf32, #tpu.memory_space<vmem>>, vector<128x256xf32>
    %cst_92 = arith.constant dense<0.000000e+00> : vector<16x256xf32>
    %302 = tpu.matmul %300, %301, %cst_92 {dimension_numbers = #tpu.dot_dimension_numbers<[1], [0], [0], [1], [0, 0, 1, 1], [], []>} : vector<16x128xf32>, vector<128x256xf32>, vector<16x256xf32> -> vector<16x256xf32>
    %c0_93 = arith.constant 0 : index
    %c0_94 = arith.constant 0 : index
    %303 = vector.load %arg8[%c0_93, %c0_94] : memref<1x256xf32, #tpu.memory_space<vmem>>, vector<1x256xf32>
    %304 = vector.broadcast %303 : vector<1x256xf32> to vector<16x256xf32>
    %305 = arith.addf %302, %304 : vector<16x256xf32>
    %306 = vector.extract_strided_slice %305 {offsets = [0, 0], sizes = [16, 128], strides = [1, 1]} : vector<16x256xf32> to vector<16x128xf32>
    %307 = arith.negf %306 : vector<16x128xf32>
    %308 = math.exp %307 : vector<16x128xf32>
    %cst_95 = arith.constant 1.000000e+00 : f32
    %309 = vector.broadcast %cst_95 : f32 to vector<16x128xf32>
    %310 = arith.addf %309, %308 : vector<16x128xf32>
    %311 = arith.divf %309, %310 : vector<16x128xf32>
    %312 = vector.extract_strided_slice %311 {offsets = [0, 0], sizes = [16, 64], strides = [1, 1]} : vector<16x128xf32> to vector<16x64xf32>
    %313 = vector.extract_strided_slice %311 {offsets = [0, 64], sizes = [16, 64], strides = [1, 1]} : vector<16x128xf32> to vector<16x64xf32>
    %314 = vector.extract_strided_slice %305 {offsets = [0, 128], sizes = [16, 64], strides = [1, 1]} : vector<16x256xf32> to vector<16x64xf32>
    %315 = math.tanh %314 : vector<16x64xf32>
    %316 = vector.extract_strided_slice %305 {offsets = [0, 192], sizes = [16, 64], strides = [1, 1]} : vector<16x256xf32> to vector<16x64xf32>
    %317 = arith.negf %316 : vector<16x64xf32>
    %318 = math.exp %317 : vector<16x64xf32>
    %cst_96 = arith.constant 1.000000e+00 : f32
    %319 = vector.broadcast %cst_96 : f32 to vector<16x64xf32>
    %320 = arith.addf %319, %318 : vector<16x64xf32>
    %321 = arith.divf %319, %320 : vector<16x64xf32>
    %322 = arith.mulf %313, %272 : vector<16x64xf32>
    %323 = arith.mulf %312, %315 : vector<16x64xf32>
    %324 = arith.addf %322, %323 : vector<16x64xf32>
    %325 = math.tanh %324 : vector<16x64xf32>
    %326 = arith.mulf %321, %325 : vector<16x64xf32>
    %c96 = arith.constant 96 : index
    %c0_97 = arith.constant 0 : index
    %327 = vector.load %arg19[%c96, %c0_97] : memref<128x256xf32, #tpu.memory_space<vmem>>, vector<16x256xf32>
    %c0_98 = arith.constant 0 : index
    %c0_99 = arith.constant 0 : index
    %328 = vector.load %arg5[%c0_98, %c0_99] : memref<64x256xf32, #tpu.memory_space<vmem>>, vector<64x256xf32>
    %cst_100 = arith.constant dense<0.000000e+00> : vector<16x256xf32>
    %329 = tpu.matmul %299, %328, %cst_100 {dimension_numbers = #tpu.dot_dimension_numbers<[1], [0], [0], [1], [0, 0, 1, 1], [], []>} : vector<16x64xf32>, vector<64x256xf32>, vector<16x256xf32> -> vector<16x256xf32>
    %330 = arith.addf %327, %329 : vector<16x256xf32>
    %331 = vector.extract_strided_slice %330 {offsets = [0, 0], sizes = [16, 128], strides = [1, 1]} : vector<16x256xf32> to vector<16x128xf32>
    %332 = arith.negf %331 : vector<16x128xf32>
    %333 = math.exp %332 : vector<16x128xf32>
    %cst_101 = arith.constant 1.000000e+00 : f32
    %334 = vector.broadcast %cst_101 : f32 to vector<16x128xf32>
    %335 = arith.addf %334, %333 : vector<16x128xf32>
    %336 = arith.divf %334, %335 : vector<16x128xf32>
    %337 = vector.extract_strided_slice %336 {offsets = [0, 0], sizes = [16, 64], strides = [1, 1]} : vector<16x128xf32> to vector<16x64xf32>
    %338 = vector.extract_strided_slice %336 {offsets = [0, 64], sizes = [16, 64], strides = [1, 1]} : vector<16x128xf32> to vector<16x64xf32>
    %339 = vector.extract_strided_slice %330 {offsets = [0, 128], sizes = [16, 64], strides = [1, 1]} : vector<16x256xf32> to vector<16x64xf32>
    %340 = math.tanh %339 : vector<16x64xf32>
    %341 = vector.extract_strided_slice %330 {offsets = [0, 192], sizes = [16, 64], strides = [1, 1]} : vector<16x256xf32> to vector<16x64xf32>
    %342 = arith.negf %341 : vector<16x64xf32>
    %343 = math.exp %342 : vector<16x64xf32>
    %cst_102 = arith.constant 1.000000e+00 : f32
    %344 = vector.broadcast %cst_102 : f32 to vector<16x64xf32>
    %345 = arith.addf %344, %343 : vector<16x64xf32>
    %346 = arith.divf %344, %345 : vector<16x64xf32>
    %347 = arith.mulf %338, %297 : vector<16x64xf32>
    %348 = arith.mulf %337, %340 : vector<16x64xf32>
    %349 = arith.addf %347, %348 : vector<16x64xf32>
    %350 = math.tanh %349 : vector<16x64xf32>
    %351 = arith.mulf %346, %350 : vector<16x64xf32>
    %352 = tpu.concatenate %351, %326 in 1 : vector<16x64xf32>, vector<16x64xf32> -> vector<16x128xf32>
    %c0_103 = arith.constant 0 : index
    %c0_104 = arith.constant 0 : index
    %353 = vector.load %arg7[%c0_103, %c0_104] : memref<128x256xf32, #tpu.memory_space<vmem>>, vector<128x256xf32>
    %cst_105 = arith.constant dense<0.000000e+00> : vector<16x256xf32>
    %354 = tpu.matmul %352, %353, %cst_105 {dimension_numbers = #tpu.dot_dimension_numbers<[1], [0], [0], [1], [0, 0, 1, 1], [], []>} : vector<16x128xf32>, vector<128x256xf32>, vector<16x256xf32> -> vector<16x256xf32>
    %c0_106 = arith.constant 0 : index
    %c0_107 = arith.constant 0 : index
    %355 = vector.load %arg8[%c0_106, %c0_107] : memref<1x256xf32, #tpu.memory_space<vmem>>, vector<1x256xf32>
    %356 = vector.broadcast %355 : vector<1x256xf32> to vector<16x256xf32>
    %357 = arith.addf %354, %356 : vector<16x256xf32>
    %358 = vector.extract_strided_slice %357 {offsets = [0, 0], sizes = [16, 128], strides = [1, 1]} : vector<16x256xf32> to vector<16x128xf32>
    %359 = arith.negf %358 : vector<16x128xf32>
    %360 = math.exp %359 : vector<16x128xf32>
    %cst_108 = arith.constant 1.000000e+00 : f32
    %361 = vector.broadcast %cst_108 : f32 to vector<16x128xf32>
    %362 = arith.addf %361, %360 : vector<16x128xf32>
    %363 = arith.divf %361, %362 : vector<16x128xf32>
    %364 = vector.extract_strided_slice %363 {offsets = [0, 0], sizes = [16, 64], strides = [1, 1]} : vector<16x128xf32> to vector<16x64xf32>
    %365 = vector.extract_strided_slice %363 {offsets = [0, 64], sizes = [16, 64], strides = [1, 1]} : vector<16x128xf32> to vector<16x64xf32>
    %366 = vector.extract_strided_slice %357 {offsets = [0, 128], sizes = [16, 64], strides = [1, 1]} : vector<16x256xf32> to vector<16x64xf32>
    %367 = math.tanh %366 : vector<16x64xf32>
    %368 = vector.extract_strided_slice %357 {offsets = [0, 192], sizes = [16, 64], strides = [1, 1]} : vector<16x256xf32> to vector<16x64xf32>
    %369 = arith.negf %368 : vector<16x64xf32>
    %370 = math.exp %369 : vector<16x64xf32>
    %cst_109 = arith.constant 1.000000e+00 : f32
    %371 = vector.broadcast %cst_109 : f32 to vector<16x64xf32>
    %372 = arith.addf %371, %370 : vector<16x64xf32>
    %373 = arith.divf %371, %372 : vector<16x64xf32>
    %374 = arith.mulf %365, %324 : vector<16x64xf32>
    %375 = arith.mulf %364, %367 : vector<16x64xf32>
    %376 = arith.addf %374, %375 : vector<16x64xf32>
    %377 = math.tanh %376 : vector<16x64xf32>
    %378 = arith.mulf %373, %377 : vector<16x64xf32>
    %c112 = arith.constant 112 : index
    %c0_110 = arith.constant 0 : index
    %379 = vector.load %arg19[%c112, %c0_110] : memref<128x256xf32, #tpu.memory_space<vmem>>, vector<16x256xf32>
    %c0_111 = arith.constant 0 : index
    %c0_112 = arith.constant 0 : index
    %380 = vector.load %arg5[%c0_111, %c0_112] : memref<64x256xf32, #tpu.memory_space<vmem>>, vector<64x256xf32>
    %cst_113 = arith.constant dense<0.000000e+00> : vector<16x256xf32>
    %381 = tpu.matmul %351, %380, %cst_113 {dimension_numbers = #tpu.dot_dimension_numbers<[1], [0], [0], [1], [0, 0, 1, 1], [], []>} : vector<16x64xf32>, vector<64x256xf32>, vector<16x256xf32> -> vector<16x256xf32>
    %382 = arith.addf %379, %381 : vector<16x256xf32>
    %383 = vector.extract_strided_slice %382 {offsets = [0, 0], sizes = [16, 128], strides = [1, 1]} : vector<16x256xf32> to vector<16x128xf32>
    %384 = arith.negf %383 : vector<16x128xf32>
    %385 = math.exp %384 : vector<16x128xf32>
    %cst_114 = arith.constant 1.000000e+00 : f32
    %386 = vector.broadcast %cst_114 : f32 to vector<16x128xf32>
    %387 = arith.addf %386, %385 : vector<16x128xf32>
    %388 = arith.divf %386, %387 : vector<16x128xf32>
    %389 = vector.extract_strided_slice %388 {offsets = [0, 0], sizes = [16, 64], strides = [1, 1]} : vector<16x128xf32> to vector<16x64xf32>
    %390 = vector.extract_strided_slice %388 {offsets = [0, 64], sizes = [16, 64], strides = [1, 1]} : vector<16x128xf32> to vector<16x64xf32>
    %391 = vector.extract_strided_slice %382 {offsets = [0, 128], sizes = [16, 64], strides = [1, 1]} : vector<16x256xf32> to vector<16x64xf32>
    %392 = math.tanh %391 : vector<16x64xf32>
    %393 = vector.extract_strided_slice %382 {offsets = [0, 192], sizes = [16, 64], strides = [1, 1]} : vector<16x256xf32> to vector<16x64xf32>
    %394 = arith.negf %393 : vector<16x64xf32>
    %395 = math.exp %394 : vector<16x64xf32>
    %cst_115 = arith.constant 1.000000e+00 : f32
    %396 = vector.broadcast %cst_115 : f32 to vector<16x64xf32>
    %397 = arith.addf %396, %395 : vector<16x64xf32>
    %398 = arith.divf %396, %397 : vector<16x64xf32>
    %399 = arith.mulf %390, %349 : vector<16x64xf32>
    %400 = arith.mulf %389, %392 : vector<16x64xf32>
    %401 = arith.addf %399, %400 : vector<16x64xf32>
    %402 = math.tanh %401 : vector<16x64xf32>
    %403 = arith.mulf %398, %402 : vector<16x64xf32>
    %404 = tpu.concatenate %403, %378 in 1 : vector<16x64xf32>, vector<16x64xf32> -> vector<16x128xf32>
    %c0_116 = arith.constant 0 : index
    %c0_117 = arith.constant 0 : index
    %405 = vector.load %arg7[%c0_116, %c0_117] : memref<128x256xf32, #tpu.memory_space<vmem>>, vector<128x256xf32>
    %cst_118 = arith.constant dense<0.000000e+00> : vector<16x256xf32>
    %406 = tpu.matmul %404, %405, %cst_118 {dimension_numbers = #tpu.dot_dimension_numbers<[1], [0], [0], [1], [0, 0, 1, 1], [], []>} : vector<16x128xf32>, vector<128x256xf32>, vector<16x256xf32> -> vector<16x256xf32>
    %c0_119 = arith.constant 0 : index
    %c0_120 = arith.constant 0 : index
    %407 = vector.load %arg8[%c0_119, %c0_120] : memref<1x256xf32, #tpu.memory_space<vmem>>, vector<1x256xf32>
    %408 = vector.broadcast %407 : vector<1x256xf32> to vector<16x256xf32>
    %409 = arith.addf %406, %408 : vector<16x256xf32>
    %410 = vector.extract_strided_slice %409 {offsets = [0, 0], sizes = [16, 128], strides = [1, 1]} : vector<16x256xf32> to vector<16x128xf32>
    %411 = arith.negf %410 : vector<16x128xf32>
    %412 = math.exp %411 : vector<16x128xf32>
    %cst_121 = arith.constant 1.000000e+00 : f32
    %413 = vector.broadcast %cst_121 : f32 to vector<16x128xf32>
    %414 = arith.addf %413, %412 : vector<16x128xf32>
    %415 = arith.divf %413, %414 : vector<16x128xf32>
    %416 = vector.extract_strided_slice %415 {offsets = [0, 0], sizes = [16, 64], strides = [1, 1]} : vector<16x128xf32> to vector<16x64xf32>
    %417 = vector.extract_strided_slice %415 {offsets = [0, 64], sizes = [16, 64], strides = [1, 1]} : vector<16x128xf32> to vector<16x64xf32>
    %418 = vector.extract_strided_slice %409 {offsets = [0, 128], sizes = [16, 64], strides = [1, 1]} : vector<16x256xf32> to vector<16x64xf32>
    %419 = math.tanh %418 : vector<16x64xf32>
    %420 = vector.extract_strided_slice %409 {offsets = [0, 192], sizes = [16, 64], strides = [1, 1]} : vector<16x256xf32> to vector<16x64xf32>
    %421 = arith.negf %420 : vector<16x64xf32>
    %422 = math.exp %421 : vector<16x64xf32>
    %cst_122 = arith.constant 1.000000e+00 : f32
    %423 = vector.broadcast %cst_122 : f32 to vector<16x64xf32>
    %424 = arith.addf %423, %422 : vector<16x64xf32>
    %425 = arith.divf %423, %424 : vector<16x64xf32>
    %426 = arith.mulf %417, %376 : vector<16x64xf32>
    %427 = arith.mulf %416, %419 : vector<16x64xf32>
    %428 = arith.addf %426, %427 : vector<16x64xf32>
    %429 = math.tanh %428 : vector<16x64xf32>
    %430 = arith.mulf %425, %429 : vector<16x64xf32>
    %c0_123 = arith.constant 0 : index
    %c0_124 = arith.constant 0 : index
    %431 = vector.load %arg9[%c0_123, %c0_124] : memref<64x64xf32, #tpu.memory_space<vmem>>, vector<64x64xf32>
    %cst_125 = arith.constant dense<0.000000e+00> : vector<16x64xf32>
    %432 = tpu.matmul %430, %431, %cst_125 {dimension_numbers = #tpu.dot_dimension_numbers<[1], [0], [0], [1], [0, 0, 1, 1], [], []>} : vector<16x64xf32>, vector<64x64xf32>, vector<16x64xf32> -> vector<16x64xf32>
    %c0_126 = arith.constant 0 : index
    %c0_127 = arith.constant 0 : index
    %433 = vector.load %arg1[%c0_126, %c0_127] : memref<16x27xf32, #tpu.memory_space<vmem>>, vector<16x27xf32>
    %c0_128 = arith.constant 0 : index
    %c0_129 = arith.constant 0 : index
    %434 = vector.load %arg10[%c0_128, %c0_129] : memref<27x64xf32, #tpu.memory_space<vmem>>, vector<27x64xf32>
    %cst_130 = arith.constant dense<0.000000e+00> : vector<16x64xf32>
    %435 = tpu.matmul %433, %434, %cst_130 {dimension_numbers = #tpu.dot_dimension_numbers<[1], [0], [0], [1], [0, 0, 1, 1], [], []>} : vector<16x27xf32>, vector<27x64xf32>, vector<16x64xf32> -> vector<16x64xf32>
    %436 = arith.addf %432, %435 : vector<16x64xf32>
    %c0_131 = arith.constant 0 : index
    %c0_132 = arith.constant 0 : index
    %437 = vector.load %arg11[%c0_131, %c0_132] : memref<1x64xf32, #tpu.memory_space<vmem>>, vector<1x64xf32>
    %438 = vector.broadcast %437 : vector<1x64xf32> to vector<16x64xf32>
    %439 = arith.addf %436, %438 : vector<16x64xf32>
    %c0_133 = arith.constant 0 : index
    %c0_134 = arith.constant 0 : index
    %440 = vector.load %arg12[%c0_133, %c0_134] : memref<64x32xf32, #tpu.memory_space<vmem>>, vector<64x32xf32>
    %cst_135 = arith.constant dense<0.000000e+00> : vector<16x32xf32>
    %441 = tpu.matmul %439, %440, %cst_135 {dimension_numbers = #tpu.dot_dimension_numbers<[1], [0], [0], [1], [0, 0, 1, 1], [], []>} : vector<16x64xf32>, vector<64x32xf32>, vector<16x32xf32> -> vector<16x32xf32>
    %c0_136 = arith.constant 0 : index
    %c0_137 = arith.constant 0 : index
    %442 = vector.load %arg13[%c0_136, %c0_137] : memref<1x32xf32, #tpu.memory_space<vmem>>, vector<1x32xf32>
    %443 = vector.broadcast %442 : vector<1x32xf32> to vector<16x32xf32>
    %444 = arith.addf %441, %443 : vector<16x32xf32>
    %c0_138 = arith.constant 0 : index
    %c0_139 = arith.constant 0 : index
    %445 = vector.load %arg14[%c0_138, %c0_139] : memref<32x16xf32, #tpu.memory_space<vmem>>, vector<32x16xf32>
    %cst_140 = arith.constant dense<0.000000e+00> : vector<16x16xf32>
    %446 = tpu.matmul %444, %445, %cst_140 {dimension_numbers = #tpu.dot_dimension_numbers<[1], [0], [0], [1], [0, 0, 1, 1], [], []>} : vector<16x32xf32>, vector<32x16xf32>, vector<16x16xf32> -> vector<16x16xf32>
    %c0_141 = arith.constant 0 : index
    %c0_142 = arith.constant 0 : index
    %447 = vector.load %arg15[%c0_141, %c0_142] : memref<1x16xf32, #tpu.memory_space<vmem>>, vector<1x16xf32>
    %448 = vector.broadcast %447 : vector<1x16xf32> to vector<16x16xf32>
    %449 = arith.addf %446, %448 : vector<16x16xf32>
    %c0_143 = arith.constant 0 : index
    %c0_144 = arith.constant 0 : index
    %450 = vector.load %arg16[%c0_143, %c0_144] : memref<16x128xf32, #tpu.memory_space<vmem>>, vector<16x128xf32>
    %cst_145 = arith.constant dense<0.000000e+00> : vector<16x128xf32>
    %451 = tpu.matmul %449, %450, %cst_145 {dimension_numbers = #tpu.dot_dimension_numbers<[1], [0], [0], [1], [0, 0, 1, 1], [], []>} : vector<16x16xf32>, vector<16x128xf32>, vector<16x128xf32> -> vector<16x128xf32>
    %c0_146 = arith.constant 0 : index
    %c0_147 = arith.constant 0 : index
    %452 = vector.load %arg17[%c0_146, %c0_147] : memref<1x128xf32, #tpu.memory_space<vmem>>, vector<1x128xf32>
    %453 = vector.broadcast %452 : vector<1x128xf32> to vector<16x128xf32>
    %454 = arith.addf %451, %453 : vector<16x128xf32>
    %455 = vector.extract_strided_slice %454 {offsets = [0, 0], sizes = [16, 7], strides = [1, 1]} : vector<16x128xf32> to vector<16x7xf32>
    %456 = vector.shape_cast %455 : vector<16x7xf32> to vector<1x16x7xf32>
    %cst_148 = arith.constant dense<0.000000e+00> : vector<1xf32>
    %457 = vector.multi_reduction <add>, %456, %cst_148 [1, 2] : vector<1x16x7xf32> to vector<1xf32>
    %458 = vector.shape_cast %457 : vector<1xf32> to vector<1x1x1xf32>
    %459 = vector.extract %458[0, 0, 0] : f32 from vector<1x1x1xf32>
    %460 = vector.broadcast %459 : f32 to vector<1x1xf32>
    %cst_149 = arith.constant 1.120000e+02 : f32
    %461 = vector.broadcast %cst_149 : f32 to vector<1x1xf32>
    %462 = arith.divf %460, %461 : vector<1x1xf32>
    %463 = vector.broadcast %462 : vector<1x1xf32> to vector<16x7xf32>
    %464 = arith.subf %455, %463 : vector<16x7xf32>
    %465 = arith.mulf %464, %464 : vector<16x7xf32>
    %466 = vector.shape_cast %465 : vector<16x7xf32> to vector<1x16x7xf32>
    %cst_150 = arith.constant dense<0.000000e+00> : vector<1xf32>
    %467 = vector.multi_reduction <add>, %466, %cst_150 [1, 2] : vector<1x16x7xf32> to vector<1xf32>
    %468 = vector.shape_cast %467 : vector<1xf32> to vector<1x1x1xf32>
    %469 = vector.extract %468[0, 0, 0] : f32 from vector<1x1x1xf32>
    %470 = vector.broadcast %469 : f32 to vector<1x1xf32>
    %cst_151 = arith.constant 1.120000e+02 : f32
    %471 = vector.broadcast %cst_151 : f32 to vector<1x1xf32>
    %472 = arith.divf %470, %471 : vector<1x1xf32>
    %cst_152 = arith.constant 9.99999974E-6 : f32
    %473 = vector.broadcast %cst_152 : f32 to vector<1x1xf32>
    %474 = arith.addf %472, %473 : vector<1x1xf32>
    %475 = math.rsqrt %474 : vector<1x1xf32>
    %476 = vector.extract_strided_slice %454 {offsets = [0, 7], sizes = [16, 2], strides = [1, 1]} : vector<16x128xf32> to vector<16x2xf32>
    %477 = vector.shape_cast %476 : vector<16x2xf32> to vector<1x16x2xf32>
    %cst_153 = arith.constant dense<0.000000e+00> : vector<1xf32>
    %478 = vector.multi_reduction <add>, %477, %cst_153 [1, 2] : vector<1x16x2xf32> to vector<1xf32>
    %479 = vector.shape_cast %478 : vector<1xf32> to vector<1x1x1xf32>
    %480 = vector.extract %479[0, 0, 0] : f32 from vector<1x1x1xf32>
    %481 = vector.broadcast %480 : f32 to vector<1x1xf32>
    %cst_154 = arith.constant 3.200000e+01 : f32
    %482 = vector.broadcast %cst_154 : f32 to vector<1x1xf32>
    %483 = arith.divf %481, %482 : vector<1x1xf32>
    %484 = vector.broadcast %483 : vector<1x1xf32> to vector<16x2xf32>
    %485 = arith.subf %476, %484 : vector<16x2xf32>
    %486 = arith.mulf %485, %485 : vector<16x2xf32>
    %487 = vector.shape_cast %486 : vector<16x2xf32> to vector<1x16x2xf32>
    %cst_155 = arith.constant dense<0.000000e+00> : vector<1xf32>
    %488 = vector.multi_reduction <add>, %487, %cst_155 [1, 2] : vector<1x16x2xf32> to vector<1xf32>
    %489 = vector.shape_cast %488 : vector<1xf32> to vector<1x1x1xf32>
    %490 = vector.extract %489[0, 0, 0] : f32 from vector<1x1x1xf32>
    %491 = vector.broadcast %490 : f32 to vector<1x1xf32>
    %cst_156 = arith.constant 3.200000e+01 : f32
    %492 = vector.broadcast %cst_156 : f32 to vector<1x1xf32>
    %493 = arith.divf %491, %492 : vector<1x1xf32>
    %cst_157 = arith.constant 9.99999974E-6 : f32
    %494 = vector.broadcast %cst_157 : f32 to vector<1x1xf32>
    %495 = arith.addf %493, %494 : vector<1x1xf32>
    %496 = math.rsqrt %495 : vector<1x1xf32>
    %497 = tpu.iota {dimensions = array<i32: 1>} : vector<16x128xi32>
    %c7_i32 = arith.constant 7 : i32
    %498 = vector.broadcast %c7_i32 : i32 to vector<16x128xi32>
    %499 = arith.cmpi slt, %497, %498 : vector<16x128xi32>
    %c9_i32 = arith.constant 9 : i32
    %500 = vector.broadcast %c9_i32 : i32 to vector<16x128xi32>
    %501 = arith.cmpi slt, %497, %500 : vector<16x128xi32>
    %cst_158 = arith.constant 0.000000e+00 : f32
    %502 = vector.shape_cast %483 : vector<1x1xf32> to vector<1x1xf32>
    %503 = vector.broadcast %502 : vector<1x1xf32> to vector<16x128xf32>
    %504 = vector.broadcast %cst_158 : f32 to vector<16x128xf32>
    %505 = arith.select %501, %503, %504 : vector<16x128xi1>, vector<16x128xf32>
    %506 = vector.shape_cast %462 : vector<1x1xf32> to vector<1x1xf32>
    %507 = vector.broadcast %506 : vector<1x1xf32> to vector<16x128xf32>
    %508 = arith.select %499, %507, %505 : vector<16x128xi1>, vector<16x128xf32>
    %c7_i32_159 = arith.constant 7 : i32
    %509 = vector.broadcast %c7_i32_159 : i32 to vector<16x128xi32>
    %510 = arith.cmpi slt, %497, %509 : vector<16x128xi32>
    %c9_i32_160 = arith.constant 9 : i32
    %511 = vector.broadcast %c9_i32_160 : i32 to vector<16x128xi32>
    %512 = arith.cmpi slt, %497, %511 : vector<16x128xi32>
    %cst_161 = arith.constant 0.000000e+00 : f32
    %513 = vector.shape_cast %496 : vector<1x1xf32> to vector<1x1xf32>
    %514 = vector.broadcast %513 : vector<1x1xf32> to vector<16x128xf32>
    %515 = vector.broadcast %cst_161 : f32 to vector<16x128xf32>
    %516 = arith.select %512, %514, %515 : vector<16x128xi1>, vector<16x128xf32>
    %517 = vector.shape_cast %475 : vector<1x1xf32> to vector<1x1xf32>
    %518 = vector.broadcast %517 : vector<1x1xf32> to vector<16x128xf32>
    %519 = arith.select %510, %518, %516 : vector<16x128xi1>, vector<16x128xf32>
    %520 = arith.subf %454, %508 : vector<16x128xf32>
    %521 = arith.mulf %520, %519 : vector<16x128xf32>
    %c0_162 = arith.constant 0 : index
    %c0_163 = arith.constant 0 : index
    %522 = vector.load %arg18[%c0_162, %c0_163] : memref<16x128xf32, #tpu.memory_space<vmem>>, vector<16x128xf32>
    tpu.vector_store %arg18[%c0_162, %c0_163], %521 {strides = array<i32>} : memref<16x128xf32, #tpu.memory_space<vmem>>, vector<16x128xf32>,
    return
  }
}

</mosaic_0001>

<llo_original>
// kernel: tpu_custom_call.1
$region0: #{tpu_custom_call.1}
  #allocation0 [shape = 'u32[]', space=smem, size = 0x4, offset = 0x4, fixed_abs, tag = 'smem constant byte address 0x4 - core index']
  #allocation1 [shape = 'u32[144,128]{1,0:T(1,128)}', space=vmem, size = 0x12000, scoped, tag = 'internal scratch']
  #allocation2 [shape = 'f32[128,256]{1,0:T(8,128)}', space=vmem, size = 0x20000, scoped, tag = 'scratch operand']
  %s0 = inlined_call_operand.vmem [shape: f32[128,22], index: 0, kind: input, shape index: {}]
  %s1 = inlined_call_operand.hbm [shape: f32[16,27], index: 1, kind: input, shape index: {}]
  %s2 = inlined_call_operand.hbm [shape: f32[2,16,64], index: 2, kind: input, shape index: {}]
  %s3 = inlined_call_operand.hbm [shape: f32[2,16,64], index: 3, kind: input, shape index: {}]
  %s4 = inlined_call_operand.vmem [shape: f32[22,256], index: 4, kind: input, shape index: {}]
  %s5 = inlined_call_operand.hbm [shape: f32[64,256], index: 5, kind: input, shape index: {}]
  %s6 = inlined_call_operand.hbm [shape: f32[1,256], index: 6, kind: input, shape index: {}]
  %s7 = inlined_call_operand.vmem [shape: f32[128,256], index: 7, kind: input, shape index: {}]
  %s8 = inlined_call_operand.hbm [shape: f32[1,256], index: 8, kind: input, shape index: {}]
  %s9 = inlined_call_operand.hbm [shape: f32[64,64], index: 9, kind: input, shape index: {}]
  %s10 = inlined_call_operand.hbm [shape: f32[27,64], index: 10, kind: input, shape index: {}]
  %s11 = inlined_call_operand.vmem [shape: f32[1,64], index: 11, kind: input, shape index: {}]
  %s12 = inlined_call_operand.vmem [shape: f32[64,32], index: 12, kind: input, shape index: {}]
  %s13 = inlined_call_operand.hbm [shape: f32[1,32], index: 13, kind: input, shape index: {}]
  %s14 = inlined_call_operand.vmem [shape: f32[32,16], index: 14, kind: input, shape index: {}]
  %s15 = inlined_call_operand.hbm [shape: f32[1,16], index: 15, kind: input, shape index: {}]
  %s16 = inlined_call_operand.hbm [shape: f32[16,128], index: 16, kind: input, shape index: {}]
  %s17 = inlined_call_operand.vmem [shape: f32[1,128], index: 17, kind: input, shape index: {}]
  %s18 = inlined_call_operand.hbm [shape: f32[16,128], index: 18, kind: output, shape index: {}]
  %s19 = sld [smem:[#allocation0]]
  $region126: #{tpu_custom_call.1} parent=0
    _
  %s21 = ssub.s32 1, %s19
  %s22 = scalar_select 0, %s21, %s19
  $region1: #{tpu_custom_call.1} parent=0
    #allocation3 [shape = 'u8[8192]{0}', space=vmem, size = 0x2000, scoped, tag = 'input window, operand 1, single buffered']
    #allocation4 [shape = 's32[1]{0}', space=sflag, size = 0x4, scoped, tag = 'scoped memory for tpu_custom_call.1']
    #allocation5 [shape = 's32[1]{0}', space=sflag, size = 0x4, scoped, tag = 'scoped memory for tpu_custom_call.1']
    #allocation6 [shape = 'u8[16384]{0}', space=vmem, size = 0x4000, scoped, tag = 'input window, operand 2, single buffered']
    #allocation7 [shape = 's32[1]{0}', space=sflag, size = 0x4, scoped, tag = 'scoped memory for tpu_custom_call.1']
    #allocation8 [shape = 'u8[16384]{0}', space=vmem, size = 0x4000, scoped, tag = 'input window, operand 3, single buffered']
    #allocation9 [shape = 'u8[65536]{0}', space=vmem, size = 0x10000, scoped, tag = 'input window, operand 5, single buffered']
    #allocation10 [shape = 's32[1]{0}', space=sflag, size = 0x4, scoped, tag = 'scoped memory for tpu_custom_call.1']
    #allocation11 [shape = 'u8[1024]{0}', space=vmem, size = 0x400, scoped, tag = 'input window, operand 6, single buffered']
    #allocation12 [shape = 'u8[1024]{0}', space=vmem, size = 0x400, scoped, tag = 'input window, operand 8, single buffered']
    #allocation13 [shape = 's32[1]{0}', space=sflag, size = 0x4, scoped, tag = 'scoped memory for tpu_custom_call.1']
    #allocation14 [shape = 'u8[32768]{0}', space=vmem, size = 0x8000, scoped, tag = 'input window, operand 9, single buffered']
    #allocation15 [shape = 'u8[16384]{0}', space=vmem, size = 0x4000, scoped, tag = 'input window, operand 10, single buffered']
    #allocation16 [shape = 's32[1]{0}', space=sflag, size = 0x4, scoped, tag = 'scoped memory for tpu_custom_call.1']
    #allocation17 [shape = 'u8[512]{0}', space=vmem, size = 0x400, scoped, tag = 'input window, operand 13, single buffered']
    #allocation18 [shape = 'u8[512]{0}', space=vmem, size = 0x400, scoped, tag = 'input window, operand 15, single buffered']
    #allocation19 [shape = 's32[1]{0}', space=sflag, size = 0x4, scoped, tag = 'scoped memory for tpu_custom_call.1']
    #allocation20 [shape = 'u8[8192]{0}', space=vmem, size = 0x2000, scoped, tag = 'input window, operand 16, single buffered']
    #allocation21 [shape = 'u8[8192]{0}', space=vmem, size = 0x2000, scoped, tag = 'output window, operand 0, single buffered']
    %23 = vsyncpa [#allocation4], 0
    %24 = vsyncpa [#allocation7], 0
    %25 = vsyncpa [#allocation10], 0
    %26 = vsyncpa [#allocation13], 0
    %27 = vsyncpa [#allocation16], 0
    %28 = vsyncpa [#allocation19], 0
    %29 = vsyncpa [#allocation5], 0
    // Predicated region
    $region2: #{tpu_custom_call.1} parent=1 // pred_check
      _
    $region3: #{tpu_custom_call.1} parent=1 // pred_check_branch
      %31 = sbr.rel (0) target = $region5
    $region4: #{tpu_custom_call.1} parent=1 // pred_region
      _
    $region5: #{tpu_custom_call.1} parent=1 // pred_fallthru
      _
    // Predicated region
    $region6: #{tpu_custom_call.1} parent=1 // pred_check
      _
    $region7: #{tpu_custom_call.1} parent=1 // pred_check_branch
      %33 = sbr.rel (0) target = $region9
    $region8: #{tpu_custom_call.1} parent=1 // pred_region
      %s35 = ssub.s32 256, 256
      %36 = vsyncadd [#allocation4], %s35
      %s37 = sshll.u32 [#allocation3], 4
      %s38 = int_to_ptr.vmem [resolvable:$true] %s37
      %43 = dma.hbm_to_vmem [thread:$0]  %s1, 256, %s38, [#allocation4], 128, 128, 8
    $region9: #{tpu_custom_call.1} parent=1 // pred_fallthru
      _
    // Predicated region
    $region10: #{tpu_custom_call.1} parent=1 // pred_check
      _
    $region11: #{tpu_custom_call.1} parent=1 // pred_check_branch
      %45 = sbr.rel (0) target = $region13
    $region12: #{tpu_custom_call.1} parent=1 // pred_region
      %s47 = ssub.s32 512, 512
      %48 = vsyncadd [#allocation7], %s47
      %s49 = sshll.u32 [#allocation6], 4
      %s50 = int_to_ptr.vmem [resolvable:$true] %s49
      %55 = dma.hbm_to_vmem [thread:$0]  %s2, 512, %s50, [#allocation7], 128, 128, 8
    $region13: #{tpu_custom_call.1} parent=1 // pred_fallthru
      _
    // Predicated region
    $region14: #{tpu_custom_call.1} parent=1 // pred_check
      _
    $region15: #{tpu_custom_call.1} parent=1 // pred_check_branch
      %57 = sbr.rel (0) target = $region17
    $region16: #{tpu_custom_call.1} parent=1 // pred_region
      %s59 = ssub.s32 512, 512
      %60 = vsyncadd [#allocation7], %s59
      %s61 = sshll.u32 [#allocation8], 4
      %s62 = int_to_ptr.vmem [resolvable:$true] %s61
      %67 = dma.hbm_to_vmem [thread:$0]  %s3, 512, %s62, [#allocation7], 128, 128, 8
    $region17: #{tpu_custom_call.1} parent=1 // pred_fallthru
      _
    // Predicated region
    $region18: #{tpu_custom_call.1} parent=1 // pred_check
      _
    $region19: #{tpu_custom_call.1} parent=1 // pred_check_branch
      %69 = sbr.rel (0) target = $region21
    $region20: #{tpu_custom_call.1} parent=1 // pred_region
      _
    $region21: #{tpu_custom_call.1} parent=1 // pred_fallthru
      _
    // Predicated region
    $region22: #{tpu_custom_call.1} parent=1 // pred_check
      _
    $region23: #{tpu_custom_call.1} parent=1 // pred_check_branch
      %71 = sbr.rel (0) target = $region25
    $region24: #{tpu_custom_call.1} parent=1 // pred_region
      %s73 = ssub.s32 2048, 2048
      %74 = vsyncadd [#allocation10], %s73
      %s75 = sshll.u32 [#allocation9], 4
      %s76 = int_to_ptr.vmem [resolvable:$true] %s75
      %81 = dma.hbm_to_vmem [thread:$0]  %s5, 2048, %s76, [#allocation10], 256, 256, 16
    $region25: #{tpu_custom_call.1} parent=1 // pred_fallthru
      _
    // Predicated region
    $region26: #{tpu_custom_call.1} parent=1 // pred_check
      _
    $region27: #{tpu_custom_call.1} parent=1 // pred_check_branch
      %83 = sbr.rel (0) target = $region29
    $region28: #{tpu_custom_call.1} parent=1 // pred_region
      %s85 = ssub.s32 32, 32
      %86 = vsyncadd [#allocation10], %s85
      %s88 = sshll.u32 [#allocation11], 4
      %s89 = int_to_ptr.vmem [resolvable:$true] %s88
      %91 = dma.hbm_to_vmem [thread:$0]  %s6, 32, %s89, [#allocation10]
    $region29: #{tpu_custom_call.1} parent=1 // pred_fallthru
      _
    // Predicated region
    $region30: #{tpu_custom_call.1} parent=1 // pred_check
      _
    $region31: #{tpu_custom_call.1} parent=1 // pred_check_branch
      %93 = sbr.rel (0) target = $region33
    $region32: #{tpu_custom_call.1} parent=1 // pred_region
      _
    $region33: #{tpu_custom_call.1} parent=1 // pred_fallthru
      _
    // Predicated region
    $region34: #{tpu_custom_call.1} parent=1 // pred_check
      _
    $region35: #{tpu_custom_call.1} parent=1 // pred_check_branch
      %95 = sbr.rel (0) target = $region37
    $region36: #{tpu_custom_call.1} parent=1 // pred_region
      %s97 = ssub.s32 32, 32
      %98 = vsyncadd [#allocation13], %s97
      %s100 = sshll.u32 [#allocation12], 4
      %s101 = int_to_ptr.vmem [resolvable:$true] %s100
      %103 = dma.hbm_to_vmem [thread:$0]  %s8, 32, %s101, [#allocation13]
    $region37: #{tpu_custom_call.1} parent=1 // pred_fallthru
      _
    // Predicated region
    $region38: #{tpu_custom_call.1} parent=1 // pred_check
      _
    $region39: #{tpu_custom_call.1} parent=1 // pred_check_branch
      %105 = sbr.rel (0) target = $region41
    $region40: #{tpu_custom_call.1} parent=1 // pred_region
      %s107 = ssub.s32 1024, 1024
      %108 = vsyncadd [#allocation13], %s107
      %s109 = sshll.u32 [#allocation14], 4
      %s110 = int_to_ptr.vmem [resolvable:$true] %s109
      %115 = dma.hbm_to_vmem [thread:$0]  %s9, 1024, %s110, [#allocation13], 128, 128, 8
    $region41: #{tpu_custom_call.1} parent=1 // pred_fallthru
      _
    // Predicated region
    $region42: #{tpu_custom_call.1} parent=1 // pred_check
      _
    $region43: #{tpu_custom_call.1} parent=1 // pred_check_branch
      %117 = sbr.rel (0) target = $region45
    $region44: #{tpu_custom_call.1} parent=1 // pred_region
      %s119 = ssub.s32 512, 512
      %120 = vsyncadd [#allocation16], %s119
      %s121 = sshll.u32 [#allocation15], 4
      %s122 = int_to_ptr.vmem [resolvable:$true] %s121
      %127 = dma.hbm_to_vmem [thread:$0]  %s10, 512, %s122, [#allocation16], 128, 128, 8
    $region45: #{tpu_custom_call.1} parent=1 // pred_fallthru
      _
    // Predicated region
    $region46: #{tpu_custom_call.1} parent=1 // pred_check
      _
    $region47: #{tpu_custom_call.1} parent=1 // pred_check_branch
      %129 = sbr.rel (0) target = $region49
    $region48: #{tpu_custom_call.1} parent=1 // pred_region
      _
    $region49: #{tpu_custom_call.1} parent=1 // pred_fallthru
      _
    // Predicated region
    $region50: #{tpu_custom_call.1} parent=1 // pred_check
      _
    $region51: #{tpu_custom_call.1} parent=1 // pred_check_branch
      %131 = sbr.rel (0) target = $region53
    $region52: #{tpu_custom_call.1} parent=1 // pred_region
      _
    $region53: #{tpu_custom_call.1} parent=1 // pred_fallthru
      _
    // Predicated region
    $region54: #{tpu_custom_call.1} parent=1 // pred_check
      _
    $region55: #{tpu_custom_call.1} parent=1 // pred_check_branch
      %133 = sbr.rel (0) target = $region57
    $region56: #{tpu_custom_call.1} parent=1 // pred_region
      %s135 = ssub.s32 16, 16
      %136 = vsyncadd [#allocation16], %s135
      %s138 = sshll.u32 [#allocation17], 4
      %s139 = int_to_ptr.vmem [resolvable:$true] %s138
      %141 = dma.hbm_to_vmem [thread:$0]  %s13, 16, %s139, [#allocation16]
    $region57: #{tpu_custom_call.1} parent=1 // pred_fallthru
      _
    // Predicated region
    $region58: #{tpu_custom_call.1} parent=1 // pred_check
      _
    $region59: #{tpu_custom_call.1} parent=1 // pred_check_branch
      %143 = sbr.rel (0) target = $region61
    $region60: #{tpu_custom_call.1} parent=1 // pred_region
      _
    $region61: #{tpu_custom_call.1} parent=1 // pred_fallthru
      _
    // Predicated region
    $region62: #{tpu_custom_call.1} parent=1 // pred_check
      _
    $region63: #{tpu_custom_call.1} parent=1 // pred_check_branch
      %145 = sbr.rel (0) target = $region65
    $region64: #{tpu_custom_call.1} parent=1 // pred_region
      %s147 = ssub.s32 16, 16
      %148 = vsyncadd [#allocation19], %s147
      %s150 = sshll.u32 [#allocation18], 4
      %s151 = int_to_ptr.vmem [resolvable:$true] %s150
      %153 = dma.hbm_to_vmem [thread:$0]  %s15, 16, %s151, [#allocation19]
    $region65: #{tpu_custom_call.1} parent=1 // pred_fallthru
      _
    // Predicated region
    $region66: #{tpu_custom_call.1} parent=1 // pred_check
      _
    $region67: #{tpu_custom_call.1} parent=1 // pred_check_branch
      %155 = sbr.rel (0) target = $region69
    $region68: #{tpu_custom_call.1} parent=1 // pred_region
      %s157 = ssub.s32 256, 256
      %158 = vsyncadd [#allocation19], %s157
      %s159 = sshll.u32 [#allocation20], 4
      %s160 = int_to_ptr.vmem [resolvable:$true] %s159
      %165 = dma.hbm_to_vmem [thread:$0]  %s16, 256, %s160, [#allocation19], 128, 128, 8
    $region69: #{tpu_custom_call.1} parent=1 // pred_fallthru
      _
    // Predicated region
    $region70: #{tpu_custom_call.1} parent=1 // pred_check
      _
    $region71: #{tpu_custom_call.1} parent=1 // pred_check_branch
      %167 = sbr.rel (0) target = $region73
    $region72: #{tpu_custom_call.1} parent=1 // pred_region
      _
    $region73: #{tpu_custom_call.1} parent=1 // pred_fallthru
      _
    // Predicated region
    $region74: #{tpu_custom_call.1} parent=1 // pred_check
      _
    $region75: #{tpu_custom_call.1} parent=1 // pred_check_branch
      %169 = sbr.rel (0) target = $region77
    $region76: #{tpu_custom_call.1} parent=1 // pred_region
      %170 = dma.done [#allocation4], 256
    $region77: #{tpu_custom_call.1} parent=1 // pred_fallthru
      _
    // Predicated region
    $region78: #{tpu_custom_call.1} parent=1 // pred_check
      _
    $region79: #{tpu_custom_call.1} parent=1 // pred_check_branch
      %172 = sbr.rel (0) target = $region81
    $region80: #{tpu_custom_call.1} parent=1 // pred_region
      %173 = dma.done [#allocation7], 512
    $region81: #{tpu_custom_call.1} parent=1 // pred_fallthru
      _
    // Predicated region
    $region82: #{tpu_custom_call.1} parent=1 // pred_check
      _
    $region83: #{tpu_custom_call.1} parent=1 // pred_check_branch
      %175 = sbr.rel (0) target = $region85
    $region84: #{tpu_custom_call.1} parent=1 // pred_region
      %176 = dma.done [#allocation7], 512
    $region85: #{tpu_custom_call.1} parent=1 // pred_fallthru
      _
    // Predicated region
    $region86: #{tpu_custom_call.1} parent=1 // pred_check
      _
    $region87: #{tpu_custom_call.1} parent=1 // pred_check_branch
      %178 = sbr.rel (0) target = $region89
    $region88: #{tpu_custom_call.1} parent=1 // pred_region
      %179 = dma.done [#allocation10], 2048
    $region89: #{tpu_custom_call.1} parent=1 // pred_fallthru
      _
    // Predicated region
    $region90: #{tpu_custom_call.1} parent=1 // pred_check
      _
    $region91: #{tpu_custom_call.1} parent=1 // pred_check_branch
      %181 = sbr.rel (0) target = $region93
    $region92: #{tpu_custom_call.1} parent=1 // pred_region
      %182 = dma.done [#allocation10], 32
    $region93: #{tpu_custom_call.1} parent=1 // pred_fallthru
      _
    // Predicated region
    $region94: #{tpu_custom_call.1} parent=1 // pred_check
      _
    $region95: #{tpu_custom_call.1} parent=1 // pred_check_branch
      %184 = sbr.rel (0) target = $region97
    $region96: #{tpu_custom_call.1} parent=1 // pred_region
      %185 = dma.done [#allocation13], 32
    $region97: #{tpu_custom_call.1} parent=1 // pred_fallthru
      _
    // Predicated region
    $region98: #{tpu_custom_call.1} parent=1 // pred_check
      _
    $region99: #{tpu_custom_call.1} parent=1 // pred_check_branch
      %187 = sbr.rel (0) target = $region101
    $region100: #{tpu_custom_call.1} parent=1 // pred_region
      %188 = dma.done [#allocation13], 1024
    $region101: #{tpu_custom_call.1} parent=1 // pred_fallthru
      _
    // Predicated region
    $region102: #{tpu_custom_call.1} parent=1 // pred_check
      _
    $region103: #{tpu_custom_call.1} parent=1 // pred_check_branch
      %190 = sbr.rel (0) target = $region105
    $region104: #{tpu_custom_call.1} parent=1 // pred_region
      %191 = dma.done [#allocation16], 512
    $region105: #{tpu_custom_call.1} parent=1 // pred_fallthru
      _
    // Predicated region
    $region106: #{tpu_custom_call.1} parent=1 // pred_check
      _
    $region107: #{tpu_custom_call.1} parent=1 // pred_check_branch
      %193 = sbr.rel (0) target = $region109
    $region108: #{tpu_custom_call.1} parent=1 // pred_region
      %194 = dma.done [#allocation16], 16
    $region109: #{tpu_custom_call.1} parent=1 // pred_fallthru
      _
    // Predicated region
    $region110: #{tpu_custom_call.1} parent=1 // pred_check
      _
    $region111: #{tpu_custom_call.1} parent=1 // pred_check_branch
      %196 = sbr.rel (0) target = $region113
    $region112: #{tpu_custom_call.1} parent=1 // pred_region
      %197 = dma.done [#allocation19], 16
    $region113: #{tpu_custom_call.1} parent=1 // pred_fallthru
      _
    // Predicated region
    $region114: #{tpu_custom_call.1} parent=1 // pred_check
      _
    $region115: #{tpu_custom_call.1} parent=1 // pred_check_branch
      %199 = sbr.rel (0) target = $region117
    $region116: #{tpu_custom_call.1} parent=1 // pred_region
      %200 = dma.done [#allocation19], 256
    $region117: #{tpu_custom_call.1} parent=1 // pred_fallthru
      _
    %v201 = vld [vmem:[%s0] sm:$0xff]
    %v202 = vld [vmem:[%s0 + $0x8] sm:$0xff]
    %v203 = vld [vmem:[%s0 + $0x10] sm:$0xff]
    %v204 = vld [vmem:[%s0 + $0x18] sm:$0xff]
    %v205 = vld [vmem:[%s0 + $0x20] sm:$0xff]
    %v206 = vld [vmem:[%s0 + $0x28] sm:$0xff]
    %v207 = vld [vmem:[%s0 + $0x30] sm:$0xff]
    %v208 = vld [vmem:[%s0 + $0x38] sm:$0xff]
    %v209 = vld [vmem:[%s0 + $0x40] sm:$0xff]
    %v210 = vld [vmem:[%s0 + $0x48] sm:$0xff]
    %v211 = vld [vmem:[%s0 + $0x50] sm:$0xff]
    %v212 = vld [vmem:[%s0 + $0x58] sm:$0xff]
    %v213 = vld [vmem:[%s0 + $0x60] sm:$0xff]
    %v214 = vld [vmem:[%s0 + $0x68] sm:$0xff]
    %v215 = vld [vmem:[%s0 + $0x70] sm:$0xff]
    %v216 = vld [vmem:[%s0 + $0x78] sm:$0xff]
    %v217 = vld [vmem:[%s4] sm:$0xff]
    %v218 = vld [vmem:[%s4 + $0x8] sm:$0xff]
    %v219 = vld [vmem:[%s4 + $0x10] sm:$0xff]
    %v220 = vld [vmem:[%s4 + $0x18] sm:$0xff]
    %v221 = vld [vmem:[%s4 + $0x20] sm:$0x3f]
    %v222 = vld [vmem:[%s4 + $0x28] sm:$0x3f]
    %v223 = vld [vmem:[#allocation11] sm:$0x3]
    %v225 = vlaneseq
    %v226 = vshrl.u32 %v225, 7
    %v227 = vsub.s32 0, %v226
    %v228 = vrot.slane %v223, %v227
    %v229 = vlaneseq
    %v230 = vshrl.u32 %v229, 7
    %v231 = vsub.s32 1, %v230
    %v232 = vrot.slane %v223, %v231
    %vm235 = vcmask 179200
    %v237 = vsel %vm235, %v201, 0
    %v240 = vsel %vm235, %v202, 0
    %v243 = vsel %vm235, %v203, 0
    %v246 = vsel %vm235, %v204, 0
    %v249 = vsel %vm235, %v205, 0
    %v252 = vsel %vm235, %v206, 0
    %v255 = vsel %vm235, %v207, 0
    %v258 = vsel %vm235, %v208, 0
    %v261 = vsel %vm235, %v209, 0
    %v264 = vsel %vm235, %v210, 0
    %v267 = vsel %vm235, %v211, 0
    %v270 = vsel %vm235, %v212, 0
    %v273 = vsel %vm235, %v213, 0
    %v276 = vsel %vm235, %v214, 0
    %v279 = vsel %vm235, %v215, 0
    %v282 = vsel %vm235, %v216, 0
    %vm284 = vcmask 1045504
    %v286 = vsel %vm284, %v221, 0
    %v289 = vsel %vm284, %v222, 0
    %291 = vmatprep.subr.mxu0 0.0
    %292 = vmatpush1.msra.mxu0 0.0
    %293 = vmatprep.subr.mxu0 0.0
    %294 = vmatpush1.msra.mxu0 0.0
    %295 = vmatprep.subr.mxu0 0.0
    %296 = vmatpush1.msra.mxu0 0.0
    %297 = vmatprep.subr.mxu0 0.0
    %298 = vmatpush1.msra.mxu0 0.0
    %299 = vmatprep.subr.mxu0 0.0
    %300 = vmatpush1.msra.mxu0 0.0
    %301 = vmatprep.subr.mxu0 0.0
    %302 = vmatpush1.msra.mxu0 0.0
    %303 = vmatprep.subr.mxu0 0.0
    %304 = vmatpush1.msra.mxu0 0.0
    %305 = vmatprep.subr.mxu0 0.0
    %306 = vmatpush1.msra.mxu0 0.0
    %307 = vmatprep.subr.mxu0 0.0
    %308 = vmatpush1.msra.mxu0 0.0
    %309 = vmatprep.subr.mxu0 0.0
    %310 = vmatpush1.msra.mxu0 0.0
    %311 = vmatprep.subr.mxu0 0.0
    %312 = vmatpush1.msra.mxu0 0.0
    %313 = vmatprep.subr.mxu0 0.0
    %314 = vmatpush1.msra.mxu0 0.0
    %315 = vmatprep.subr.mxu0 0.0
    %316 = vmatpush1.msra.mxu0 0.0
    %317 = vmatprep.subr.mxu0 %v289
    %318 = vmatpush1.msra.mxu0 %v286
    %319 = vmatprep.subr.mxu0 %v220
    %320 = vmatpush1.msra.mxu0 %v219
    %321 = vmatprep.subr.mxu0 %v218
    %322 = vmatpush1.msra.mxu0 %v217
    %323 = vmatprep.subr.mxu0 0.0
    %324 = vmatpush2.msra.mxu0 0.0
    %325 = vmatprep.subr.mxu0 0.0
    %326 = vmatpush2.msra.mxu0 0.0
    %327 = vmatprep.subr.mxu0 0.0
    %328 = vmatpush2.msra.mxu0 0.0
    %329 = vmatprep.subr.mxu0 0.0
    %330 = vmatpush2.msra.mxu0 0.0
    %331 = vmatprep.subr.mxu0 0.0
    %332 = vmatpush2.msra.mxu0 0.0
    %333 = vmatprep.subr.mxu0 0.0
    %334 = vmatpush2.msra.mxu0 0.0
    %335 = vmatprep.subr.mxu0 0.0
    %336 = vmatpush2.msra.mxu0 0.0
    %337 = vmatprep.subr.mxu0 0.0
    %338 = vmatpush2.msra.mxu0 0.0
    %339 = vmatprep.subr.mxu0 0.0
    %340 = vmatpush2.msra.mxu0 0.0
    %341 = vmatprep.subr.mxu0 0.0
    %342 = vmatpush2.msra.mxu0 0.0
    %343 = vmatprep.subr.mxu0 0.0
    %344 = vmatpush2.msra.mxu0 0.0
    %345 = vmatprep.subr.mxu0 0.0
    %346 = vmatpush2.msra.mxu0 0.0
    %347 = vmatprep.subr.mxu0 0.0
    %348 = vmatpush2.msra.mxu0 0.0
    %349 = vmatprep.subr.mxu0 0.0
    %350 = vmatpush2.msra.mxu0 0.0
    %351 = vmatprep.subr.mxu0 0.0
    %352 = vmatpush2.msra.mxu0 0.0
    %353 = vmatprep.subr.mxu0 0.0
    %354 = vmatpush2.msra.mxu0 0.0
    %355 = vmatprep.mubr.f32.mxu0 0.0
    %356 = vmatmul.mubr.f32.gmra.mxu0 %v237
    %v357 = vpop.f32.mrf.mxu0
    %v358 = vadd.f32 %v228, %v357
    %v359 = vpop.f32.mrf.mxu0
    %v360 = vadd.f32 %v232, %v359
    %361 = vmatprep.mubr.f32.mxu0 0.0
    %362 = vmatmul.mubr.f32.gmra.mxu0 %v240
    %v363 = vpop.f32.mrf.mxu0
    %v364 = vadd.f32 %v228, %v363
    %v365 = vpop.f32.mrf.mxu0
    %v366 = vadd.f32 %v232, %v365
    %367 = vmatprep.mubr.f32.mxu0 0.0
    %368 = vmatmul.mubr.f32.gmra.mxu0 %v243
    %v369 = vpop.f32.mrf.mxu0
    %v370 = vadd.f32 %v228, %v369
    %v371 = vpop.f32.mrf.mxu0
    %v372 = vadd.f32 %v232, %v371
    %373 = vmatprep.mubr.f32.mxu0 0.0
    %374 = vmatmul.mubr.f32.gmra.mxu0 %v246
    %v375 = vpop.f32.mrf.mxu0
    %v376 = vadd.f32 %v228, %v375
    %v377 = vpop.f32.mrf.mxu0
    %v378 = vadd.f32 %v232, %v377
    %379 = vmatprep.mubr.f32.mxu0 0.0
    %380 = vmatmul.mubr.f32.gmra.mxu0 %v249
    %v381 = vpop.f32.mrf.mxu0
    %v382 = vadd.f32 %v228, %v381
    %v383 = vpop.f32.mrf.mxu0
    %v384 = vadd.f32 %v232, %v383
    %385 = vmatprep.mubr.f32.mxu0 0.0
    %386 = vmatmul.mubr.f32.gmra.mxu0 %v252
    %v387 = vpop.f32.mrf.mxu0
    %v388 = vadd.f32 %v228, %v387
    %v389 = vpop.f32.mrf.mxu0
    %v390 = vadd.f32 %v232, %v389
    %391 = vmatprep.mubr.f32.mxu0 0.0
    %392 = vmatmul.mubr.f32.gmra.mxu0 %v255
    %v393 = vpop.f32.mrf.mxu0
    %v394 = vadd.f32 %v228, %v393
    %v395 = vpop.f32.mrf.mxu0
    %v396 = vadd.f32 %v232, %v395
    %397 = vmatprep.mubr.f32.mxu0 0.0
    %398 = vmatmul.mubr.f32.gmra.mxu0 %v258
    %v399 = vpop.f32.mrf.mxu0
    %v400 = vadd.f32 %v228, %v399
    %v401 = vpop.f32.mrf.mxu0
    %v402 = vadd.f32 %v232, %v401
    %403 = vmatprep.mubr.f32.mxu0 0.0
    %404 = vmatmul.mubr.f32.gmra.mxu0 %v261
    %v405 = vpop.f32.mrf.mxu0
    %v406 = vadd.f32 %v228, %v405
    %v407 = vpop.f32.mrf.mxu0
    %v408 = vadd.f32 %v232, %v407
    %409 = vmatprep.mubr.f32.mxu0 0.0
    %410 = vmatmul.mubr.f32.gmra.mxu0 %v264
    %v411 = vpop.f32.mrf.mxu0
    %v412 = vadd.f32 %v228, %v411
    %v413 = vpop.f32.mrf.mxu0
    %v414 = vadd.f32 %v232, %v413
    %415 = vmatprep.mubr.f32.mxu0 0.0
    %416 = vmatmul.mubr.f32.gmra.mxu0 %v267
    %v417 = vpop.f32.mrf.mxu0
    %v418 = vadd.f32 %v228, %v417
    %v419 = vpop.f32.mrf.mxu0
    %v420 = vadd.f32 %v232, %v419
    %421 = vmatprep.mubr.f32.mxu0 0.0
    %422 = vmatmul.mubr.f32.gmra.mxu0 %v270
    %v423 = vpop.f32.mrf.mxu0
    %v424 = vadd.f32 %v228, %v423
    %v425 = vpop.f32.mrf.mxu0
    %v426 = vadd.f32 %v232, %v425
    %427 = vmatprep.mubr.f32.mxu0 0.0
    %428 = vmatmul.mubr.f32.gmra.mxu0 %v273
    %v429 = vpop.f32.mrf.mxu0
    %v430 = vadd.f32 %v228, %v429
    %v431 = vpop.f32.mrf.mxu0
    %v432 = vadd.f32 %v232, %v431
    %433 = vmatprep.mubr.f32.mxu0 0.0
    %434 = vmatmul.mubr.f32.gmra.mxu0 %v276
    %v435 = vpop.f32.mrf.mxu0
    %v436 = vadd.f32 %v228, %v435
    %v437 = vpop.f32.mrf.mxu0
    %v438 = vadd.f32 %v232, %v437
    %439 = vmatprep.mubr.f32.mxu0 0.0
    %440 = vmatmul.mubr.f32.gmra.mxu0 %v279
    %v441 = vpop.f32.mrf.mxu0
    %v442 = vadd.f32 %v228, %v441
    %v443 = vpop.f32.mrf.mxu0
    %v444 = vadd.f32 %v232, %v443
    %445 = vmatprep.mubr.f32.mxu0 0.0
    %446 = vmatmul.mubr.f32.gmra.mxu0 %v282
    %v447 = vpop.f32.mrf.mxu0
    %v448 = vadd.f32 %v228, %v447
    %v449 = vpop.f32.mrf.mxu0
    %v450 = vadd.f32 %v232, %v449
    %451 = vdwg.mxu0
    %452 = vst [vmem:[#allocation2] sm:$0xff] %v358
    %453 = vst [vmem:[#allocation2 + $0x8] sm:$0xff] %v360
    %454 = vst [vmem:[#allocation2 + $0x10] sm:$0xff] %v364
    %455 = vst [vmem:[#allocation2 + $0x18] sm:$0xff] %v366
    %456 = vst [vmem:[#allocation2 + $0x20] sm:$0xff] %v370
    %457 = vst [vmem:[#allocation2 + $0x28] sm:$0xff] %v372
    %458 = vst [vmem:[#allocation2 + $0x30] sm:$0xff] %v376
    %459 = vst [vmem:[#allocation2 + $0x38] sm:$0xff] %v378
    %460 = vst [vmem:[#allocation2 + $0x40] sm:$0xff] %v382
    %461 = vst [vmem:[#allocation2 + $0x48] sm:$0xff] %v384
    %462 = vst [vmem:[#allocation2 + $0x50] sm:$0xff] %v388
    %463 = vst [vmem:[#allocation2 + $0x58] sm:$0xff] %v390
    %464 = vst [vmem:[#allocation2 + $0x60] sm:$0xff] %v394
    %465 = vst [vmem:[#allocation2 + $0x68] sm:$0xff] %v396
    %466 = vst [vmem:[#allocation2 + $0x70] sm:$0xff] %v400
    %467 = vst [vmem:[#allocation2 + $0x78] sm:$0xff] %v402
    %468 = vst [vmem:[#allocation2 + $0x80] sm:$0xff] %v406
    %469 = vst [vmem:[#allocation2 + $0x88] sm:$0xff] %v408
    %470 = vst [vmem:[#allocation2 + $0x90] sm:$0xff] %v412
    %471 = vst [vmem:[#allocation2 + $0x98] sm:$0xff] %v414
    %472 = vst [vmem:[#allocation2 + $0xa0] sm:$0xff] %v418
    %473 = vst [vmem:[#allocation2 + $0xa8] sm:$0xff] %v420
    %474 = vst [vmem:[#allocation2 + $0xb0] sm:$0xff] %v424
    %475 = vst [vmem:[#allocation2 + $0xb8] sm:$0xff] %v426
    %476 = vst [vmem:[#allocation2 + $0xc0] sm:$0xff] %v430
    %477 = vst [vmem:[#allocation2 + $0xc8] sm:$0xff] %v432
    %478 = vst [vmem:[#allocation2 + $0xd0] sm:$0xff] %v436
    %479 = vst [vmem:[#allocation2 + $0xd8] sm:$0xff] %v438
    %480 = vst [vmem:[#allocation2 + $0xe0] sm:$0xff] %v442
    %481 = vst [vmem:[#allocation2 + $0xe8] sm:$0xff] %v444
    %482 = vst [vmem:[#allocation2 + $0xf0] sm:$0xff] %v448
    %483 = vst [vmem:[#allocation2 + $0xf8] sm:$0xff] %v450
    %v484 = vld [vmem:[#allocation6] sm:$0xff]
    %v485 = vld [vmem:[#allocation6 + $0x8] sm:$0xff]
    %v486 = vld [vmem:[#allocation8] sm:$0xff]
    %v487 = vld [vmem:[#allocation8 + $0x8] sm:$0xff]
    %s488 = scalar_lea.vmem [#allocation6], 16
    %v489 = vld [vmem:[%s488] sm:$0xff]
    %v490 = vld [vmem:[%s488 + $0x8] sm:$0xff]
    %s491 = scalar_lea.vmem [#allocation8], 16
    %v492 = vld [vmem:[%s491] sm:$0xff]
    %v493 = vld [vmem:[%s491 + $0x8] sm:$0xff]
    %v494 = vld [vmem:[#allocation2] sm:$0xff]
    %v495 = vld [vmem:[#allocation2 + $0x8] sm:$0xff]
    %v496 = vld [vmem:[#allocation2 + $0x10] sm:$0xff]
    %v497 = vld [vmem:[#allocation2 + $0x18] sm:$0xff]
    %v498 = vld [vmem:[#allocation9] sm:$0xff]
    %v499 = vld [vmem:[#allocation9 + $0x8] sm:$0xff]
    %v500 = vld [vmem:[#allocation9 + $0x10] sm:$0xff]
    %v501 = vld [vmem:[#allocation9 + $0x18] sm:$0xff]
    %v502 = vld [vmem:[#allocation9 + $0x20] sm:$0xff]
    %v503 = vld [vmem:[#allocation9 + $0x28] sm:$0xff]
    %v504 = vld [vmem:[#allocation9 + $0x30] sm:$0xff]
    %v505 = vld [vmem:[#allocation9 + $0x38] sm:$0xff]
    %v506 = vld [vmem:[#allocation9 + $0x40] sm:$0xff]
    %v507 = vld [vmem:[#allocation9 + $0x48] sm:$0xff]
    %v508 = vld [vmem:[#allocation9 + $0x50] sm:$0xff]
    %v509 = vld [vmem:[#allocation9 + $0x58] sm:$0xff]
    %v510 = vld [vmem:[#allocation9 + $0x60] sm:$0xff]
    %v511 = vld [vmem:[#allocation9 + $0x68] sm:$0xff]
    %v512 = vld [vmem:[#allocation9 + $0x70] sm:$0xff]
    %v513 = vld [vmem:[#allocation9 + $0x78] sm:$0xff]
    %vm514 = vcmask 523264
    %v516 = vsel %vm514, %v484, 0
    %v519 = vsel %vm514, %v485, 0
    %521 = vmatprep.subr.mxu0 0.0
    %522 = vmatpush1.msra.mxu0 0.0
    %523 = vmatprep.subr.mxu0 0.0
    %524 = vmatpush1.msra.mxu0 0.0
    %525 = vmatprep.subr.mxu0 0.0
    %526 = vmatpush1.msra.mxu0 0.0
    %527 = vmatprep.subr.mxu0 0.0
    %528 = vmatpush1.msra.mxu0 0.0
    %529 = vmatprep.subr.mxu0 0.0
    %530 = vmatpush1.msra.mxu0 0.0
    %531 = vmatprep.subr.mxu0 0.0
    %532 = vmatpush1.msra.mxu0 0.0
    %533 = vmatprep.subr.mxu0 0.0
    %534 = vmatpush1.msra.mxu0 0.0
    %535 = vmatprep.subr.mxu0 0.0
    %536 = vmatpush1.msra.mxu0 0.0
    %537 = vmatprep.subr.mxu0 %v513
    %538 = vmatpush1.msra.mxu0 %v512
    %539 = vmatprep.subr.mxu0 %v511
    %540 = vmatpush1.msra.mxu0 %v510
    %541 = vmatprep.subr.mxu0 %v509
    %542 = vmatpush1.msra.mxu0 %v508
    %543 = vmatprep.subr.mxu0 %v507
    %544 = vmatpush1.msra.mxu0 %v506
    %545 = vmatprep.subr.mxu0 %v505
    %546 = vmatpush1.msra.mxu0 %v504
    %547 = vmatprep.subr.mxu0 %v503
    %548 = vmatpush1.msra.mxu0 %v502
    %549 = vmatprep.subr.mxu0 %v501
    %550 = vmatpush1.msra.mxu0 %v500
    %551 = vmatprep.subr.mxu0 %v499
    %552 = vmatpush1.msra.mxu0 %v498
    %553 = vmatprep.subr.mxu0 0.0
    %554 = vmatpush2.msra.mxu0 0.0
    %555 = vmatprep.subr.mxu0 0.0
    %556 = vmatpush2.msra.mxu0 0.0
    %557 = vmatprep.subr.mxu0 0.0
    %558 = vmatpush2.msra.mxu0 0.0
    %559 = vmatprep.subr.mxu0 0.0
    %560 = vmatpush2.msra.mxu0 0.0
    %561 = vmatprep.subr.mxu0 0.0
    %562 = vmatpush2.msra.mxu0 0.0
    %563 = vmatprep.subr.mxu0 0.0
    %564 = vmatpush2.msra.mxu0 0.0
    %565 = vmatprep.subr.mxu0 0.0
    %566 = vmatpush2.msra.mxu0 0.0
    %567 = vmatprep.subr.mxu0 0.0
    %568 = vmatpush2.msra.mxu0 0.0
    %569 = vmatprep.subr.mxu0 0.0
    %570 = vmatpush2.msra.mxu0 0.0
    %571 = vmatprep.subr.mxu0 0.0
    %572 = vmatpush2.msra.mxu0 0.0
    %573 = vmatprep.subr.mxu0 0.0
    %574 = vmatpush2.msra.mxu0 0.0
    %575 = vmatprep.subr.mxu0 0.0
    %576 = vmatpush2.msra.mxu0 0.0
    %577 = vmatprep.subr.mxu0 0.0
    %578 = vmatpush2.msra.mxu0 0.0
    %579 = vmatprep.subr.mxu0 0.0
    %580 = vmatpush2.msra.mxu0 0.0
    %581 = vmatprep.subr.mxu0 0.0
    %582 = vmatpush2.msra.mxu0 0.0
    %583 = vmatprep.subr.mxu0 0.0
    %584 = vmatpush2.msra.mxu0 0.0
    %585 = vmatprep.mubr.f32.mxu0 0.0
    %586 = vmatmul.mubr.f32.gmra.mxu0 %v516
    %v587 = vpop.f32.mrf.mxu0
    %v588 = vadd.f32 0.0, %v587
    %v589 = vpop.f32.mrf.mxu0
    %v590 = vadd.f32 0.0, %v589
    %591 = vmatprep.mubr.f32.mxu0 0.0
    %592 = vmatmul.mubr.f32.gmra.mxu0 %v519
    %v593 = vpop.f32.mrf.mxu0
    %v594 = vadd.f32 0.0, %v593
    %v595 = vpop.f32.mrf.mxu0
    %v596 = vadd.f32 0.0, %v595
    %597 = vdwg.mxu0
    %v598 = vadd.f32 %v494, %v588
    %v599 = vadd.f32 %v495, %v590
    %v600 = vadd.f32 %v496, %v594
    %v601 = vadd.f32 %v497, %v596
    %v602 = vxor.u32 %v598, 2147483648
    %v603 = vxor.u32 %v600, 2147483648
    %v604 = vmul.f32 %v602, 1.442695
    %v605 = vpow.pop %v604
    %v606 = vmul.f32 %v603, 1.442695
    %v607 = vpow.pop %v606
    %v608 = vadd.f32 %v605, 1.0
    %v609 = vadd.f32 %v607, 1.0
    %v610 = vrcp.pop %v608
    %v611 = vmul.f32 1.0, %v610
    %v612 = vrcp.pop %v609
    %v613 = vmul.f32 1.0, %v612
    %v614 = vtanh.pop %v599
    %v615 = vtanh.pop %v601
    %v616 = vxor.u32 %v599, 2147483648
    %v617 = vxor.u32 %v601, 2147483648
    %v618 = vmul.f32 %v616, 1.442695
    %v619 = vpow.pop %v618
    %v620 = vmul.f32 %v617, 1.442695
    %v621 = vpow.pop %v620
    %v622 = vadd.f32 %v619, 1.0
    %v623 = vadd.f32 %v621, 1.0
    %v624 = vrcp.pop %v622
    %v625 = vmul.f32 1.0, %v624
    %v626 = vrcp.pop %v623
    %v627 = vmul.f32 1.0, %v626
    %630 = vrot.lane.b32.xlu0 %v486, 64
    %v631 = vpop.permute.xlu0 %630
    %632 = vrot.lane.b32.xlu0 %v487, 64
    %v633 = vpop.permute.xlu0 %632
    %v636 = vmul.f32 %v611, %v631
    %v637 = vmul.f32 %v613, %v633
    %v638 = vmul.f32 %v611, %v614
    %v639 = vmul.f32 %v613, %v615
    %642 = vrot.lane.b32.xlu0 %v638, 64
    %v643 = vpop.permute.xlu0 %642
    %644 = vrot.lane.b32.xlu0 %v639, 64
    %v645 = vpop.permute.xlu0 %644
    %v648 = vadd.f32 %v636, %v643
    %v649 = vadd.f32 %v637, %v645
    %v650 = vtanh.pop %v648
    %v651 = vtanh.pop %v649
    %v652 = vmul.f32 %v625, %v650
    %v653 = vmul.f32 %v627, %v651
    %656 = vrot.lane.b32.xlu0 %v652, 64
    %v657 = vpop.permute.xlu0 %656
    %658 = vrot.lane.b32.xlu0 %v653, 64
    %v659 = vpop.permute.xlu0 %658
    %664 = vrot.lane.b32.xlu0 %v489, 64
    %v665 = vpop.permute.xlu0 %664
    %666 = vrot.lane.b32.xlu0 %v490, 64
    %v667 = vpop.permute.xlu0 %666
    %v670 = vsel %vm514, %v657, %v665
    %v671 = vsel %vm514, %v659, %v667
    %v672 = vld [vmem:[%s7] sm:$0xff]
    %v673 = vld [vmem:[%s7 + $0x8] sm:$0xff]
    %v674 = vld [vmem:[%s7 + $0x10] sm:$0xff]
    %v675 = vld [vmem:[%s7 + $0x18] sm:$0xff]
    %v676 = vld [vmem:[%s7 + $0x20] sm:$0xff]
    %v677 = vld [vmem:[%s7 + $0x28] sm:$0xff]
    %v678 = vld [vmem:[%s7 + $0x30] sm:$0xff]
    %v679 = vld [vmem:[%s7 + $0x38] sm:$0xff]
    %v680 = vld [vmem:[%s7 + $0x40] sm:$0xff]
    %v681 = vld [vmem:[%s7 + $0x48] sm:$0xff]
    %v682 = vld [vmem:[%s7 + $0x50] sm:$0xff]
    %v683 = vld [vmem:[%s7 + $0x58] sm:$0xff]
    %v684 = vld [vmem:[%s7 + $0x60] sm:$0xff]
    %v685 = vld [vmem:[%s7 + $0x68] sm:$0xff]
    %v686 = vld [vmem:[%s7 + $0x70] sm:$0xff]
    %v687 = vld [vmem:[%s7 + $0x78] sm:$0xff]
    %v688 = vld [vmem:[%s7 + $0x80] sm:$0xff]
    %v689 = vld [vmem:[%s7 + $0x88] sm:$0xff]
    %v690 = vld [vmem:[%s7 + $0x90] sm:$0xff]
    %v691 = vld [vmem:[%s7 + $0x98] sm:$0xff]
    %v692 = vld [vmem:[%s7 + $0xa0] sm:$0xff]
    %v693 = vld [vmem:[%s7 + $0xa8] sm:$0xff]
    %v694 = vld [vmem:[%s7 + $0xb0] sm:$0xff]
    %v695 = vld [vmem:[%s7 + $0xb8] sm:$0xff]
    %v696 = vld [vmem:[%s7 + $0xc0] sm:$0xff]
    %v697 = vld [vmem:[%s7 + $0xc8] sm:$0xff]
    %v698 = vld [vmem:[%s7 + $0xd0] sm:$0xff]
    %v699 = vld [vmem:[%s7 + $0xd8] sm:$0xff]
    %v700 = vld [vmem:[%s7 + $0xe0] sm:$0xff]
    %v701 = vld [vmem:[%s7 + $0xe8] sm:$0xff]
    %v702 = vld [vmem:[%s7 + $0xf0] sm:$0xff]
    %v703 = vld [vmem:[%s7 + $0xf8] sm:$0xff]
    %v704 = vld [vmem:[#allocation12] sm:$0x3]
    %v706 = vlaneseq
    %v707 = vshrl.u32 %v706, 7
    %v708 = vsub.s32 0, %v707
    %v709 = vrot.slane %v704, %v708
    %v710 = vlaneseq
    %v711 = vshrl.u32 %v710, 7
    %v712 = vsub.s32 1, %v711
    %v713 = vrot.slane %v704, %v712
    %716 = vmatprep.subr.mxu0 %v703
    %717 = vmatpush1.msra.mxu0 %v702
    %718 = vmatprep.subr.mxu0 %v701
    %719 = vmatpush1.msra.mxu0 %v700
    %720 = vmatprep.subr.mxu0 %v699
    %721 = vmatpush1.msra.mxu0 %v698
    %722 = vmatprep.subr.mxu0 %v697
    %723 = vmatpush1.msra.mxu0 %v696
    %724 = vmatprep.subr.mxu0 %v695
    %725 = vmatpush1.msra.mxu0 %v694
    %726 = vmatprep.subr.mxu0 %v693
    %727 = vmatpush1.msra.mxu0 %v692
    %728 = vmatprep.subr.mxu0 %v691
    %729 = vmatpush1.msra.mxu0 %v690
    %730 = vmatprep.subr.mxu0 %v689
    %731 = vmatpush1.msra.mxu0 %v688
    %732 = vmatprep.subr.mxu0 %v687
    %733 = vmatpush1.msra.mxu0 %v686
    %734 = vmatprep.subr.mxu0 %v685
    %735 = vmatpush1.msra.mxu0 %v684
    %736 = vmatprep.subr.mxu0 %v683
    %737 = vmatpush1.msra.mxu0 %v682
    %738 = vmatprep.subr.mxu0 %v681
    %739 = vmatpush1.msra.mxu0 %v680
    %740 = vmatprep.subr.mxu0 %v679
    %741 = vmatpush1.msra.mxu0 %v678
    %742 = vmatprep.subr.mxu0 %v677
    %743 = vmatpush1.msra.mxu0 %v676
    %744 = vmatprep.subr.mxu0 %v675
    %745 = vmatpush1.msra.mxu0 %v674
    %746 = vmatprep.subr.mxu0 %v673
    %747 = vmatpush1.msra.mxu0 %v672
    %748 = vmatprep.subr.mxu0 0.0
    %749 = vmatpush2.msra.mxu0 0.0
    %750 = vmatprep.subr.mxu0 0.0
    %751 = vmatpush2.msra.mxu0 0.0
    %752 = vmatprep.subr.mxu0 0.0
    %753 = vmatpush2.msra.mxu0 0.0
    %754 = vmatprep.subr.mxu0 0.0
    %755 = vmatpush2.msra.mxu0 0.0
    %756 = vmatprep.subr.mxu0 0.0
    %757 = vmatpush2.msra.mxu0 0.0
    %758 = vmatprep.subr.mxu0 0.0
    %759 = vmatpush2.msra.mxu0 0.0
    %760 = vmatprep.subr.mxu0 0.0
    %761 = vmatpush2.msra.mxu0 0.0
    %762 = vmatprep.subr.mxu0 0.0
    %763 = vmatpush2.msra.mxu0 0.0
    %764 = vmatprep.subr.mxu0 0.0
    %765 = vmatpush2.msra.mxu0 0.0
    %766 = vmatprep.subr.mxu0 0.0
    %767 = vmatpush2.msra.mxu0 0.0
    %768 = vmatprep.subr.mxu0 0.0
    %769 = vmatpush2.msra.mxu0 0.0
    %770 = vmatprep.subr.mxu0 0.0
    %771 = vmatpush2.msra.mxu0 0.0
    %772 = vmatprep.subr.mxu0 0.0
    %773 = vmatpush2.msra.mxu0 0.0
    %774 = vmatprep.subr.mxu0 0.0
    %775 = vmatpush2.msra.mxu0 0.0
    %776 = vmatprep.subr.mxu0 0.0
    %777 = vmatpush2.msra.mxu0 0.0
    %778 = vmatprep.subr.mxu0 0.0
    %779 = vmatpush2.msra.mxu0 0.0
    %780 = vmatprep.mubr.f32.mxu0 0.0
    %781 = vmatmul.mubr.f32.gmra.mxu0 %v670
    %v782 = vpop.f32.mrf.mxu0
    %v783 = vadd.f32 %v709, %v782
    %v784 = vpop.f32.mrf.mxu0
    %v785 = vadd.f32 %v713, %v784
    %786 = vmatprep.mubr.f32.mxu0 0.0
    %787 = vmatmul.mubr.f32.gmra.mxu0 %v671
    %v788 = vpop.f32.mrf.mxu0
    %v789 = vadd.f32 %v709, %v788
    %v790 = vpop.f32.mrf.mxu0
    %v791 = vadd.f32 %v713, %v790
    %792 = vdwg.mxu0
    %v793 = vxor.u32 %v783, 2147483648
    %v794 = vxor.u32 %v789, 2147483648
    %v795 = vmul.f32 %v793, 1.442695
    %v796 = vpow.pop %v795
    %v797 = vmul.f32 %v794, 1.442695
    %v798 = vpow.pop %v797
    %v799 = vadd.f32 %v796, 1.0
    %v800 = vadd.f32 %v798, 1.0
    %v801 = vrcp.pop %v799
    %v802 = vmul.f32 1.0, %v801
    %v803 = vrcp.pop %v800
    %v804 = vmul.f32 1.0, %v803
    %v805 = vtanh.pop %v785
    %v806 = vtanh.pop %v791
    %v807 = vxor.u32 %v785, 2147483648
    %v808 = vxor.u32 %v791, 2147483648
    %v809 = vmul.f32 %v807, 1.442695
    %v810 = vpow.pop %v809
    %v811 = vmul.f32 %v808, 1.442695
    %v812 = vpow.pop %v811
    %v813 = vadd.f32 %v810, 1.0
    %v814 = vadd.f32 %v812, 1.0
    %v815 = vrcp.pop %v813
    %v816 = vmul.f32 1.0, %v815
    %v817 = vrcp.pop %v814
    %v818 = vmul.f32 1.0, %v817
    %821 = vrot.lane.b32.xlu0 %v492, 64
    %v822 = vpop.permute.xlu0 %821
    %823 = vrot.lane.b32.xlu0 %v493, 64
    %v824 = vpop.permute.xlu0 %823
    %v827 = vmul.f32 %v802, %v822
    %v828 = vmul.f32 %v804, %v824
    %v829 = vmul.f32 %v802, %v805
    %v830 = vmul.f32 %v804, %v806
    %833 = vrot.lane.b32.xlu0 %v829, 64
    %v834 = vpop.permute.xlu0 %833
    %835 = vrot.lane.b32.xlu0 %v830, 64
    %v836 = vpop.permute.xlu0 %835
    %v839 = vadd.f32 %v827, %v834
    %v840 = vadd.f32 %v828, %v836
    %v841 = vtanh.pop %v839
    %v842 = vtanh.pop %v840
    %v843 = vmul.f32 %v816, %v841
    %v844 = vmul.f32 %v818, %v842
    %v845 = vld [vmem:[#allocation2 + $0x20] sm:$0xff]
    %v846 = vld [vmem:[#allocation2 + $0x28] sm:$0xff]
    %v847 = vld [vmem:[#allocation2 + $0x30] sm:$0xff]
    %v848 = vld [vmem:[#allocation2 + $0x38] sm:$0xff]
    %v849 = vsel %vm514, %v657, 0
    %v851 = vsel %vm514, %v659, 0
    %853 = vmatprep.subr.mxu0 0.0
    %854 = vmatpush1.msra.mxu0 0.0
    %855 = vmatprep.subr.mxu0 0.0
    %856 = vmatpush1.msra.mxu0 0.0
    %857 = vmatprep.subr.mxu0 0.0
    %858 = vmatpush1.msra.mxu0 0.0
    %859 = vmatprep.subr.mxu0 0.0
    %860 = vmatpush1.msra.mxu0 0.0
    %861 = vmatprep.subr.mxu0 0.0
    %862 = vmatpush1.msra.mxu0 0.0
    %863 = vmatprep.subr.mxu0 0.0
    %864 = vmatpush1.msra.mxu0 0.0
    %865 = vmatprep.subr.mxu0 0.0
    %866 = vmatpush1.msra.mxu0 0.0
    %867 = vmatprep.subr.mxu0 0.0
    %868 = vmatpush1.msra.mxu0 0.0
    %869 = vmatprep.subr.mxu0 %v513
    %870 = vmatpush1.msra.mxu0 %v512
    %871 = vmatprep.subr.mxu0 %v511
    %872 = vmatpush1.msra.mxu0 %v510
    %873 = vmatprep.subr.mxu0 %v509
    %874 = vmatpush1.msra.mxu0 %v508
    %875 = vmatprep.subr.mxu0 %v507
    %876 = vmatpush1.msra.mxu0 %v506
    %877 = vmatprep.subr.mxu0 %v505
    %878 = vmatpush1.msra.mxu0 %v504
    %879 = vmatprep.subr.mxu0 %v503
    %880 = vmatpush1.msra.mxu0 %v502
    %881 = vmatprep.subr.mxu0 %v501
    %882 = vmatpush1.msra.mxu0 %v500
    %883 = vmatprep.subr.mxu0 %v499
    %884 = vmatpush1.msra.mxu0 %v498
    %885 = vmatprep.subr.mxu0 0.0
    %886 = vmatpush2.msra.mxu0 0.0
    %887 = vmatprep.subr.mxu0 0.0
    %888 = vmatpush2.msra.mxu0 0.0
    %889 = vmatprep.subr.mxu0 0.0
    %890 = vmatpush2.msra.mxu0 0.0
    %891 = vmatprep.subr.mxu0 0.0
    %892 = vmatpush2.msra.mxu0 0.0
    %893 = vmatprep.subr.mxu0 0.0
    %894 = vmatpush2.msra.mxu0 0.0
    %895 = vmatprep.subr.mxu0 0.0
    %896 = vmatpush2.msra.mxu0 0.0
    %897 = vmatprep.subr.mxu0 0.0
    %898 = vmatpush2.msra.mxu0 0.0
    %899 = vmatprep.subr.mxu0 0.0
    %900 = vmatpush2.msra.mxu0 0.0
    %901 = vmatprep.subr.mxu0 0.0
    %902 = vmatpush2.msra.mxu0 0.0
    %903 = vmatprep.subr.mxu0 0.0
    %904 = vmatpush2.msra.mxu0 0.0
    %905 = vmatprep.subr.mxu0 0.0
    %906 = vmatpush2.msra.mxu0 0.0
    %907 = vmatprep.subr.mxu0 0.0
    %908 = vmatpush2.msra.mxu0 0.0
    %909 = vmatprep.subr.mxu0 0.0
    %910 = vmatpush2.msra.mxu0 0.0
    %911 = vmatprep.subr.mxu0 0.0
    %912 = vmatpush2.msra.mxu0 0.0
    %913 = vmatprep.subr.mxu0 0.0
    %914 = vmatpush2.msra.mxu0 0.0
    %915 = vmatprep.subr.mxu0 0.0
    %916 = vmatpush2.msra.mxu0 0.0
    %917 = vmatprep.mubr.f32.mxu0 0.0
    %918 = vmatmul.mubr.f32.gmra.mxu0 %v849
    %v919 = vpop.f32.mrf.mxu0
    %v920 = vadd.f32 0.0, %v919
    %v921 = vpop.f32.mrf.mxu0
    %v922 = vadd.f32 0.0, %v921
    %923 = vmatprep.mubr.f32.mxu0 0.0
    %924 = vmatmul.mubr.f32.gmra.mxu0 %v851
    %v925 = vpop.f32.mrf.mxu0
    %v926 = vadd.f32 0.0, %v925
    %v927 = vpop.f32.mrf.mxu0
    %v928 = vadd.f32 0.0, %v927
    %929 = vdwg.mxu0
    %v930 = vadd.f32 %v845, %v920
    %v931 = vadd.f32 %v846, %v922
    %v932 = vadd.f32 %v847, %v926
    %v933 = vadd.f32 %v848, %v928
    %v934 = vxor.u32 %v930, 2147483648
    %v935 = vxor.u32 %v932, 2147483648
    %v936 = vmul.f32 %v934, 1.442695
    %v937 = vpow.pop %v936
    %v938 = vmul.f32 %v935, 1.442695
    %v939 = vpow.pop %v938
    %v940 = vadd.f32 %v937, 1.0
    %v941 = vadd.f32 %v939, 1.0
    %v942 = vrcp.pop %v940
    %v943 = vmul.f32 1.0, %v942
    %v944 = vrcp.pop %v941
    %v945 = vmul.f32 1.0, %v944
    %v946 = vtanh.pop %v931
    %v947 = vtanh.pop %v933
    %v948 = vxor.u32 %v931, 2147483648
    %v949 = vxor.u32 %v933, 2147483648
    %v950 = vmul.f32 %v948, 1.442695
    %v951 = vpow.pop %v950
    %v952 = vmul.f32 %v949, 1.442695
    %v953 = vpow.pop %v952
    %v954 = vadd.f32 %v951, 1.0
    %v955 = vadd.f32 %v953, 1.0
    %v956 = vrcp.pop %v954
    %v957 = vmul.f32 1.0, %v956
    %v958 = vrcp.pop %v955
    %v959 = vmul.f32 1.0, %v958
    %v960 = vmul.f32 %v943, %v648
    %v961 = vmul.f32 %v945, %v649
    %v962 = vmul.f32 %v943, %v946
    %v963 = vmul.f32 %v945, %v947
    %966 = vrot.lane.b32.xlu0 %v962, 64
    %v967 = vpop.permute.xlu0 %966
    %968 = vrot.lane.b32.xlu0 %v963, 64
    %v969 = vpop.permute.xlu0 %968
    %v972 = vadd.f32 %v960, %v967
    %v973 = vadd.f32 %v961, %v969
    %v974 = vtanh.pop %v972
    %v975 = vtanh.pop %v973
    %v976 = vmul.f32 %v957, %v974
    %v977 = vmul.f32 %v959, %v975
    %980 = vrot.lane.b32.xlu0 %v976, 64
    %v981 = vpop.permute.xlu0 %980
    %982 = vrot.lane.b32.xlu0 %v977, 64
    %v983 = vpop.permute.xlu0 %982
    %v986 = vsel %vm514, %v981, %v843
    %v987 = vsel %vm514, %v983, %v844
    %988 = vmatprep.subr.mxu0 %v703
    %989 = vmatpush1.msra.mxu0 %v702
    %990 = vmatprep.subr.mxu0 %v701
    %991 = vmatpush1.msra.mxu0 %v700
    %992 = vmatprep.subr.mxu0 %v699
    %993 = vmatpush1.msra.mxu0 %v698
    %994 = vmatprep.subr.mxu0 %v697
    %995 = vmatpush1.msra.mxu0 %v696
    %996 = vmatprep.subr.mxu0 %v695
    %997 = vmatpush1.msra.mxu0 %v694
    %998 = vmatprep.subr.mxu0 %v693
    %999 = vmatpush1.msra.mxu0 %v692
    %1000 = vmatprep.subr.mxu0 %v691
    %1001 = vmatpush1.msra.mxu0 %v690
    %1002 = vmatprep.subr.mxu0 %v689
    %1003 = vmatpush1.msra.mxu0 %v688
    %1004 = vmatprep.subr.mxu0 %v687
    %1005 = vmatpush1.msra.mxu0 %v686
    %1006 = vmatprep.subr.mxu0 %v685
    %1007 = vmatpush1.msra.mxu0 %v684
    %1008 = vmatprep.subr.mxu0 %v683
    %1009 = vmatpush1.msra.mxu0 %v682
    %1010 = vmatprep.subr.mxu0 %v681
    %1011 = vmatpush1.msra.mxu0 %v680
    %1012 = vmatprep.subr.mxu0 %v679
    %1013 = vmatpush1.msra.mxu0 %v678
    %1014 = vmatprep.subr.mxu0 %v677
    %1015 = vmatpush1.msra.mxu0 %v676
    %1016 = vmatprep.subr.mxu0 %v675
    %1017 = vmatpush1.msra.mxu0 %v674
    %1018 = vmatprep.subr.mxu0 %v673
    %1019 = vmatpush1.msra.mxu0 %v672
    %1020 = vmatprep.subr.mxu0 0.0
    %1021 = vmatpush2.msra.mxu0 0.0
    %1022 = vmatprep.subr.mxu0 0.0
    %1023 = vmatpush2.msra.mxu0 0.0
    %1024 = vmatprep.subr.mxu0 0.0
    %1025 = vmatpush2.msra.mxu0 0.0
    %1026 = vmatprep.subr.mxu0 0.0
    %1027 = vmatpush2.msra.mxu0 0.0
    %1028 = vmatprep.subr.mxu0 0.0
    %1029 = vmatpush2.msra.mxu0 0.0
    %1030 = vmatprep.subr.mxu0 0.0
    %1031 = vmatpush2.msra.mxu0 0.0
    %1032 = vmatprep.subr.mxu0 0.0
    %1033 = vmatpush2.msra.mxu0 0.0
    %1034 = vmatprep.subr.mxu0 0.0
    %1035 = vmatpush2.msra.mxu0 0.0
    %1036 = vmatprep.subr.mxu0 0.0
    %1037 = vmatpush2.msra.mxu0 0.0
    %1038 = vmatprep.subr.mxu0 0.0
    %1039 = vmatpush2.msra.mxu0 0.0
    %1040 = vmatprep.subr.mxu0 0.0
    %1041 = vmatpush2.msra.mxu0 0.0
    %1042 = vmatprep.subr.mxu0 0.0
    %1043 = vmatpush2.msra.mxu0 0.0
    %1044 = vmatprep.subr.mxu0 0.0
    %1045 = vmatpush2.msra.mxu0 0.0
    %1046 = vmatprep.subr.mxu0 0.0
    %1047 = vmatpush2.msra.mxu0 0.0
    %1048 = vmatprep.subr.mxu0 0.0
    %1049 = vmatpush2.msra.mxu0 0.0
    %1050 = vmatprep.subr.mxu0 0.0
    %1051 = vmatpush2.msra.mxu0 0.0
    %1052 = vmatprep.mubr.f32.mxu0 0.0
    %1053 = vmatmul.mubr.f32.gmra.mxu0 %v986
    %v1054 = vpop.f32.mrf.mxu0
    %v1055 = vadd.f32 %v709, %v1054
    %v1056 = vpop.f32.mrf.mxu0
    %v1057 = vadd.f32 %v713, %v1056
    %1058 = vmatprep.mubr.f32.mxu0 0.0
    %1059 = vmatmul.mubr.f32.gmra.mxu0 %v987
    %v1060 = vpop.f32.mrf.mxu0
    %v1061 = vadd.f32 %v709, %v1060
    %v1062 = vpop.f32.mrf.mxu0
    %v1063 = vadd.f32 %v713, %v1062
    %1064 = vdwg.mxu0
    %v1065 = vxor.u32 %v1055, 2147483648
    %v1066 = vxor.u32 %v1061, 2147483648
    %v1067 = vmul.f32 %v1065, 1.442695
    %v1068 = vpow.pop %v1067
    %v1069 = vmul.f32 %v1066, 1.442695
    %v1070 = vpow.pop %v1069
    %v1071 = vadd.f32 %v1068, 1.0
    %v1072 = vadd.f32 %v1070, 1.0
    %v1073 = vrcp.pop %v1071
    %v1074 = vmul.f32 1.0, %v1073
    %v1075 = vrcp.pop %v1072
    %v1076 = vmul.f32 1.0, %v1075
    %v1077 = vtanh.pop %v1057
    %v1078 = vtanh.pop %v1063
    %v1079 = vxor.u32 %v1057, 2147483648
    %v1080 = vxor.u32 %v1063, 2147483648
    %v1081 = vmul.f32 %v1079, 1.442695
    %v1082 = vpow.pop %v1081
    %v1083 = vmul.f32 %v1080, 1.442695
    %v1084 = vpow.pop %v1083
    %v1085 = vadd.f32 %v1082, 1.0
    %v1086 = vadd.f32 %v1084, 1.0
    %v1087 = vrcp.pop %v1085
    %v1088 = vmul.f32 1.0, %v1087
    %v1089 = vrcp.pop %v1086
    %v1090 = vmul.f32 1.0, %v1089
    %v1091 = vmul.f32 %v1074, %v839
    %v1092 = vmul.f32 %v1076, %v840
    %v1093 = vmul.f32 %v1074, %v1077
    %v1094 = vmul.f32 %v1076, %v1078
    %1097 = vrot.lane.b32.xlu0 %v1093, 64
    %v1098 = vpop.permute.xlu0 %1097
    %1099 = vrot.lane.b32.xlu0 %v1094, 64
    %v1100 = vpop.permute.xlu0 %1099
    %v1103 = vadd.f32 %v1091, %v1098
    %v1104 = vadd.f32 %v1092, %v1100
    %v1105 = vtanh.pop %v1103
    %v1106 = vtanh.pop %v1104
    %v1107 = vmul.f32 %v1088, %v1105
    %v1108 = vmul.f32 %v1090, %v1106
    %v1109 = vld [vmem:[#allocation2 + $0x40] sm:$0xff]
    %v1110 = vld [vmem:[#allocation2 + $0x48] sm:$0xff]
    %v1111 = vld [vmem:[#allocation2 + $0x50] sm:$0xff]
    %v1112 = vld [vmem:[#allocation2 + $0x58] sm:$0xff]
    %v1113 = vsel %vm514, %v981, 0
    %v1115 = vsel %vm514, %v983, 0
    %1117 = vmatprep.subr.mxu0 0.0
    %1118 = vmatpush1.msra.mxu0 0.0
    %1119 = vmatprep.subr.mxu0 0.0
    %1120 = vmatpush1.msra.mxu0 0.0
    %1121 = vmatprep.subr.mxu0 0.0
    %1122 = vmatpush1.msra.mxu0 0.0
    %1123 = vmatprep.subr.mxu0 0.0
    %1124 = vmatpush1.msra.mxu0 0.0
    %1125 = vmatprep.subr.mxu0 0.0
    %1126 = vmatpush1.msra.mxu0 0.0
    %1127 = vmatprep.subr.mxu0 0.0
    %1128 = vmatpush1.msra.mxu0 0.0
    %1129 = vmatprep.subr.mxu0 0.0
    %1130 = vmatpush1.msra.mxu0 0.0
    %1131 = vmatprep.subr.mxu0 0.0
    %1132 = vmatpush1.msra.mxu0 0.0
    %1133 = vmatprep.subr.mxu0 %v513
    %1134 = vmatpush1.msra.mxu0 %v512
    %1135 = vmatprep.subr.mxu0 %v511
    %1136 = vmatpush1.msra.mxu0 %v510
    %1137 = vmatprep.subr.mxu0 %v509
    %1138 = vmatpush1.msra.mxu0 %v508
    %1139 = vmatprep.subr.mxu0 %v507
    %1140 = vmatpush1.msra.mxu0 %v506
    %1141 = vmatprep.subr.mxu0 %v505
    %1142 = vmatpush1.msra.mxu0 %v504
    %1143 = vmatprep.subr.mxu0 %v503
    %1144 = vmatpush1.msra.mxu0 %v502
    %1145 = vmatprep.subr.mxu0 %v501
    %1146 = vmatpush1.msra.mxu0 %v500
    %1147 = vmatprep.subr.mxu0 %v499
    %1148 = vmatpush1.msra.mxu0 %v498
    %1149 = vmatprep.subr.mxu0 0.0
    %1150 = vmatpush2.msra.mxu0 0.0
    %1151 = vmatprep.subr.mxu0 0.0
    %1152 = vmatpush2.msra.mxu0 0.0
    %1153 = vmatprep.subr.mxu0 0.0
    %1154 = vmatpush2.msra.mxu0 0.0
    %1155 = vmatprep.subr.mxu0 0.0
    %1156 = vmatpush2.msra.mxu0 0.0
    %1157 = vmatprep.subr.mxu0 0.0
    %1158 = vmatpush2.msra.mxu0 0.0
    %1159 = vmatprep.subr.mxu0 0.0
    %1160 = vmatpush2.msra.mxu0 0.0
    %1161 = vmatprep.subr.mxu0 0.0
    %1162 = vmatpush2.msra.mxu0 0.0
    %1163 = vmatprep.subr.mxu0 0.0
    %1164 = vmatpush2.msra.mxu0 0.0
    %1165 = vmatprep.subr.mxu0 0.0
    %1166 = vmatpush2.msra.mxu0 0.0
    %1167 = vmatprep.subr.mxu0 0.0
    %1168 = vmatpush2.msra.mxu0 0.0
    %1169 = vmatprep.subr.mxu0 0.0
    %1170 = vmatpush2.msra.mxu0 0.0
    %1171 = vmatprep.subr.mxu0 0.0
    %1172 = vmatpush2.msra.mxu0 0.0
    %1173 = vmatprep.subr.mxu0 0.0
    %1174 = vmatpush2.msra.mxu0 0.0
    %1175 = vmatprep.subr.mxu0 0.0
    %1176 = vmatpush2.msra.mxu0 0.0
    %1177 = vmatprep.subr.mxu0 0.0
    %1178 = vmatpush2.msra.mxu0 0.0
    %1179 = vmatprep.subr.mxu0 0.0
    %1180 = vmatpush2.msra.mxu0 0.0
    %1181 = vmatprep.mubr.f32.mxu0 0.0
    %1182 = vmatmul.mubr.f32.gmra.mxu0 %v1113
    %v1183 = vpop.f32.mrf.mxu0
    %v1184 = vadd.f32 0.0, %v1183
    %v1185 = vpop.f32.mrf.mxu0
    %v1186 = vadd.f32 0.0, %v1185
    %1187 = vmatprep.mubr.f32.mxu0 0.0
    %1188 = vmatmul.mubr.f32.gmra.mxu0 %v1115
    %v1189 = vpop.f32.mrf.mxu0
    %v1190 = vadd.f32 0.0, %v1189
    %v1191 = vpop.f32.mrf.mxu0
    %v1192 = vadd.f32 0.0, %v1191
    %1193 = vdwg.mxu0
    %v1194 = vadd.f32 %v1109, %v1184
    %v1195 = vadd.f32 %v1110, %v1186
    %v1196 = vadd.f32 %v1111, %v1190
    %v1197 = vadd.f32 %v1112, %v1192
    %v1198 = vxor.u32 %v1194, 2147483648
    %v1199 = vxor.u32 %v1196, 2147483648
    %v1200 = vmul.f32 %v1198, 1.442695
    %v1201 = vpow.pop %v1200
    %v1202 = vmul.f32 %v1199, 1.442695
    %v1203 = vpow.pop %v1202
    %v1204 = vadd.f32 %v1201, 1.0
    %v1205 = vadd.f32 %v1203, 1.0
    %v1206 = vrcp.pop %v1204
    %v1207 = vmul.f32 1.0, %v1206
    %v1208 = vrcp.pop %v1205
    %v1209 = vmul.f32 1.0, %v1208
    %v1210 = vtanh.pop %v1195
    %v1211 = vtanh.pop %v1197
    %v1212 = vxor.u32 %v1195, 2147483648
    %v1213 = vxor.u32 %v1197, 2147483648
    %v1214 = vmul.f32 %v1212, 1.442695
    %v1215 = vpow.pop %v1214
    %v1216 = vmul.f32 %v1213, 1.442695
    %v1217 = vpow.pop %v1216
    %v1218 = vadd.f32 %v1215, 1.0
    %v1219 = vadd.f32 %v1217, 1.0
    %v1220 = vrcp.pop %v1218
    %v1221 = vmul.f32 1.0, %v1220
    %v1222 = vrcp.pop %v1219
    %v1223 = vmul.f32 1.0, %v1222
    %v1224 = vmul.f32 %v1207, %v972
    %v1225 = vmul.f32 %v1209, %v973
    %v1226 = vmul.f32 %v1207, %v1210
    %v1227 = vmul.f32 %v1209, %v1211
    %1230 = vrot.lane.b32.xlu0 %v1226, 64
    %v1231 = vpop.permute.xlu0 %1230
    %1232 = vrot.lane.b32.xlu0 %v1227, 64
    %v1233 = vpop.permute.xlu0 %1232
    %v1236 = vadd.f32 %v1224, %v1231
    %v1237 = vadd.f32 %v1225, %v1233
    %v1238 = vtanh.pop %v1236
    %v1239 = vtanh.pop %v1237
    %v1240 = vmul.f32 %v1221, %v1238
    %v1241 = vmul.f32 %v1223, %v1239
    %1244 = vrot.lane.b32.xlu0 %v1240, 64
    %v1245 = vpop.permute.xlu0 %1244
    %1246 = vrot.lane.b32.xlu0 %v1241, 64
    %v1247 = vpop.permute.xlu0 %1246
    %v1250 = vsel %vm514, %v1245, %v1107
    %v1251 = vsel %vm514, %v1247, %v1108
    %1252 = vmatprep.subr.mxu0 %v703
    %1253 = vmatpush1.msra.mxu0 %v702
    %1254 = vmatprep.subr.mxu0 %v701
    %1255 = vmatpush1.msra.mxu0 %v700
    %1256 = vmatprep.subr.mxu0 %v699
    %1257 = vmatpush1.msra.mxu0 %v698
    %1258 = vmatprep.subr.mxu0 %v697
    %1259 = vmatpush1.msra.mxu0 %v696
    %1260 = vmatprep.subr.mxu0 %v695
    %1261 = vmatpush1.msra.mxu0 %v694
    %1262 = vmatprep.subr.mxu0 %v693
    %1263 = vmatpush1.msra.mxu0 %v692
    %1264 = vmatprep.subr.mxu0 %v691
    %1265 = vmatpush1.msra.mxu0 %v690
    %1266 = vmatprep.subr.mxu0 %v689
    %1267 = vmatpush1.msra.mxu0 %v688
    %1268 = vmatprep.subr.mxu0 %v687
    %1269 = vmatpush1.msra.mxu0 %v686
    %1270 = vmatprep.subr.mxu0 %v685
    %1271 = vmatpush1.msra.mxu0 %v684
    %1272 = vmatprep.subr.mxu0 %v683
    %1273 = vmatpush1.msra.mxu0 %v682
    %1274 = vmatprep.subr.mxu0 %v681
    %1275 = vmatpush1.msra.mxu0 %v680
    %1276 = vmatprep.subr.mxu0 %v679
    %1277 = vmatpush1.msra.mxu0 %v678
    %1278 = vmatprep.subr.mxu0 %v677
    %1279 = vmatpush1.msra.mxu0 %v676
    %1280 = vmatprep.subr.mxu0 %v675
    %1281 = vmatpush1.msra.mxu0 %v674
    %1282 = vmatprep.subr.mxu0 %v673
    %1283 = vmatpush1.msra.mxu0 %v672
    %1284 = vmatprep.subr.mxu0 0.0
    %1285 = vmatpush2.msra.mxu0 0.0
    %1286 = vmatprep.subr.mxu0 0.0
    %1287 = vmatpush2.msra.mxu0 0.0
    %1288 = vmatprep.subr.mxu0 0.0
    %1289 = vmatpush2.msra.mxu0 0.0
    %1290 = vmatprep.subr.mxu0 0.0
    %1291 = vmatpush2.msra.mxu0 0.0
    %1292 = vmatprep.subr.mxu0 0.0
    %1293 = vmatpush2.msra.mxu0 0.0
    %1294 = vmatprep.subr.mxu0 0.0
    %1295 = vmatpush2.msra.mxu0 0.0
    %1296 = vmatprep.subr.mxu0 0.0
    %1297 = vmatpush2.msra.mxu0 0.0
    %1298 = vmatprep.subr.mxu0 0.0
    %1299 = vmatpush2.msra.mxu0 0.0
    %1300 = vmatprep.subr.mxu0 0.0
    %1301 = vmatpush2.msra.mxu0 0.0
    %1302 = vmatprep.subr.mxu0 0.0
    %1303 = vmatpush2.msra.mxu0 0.0
    %1304 = vmatprep.subr.mxu0 0.0
    %1305 = vmatpush2.msra.mxu0 0.0
    %1306 = vmatprep.subr.mxu0 0.0
    %1307 = vmatpush2.msra.mxu0 0.0
    %1308 = vmatprep.subr.mxu0 0.0
    %1309 = vmatpush2.msra.mxu0 0.0
    %1310 = vmatprep.subr.mxu0 0.0
    %1311 = vmatpush2.msra.mxu0 0.0
    %1312 = vmatprep.subr.mxu0 0.0
    %1313 = vmatpush2.msra.mxu0 0.0
    %1314 = vmatprep.subr.mxu0 0.0
    %1315 = vmatpush2.msra.mxu0 0.0
    %1316 = vmatprep.mubr.f32.mxu0 0.0
    %1317 = vmatmul.mubr.f32.gmra.mxu0 %v1250
    %v1318 = vpop.f32.mrf.mxu0
    %v1319 = vadd.f32 %v709, %v1318
    %v1320 = vpop.f32.mrf.mxu0
    %v1321 = vadd.f32 %v713, %v1320
    %1322 = vmatprep.mubr.f32.mxu0 0.0
    %1323 = vmatmul.mubr.f32.gmra.mxu0 %v1251
    %v1324 = vpop.f32.mrf.mxu0
    %v1325 = vadd.f32 %v709, %v1324
    %v1326 = vpop.f32.mrf.mxu0
    %v1327 = vadd.f32 %v713, %v1326
    %1328 = vdwg.mxu0
    %v1329 = vxor.u32 %v1319, 2147483648
    %v1330 = vxor.u32 %v1325, 2147483648
    %v1331 = vmul.f32 %v1329, 1.442695
    %v1332 = vpow.pop %v1331
    %v1333 = vmul.f32 %v1330, 1.442695
    %v1334 = vpow.pop %v1333
    %v1335 = vadd.f32 %v1332, 1.0
    %v1336 = vadd.f32 %v1334, 1.0
    %v1337 = vrcp.pop %v1335
    %v1338 = vmul.f32 1.0, %v1337
    %v1339 = vrcp.pop %v1336
    %v1340 = vmul.f32 1.0, %v1339
    %v1341 = vtanh.pop %v1321
    %v1342 = vtanh.pop %v1327
    %v1343 = vxor.u32 %v1321, 2147483648
    %v1344 = vxor.u32 %v1327, 2147483648
    %v1345 = vmul.f32 %v1343, 1.442695
    %v1346 = vpow.pop %v1345
    %v1347 = vmul.f32 %v1344, 1.442695
    %v1348 = vpow.pop %v1347
    %v1349 = vadd.f32 %v1346, 1.0
    %v1350 = vadd.f32 %v1348, 1.0
    %v1351 = vrcp.pop %v1349
    %v1352 = vmul.f32 1.0, %v1351
    %v1353 = vrcp.pop %v1350
    %v1354 = vmul.f32 1.0, %v1353
    %v1355 = vmul.f32 %v1338, %v1103
    %v1356 = vmul.f32 %v1340, %v1104
    %v1357 = vmul.f32 %v1338, %v1341
    %v1358 = vmul.f32 %v1340, %v1342
    %1361 = vrot.lane.b32.xlu0 %v1357, 64
    %v1362 = vpop.permute.xlu0 %1361
    %1363 = vrot.lane.b32.xlu0 %v1358, 64
    %v1364 = vpop.permute.xlu0 %1363
    %v1367 = vadd.f32 %v1355, %v1362
    %v1368 = vadd.f32 %v1356, %v1364
    %v1369 = vtanh.pop %v1367
    %v1370 = vtanh.pop %v1368
    %v1371 = vmul.f32 %v1352, %v1369
    %v1372 = vmul.f32 %v1354, %v1370
    %v1373 = vld [vmem:[#allocation2 + $0x60] sm:$0xff]
    %v1374 = vld [vmem:[#allocation2 + $0x68] sm:$0xff]
    %v1375 = vld [vmem:[#allocation2 + $0x70] sm:$0xff]
    %v1376 = vld [vmem:[#allocation2 + $0x78] sm:$0xff]
    %v1377 = vsel %vm514, %v1245, 0
    %v1379 = vsel %vm514, %v1247, 0
    %1381 = vmatprep.subr.mxu0 0.0
    %1382 = vmatpush1.msra.mxu0 0.0
    %1383 = vmatprep.subr.mxu0 0.0
    %1384 = vmatpush1.msra.mxu0 0.0
    %1385 = vmatprep.subr.mxu0 0.0
    %1386 = vmatpush1.msra.mxu0 0.0
    %1387 = vmatprep.subr.mxu0 0.0
    %1388 = vmatpush1.msra.mxu0 0.0
    %1389 = vmatprep.subr.mxu0 0.0
    %1390 = vmatpush1.msra.mxu0 0.0
    %1391 = vmatprep.subr.mxu0 0.0
    %1392 = vmatpush1.msra.mxu0 0.0
    %1393 = vmatprep.subr.mxu0 0.0
    %1394 = vmatpush1.msra.mxu0 0.0
    %1395 = vmatprep.subr.mxu0 0.0
    %1396 = vmatpush1.msra.mxu0 0.0
    %1397 = vmatprep.subr.mxu0 %v513
    %1398 = vmatpush1.msra.mxu0 %v512
    %1399 = vmatprep.subr.mxu0 %v511
    %1400 = vmatpush1.msra.mxu0 %v510
    %1401 = vmatprep.subr.mxu0 %v509
    %1402 = vmatpush1.msra.mxu0 %v508
    %1403 = vmatprep.subr.mxu0 %v507
    %1404 = vmatpush1.msra.mxu0 %v506
    %1405 = vmatprep.subr.mxu0 %v505
    %1406 = vmatpush1.msra.mxu0 %v504
    %1407 = vmatprep.subr.mxu0 %v503
    %1408 = vmatpush1.msra.mxu0 %v502
    %1409 = vmatprep.subr.mxu0 %v501
    %1410 = vmatpush1.msra.mxu0 %v500
    %1411 = vmatprep.subr.mxu0 %v499
    %1412 = vmatpush1.msra.mxu0 %v498
    %1413 = vmatprep.subr.mxu0 0.0
    %1414 = vmatpush2.msra.mxu0 0.0
    %1415 = vmatprep.subr.mxu0 0.0
    %1416 = vmatpush2.msra.mxu0 0.0
    %1417 = vmatprep.subr.mxu0 0.0
    %1418 = vmatpush2.msra.mxu0 0.0
    %1419 = vmatprep.subr.mxu0 0.0
    %1420 = vmatpush2.msra.mxu0 0.0
    %1421 = vmatprep.subr.mxu0 0.0
    %1422 = vmatpush2.msra.mxu0 0.0
    %1423 = vmatprep.subr.mxu0 0.0
    %1424 = vmatpush2.msra.mxu0 0.0
    %1425 = vmatprep.subr.mxu0 0.0
    %1426 = vmatpush2.msra.mxu0 0.0
    %1427 = vmatprep.subr.mxu0 0.0
    %1428 = vmatpush2.msra.mxu0 0.0
    %1429 = vmatprep.subr.mxu0 0.0
    %1430 = vmatpush2.msra.mxu0 0.0
    %1431 = vmatprep.subr.mxu0 0.0
    %1432 = vmatpush2.msra.mxu0 0.0
    %1433 = vmatprep.subr.mxu0 0.0
    %1434 = vmatpush2.msra.mxu0 0.0
    %1435 = vmatprep.subr.mxu0 0.0
    %1436 = vmatpush2.msra.mxu0 0.0
    %1437 = vmatprep.subr.mxu0 0.0
    %1438 = vmatpush2.msra.mxu0 0.0
    %1439 = vmatprep.subr.mxu0 0.0
    %1440 = vmatpush2.msra.mxu0 0.0
    %1441 = vmatprep.subr.mxu0 0.0
    %1442 = vmatpush2.msra.mxu0 0.0
    %1443 = vmatprep.subr.mxu0 0.0
    %1444 = vmatpush2.msra.mxu0 0.0
    %1445 = vmatprep.mubr.f32.mxu0 0.0
    %1446 = vmatmul.mubr.f32.gmra.mxu0 %v1377
    %v1447 = vpop.f32.mrf.mxu0
    %v1448 = vadd.f32 0.0, %v1447
    %v1449 = vpop.f32.mrf.mxu0
    %v1450 = vadd.f32 0.0, %v1449
    %1451 = vmatprep.mubr.f32.mxu0 0.0
    %1452 = vmatmul.mubr.f32.gmra.mxu0 %v1379
    %v1453 = vpop.f32.mrf.mxu0
    %v1454 = vadd.f32 0.0, %v1453
    %v1455 = vpop.f32.mrf.mxu0
    %v1456 = vadd.f32 0.0, %v1455
    %1457 = vdwg.mxu0
    %v1458 = vadd.f32 %v1373, %v1448
    %v1459 = vadd.f32 %v1374, %v1450
    %v1460 = vadd.f32 %v1375, %v1454
    %v1461 = vadd.f32 %v1376, %v1456
    %v1462 = vxor.u32 %v1458, 2147483648
    %v1463 = vxor.u32 %v1460, 2147483648
    %v1464 = vmul.f32 %v1462, 1.442695
    %v1465 = vpow.pop %v1464
    %v1466 = vmul.f32 %v1463, 1.442695
    %v1467 = vpow.pop %v1466
    %v1468 = vadd.f32 %v1465, 1.0
    %v1469 = vadd.f32 %v1467, 1.0
    %v1470 = vrcp.pop %v1468
    %v1471 = vmul.f32 1.0, %v1470
    %v1472 = vrcp.pop %v1469
    %v1473 = vmul.f32 1.0, %v1472
    %v1474 = vtanh.pop %v1459
    %v1475 = vtanh.pop %v1461
    %v1476 = vxor.u32 %v1459, 2147483648
    %v1477 = vxor.u32 %v1461, 2147483648
    %v1478 = vmul.f32 %v1476, 1.442695
    %v1479 = vpow.pop %v1478
    %v1480 = vmul.f32 %v1477, 1.442695
    %v1481 = vpow.pop %v1480
    %v1482 = vadd.f32 %v1479, 1.0
    %v1483 = vadd.f32 %v1481, 1.0
    %v1484 = vrcp.pop %v1482
    %v1485 = vmul.f32 1.0, %v1484
    %v1486 = vrcp.pop %v1483
    %v1487 = vmul.f32 1.0, %v1486
    %v1488 = vmul.f32 %v1471, %v1236
    %v1489 = vmul.f32 %v1473, %v1237
    %v1490 = vmul.f32 %v1471, %v1474
    %v1491 = vmul.f32 %v1473, %v1475
    %1494 = vrot.lane.b32.xlu0 %v1490, 64
    %v1495 = vpop.permute.xlu0 %1494
    %1496 = vrot.lane.b32.xlu0 %v1491, 64
    %v1497 = vpop.permute.xlu0 %1496
    %v1500 = vadd.f32 %v1488, %v1495
    %v1501 = vadd.f32 %v1489, %v1497
    %v1502 = vtanh.pop %v1500
    %v1503 = vtanh.pop %v1501
    %v1504 = vmul.f32 %v1485, %v1502
    %v1505 = vmul.f32 %v1487, %v1503
    %1508 = vrot.lane.b32.xlu0 %v1504, 64
    %v1509 = vpop.permute.xlu0 %1508
    %1510 = vrot.lane.b32.xlu0 %v1505, 64
    %v1511 = vpop.permute.xlu0 %1510
    %v1514 = vsel %vm514, %v1509, %v1371
    %v1515 = vsel %vm514, %v1511, %v1372
    %1516 = vmatprep.subr.mxu0 %v703
    %1517 = vmatpush1.msra.mxu0 %v702
    %1518 = vmatprep.subr.mxu0 %v701
    %1519 = vmatpush1.msra.mxu0 %v700
    %1520 = vmatprep.subr.mxu0 %v699
    %1521 = vmatpush1.msra.mxu0 %v698
    %1522 = vmatprep.subr.mxu0 %v697
    %1523 = vmatpush1.msra.mxu0 %v696
    %1524 = vmatprep.subr.mxu0 %v695
    %1525 = vmatpush1.msra.mxu0 %v694
    %1526 = vmatprep.subr.mxu0 %v693
    %1527 = vmatpush1.msra.mxu0 %v692
    %1528 = vmatprep.subr.mxu0 %v691
    %1529 = vmatpush1.msra.mxu0 %v690
    %1530 = vmatprep.subr.mxu0 %v689
    %1531 = vmatpush1.msra.mxu0 %v688
    %1532 = vmatprep.subr.mxu0 %v687
    %1533 = vmatpush1.msra.mxu0 %v686
    %1534 = vmatprep.subr.mxu0 %v685
    %1535 = vmatpush1.msra.mxu0 %v684
    %1536 = vmatprep.subr.mxu0 %v683
    %1537 = vmatpush1.msra.mxu0 %v682
    %1538 = vmatprep.subr.mxu0 %v681
    %1539 = vmatpush1.msra.mxu0 %v680
    %1540 = vmatprep.subr.mxu0 %v679
    %1541 = vmatpush1.msra.mxu0 %v678
    %1542 = vmatprep.subr.mxu0 %v677
    %1543 = vmatpush1.msra.mxu0 %v676
    %1544 = vmatprep.subr.mxu0 %v675
    %1545 = vmatpush1.msra.mxu0 %v674
    %1546 = vmatprep.subr.mxu0 %v673
    %1547 = vmatpush1.msra.mxu0 %v672
    %1548 = vmatprep.subr.mxu0 0.0
    %1549 = vmatpush2.msra.mxu0 0.0
    %1550 = vmatprep.subr.mxu0 0.0
    %1551 = vmatpush2.msra.mxu0 0.0
    %1552 = vmatprep.subr.mxu0 0.0
    %1553 = vmatpush2.msra.mxu0 0.0
    %1554 = vmatprep.subr.mxu0 0.0
    %1555 = vmatpush2.msra.mxu0 0.0
    %1556 = vmatprep.subr.mxu0 0.0
    %1557 = vmatpush2.msra.mxu0 0.0
    %1558 = vmatprep.subr.mxu0 0.0
    %1559 = vmatpush2.msra.mxu0 0.0
    %1560 = vmatprep.subr.mxu0 0.0
    %1561 = vmatpush2.msra.mxu0 0.0
    %1562 = vmatprep.subr.mxu0 0.0
    %1563 = vmatpush2.msra.mxu0 0.0
    %1564 = vmatprep.subr.mxu0 0.0
    %1565 = vmatpush2.msra.mxu0 0.0
    %1566 = vmatprep.subr.mxu0 0.0
    %1567 = vmatpush2.msra.mxu0 0.0
    %1568 = vmatprep.subr.mxu0 0.0
    %1569 = vmatpush2.msra.mxu0 0.0
    %1570 = vmatprep.subr.mxu0 0.0
    %1571 = vmatpush2.msra.mxu0 0.0
    %1572 = vmatprep.subr.mxu0 0.0
    %1573 = vmatpush2.msra.mxu0 0.0
    %1574 = vmatprep.subr.mxu0 0.0
    %1575 = vmatpush2.msra.mxu0 0.0
    %1576 = vmatprep.subr.mxu0 0.0
    %1577 = vmatpush2.msra.mxu0 0.0
    %1578 = vmatprep.subr.mxu0 0.0
    %1579 = vmatpush2.msra.mxu0 0.0
    %1580 = vmatprep.mubr.f32.mxu0 0.0
    %1581 = vmatmul.mubr.f32.gmra.mxu0 %v1514
    %v1582 = vpop.f32.mrf.mxu0
    %v1583 = vadd.f32 %v709, %v1582
    %v1584 = vpop.f32.mrf.mxu0
    %v1585 = vadd.f32 %v713, %v1584
    %1586 = vmatprep.mubr.f32.mxu0 0.0
    %1587 = vmatmul.mubr.f32.gmra.mxu0 %v1515
    %v1588 = vpop.f32.mrf.mxu0
    %v1589 = vadd.f32 %v709, %v1588
    %v1590 = vpop.f32.mrf.mxu0
    %v1591 = vadd.f32 %v713, %v1590
    %1592 = vdwg.mxu0
    %v1593 = vxor.u32 %v1583, 2147483648
    %v1594 = vxor.u32 %v1589, 2147483648
    %v1595 = vmul.f32 %v1593, 1.442695
    %v1596 = vpow.pop %v1595
    %v1597 = vmul.f32 %v1594, 1.442695
    %v1598 = vpow.pop %v1597
    %v1599 = vadd.f32 %v1596, 1.0
    %v1600 = vadd.f32 %v1598, 1.0
    %v1601 = vrcp.pop %v1599
    %v1602 = vmul.f32 1.0, %v1601
    %v1603 = vrcp.pop %v1600
    %v1604 = vmul.f32 1.0, %v1603
    %v1605 = vtanh.pop %v1585
    %v1606 = vtanh.pop %v1591
    %v1607 = vxor.u32 %v1585, 2147483648
    %v1608 = vxor.u32 %v1591, 2147483648
    %v1609 = vmul.f32 %v1607, 1.442695
    %v1610 = vpow.pop %v1609
    %v1611 = vmul.f32 %v1608, 1.442695
    %v1612 = vpow.pop %v1611
    %v1613 = vadd.f32 %v1610, 1.0
    %v1614 = vadd.f32 %v1612, 1.0
    %v1615 = vrcp.pop %v1613
    %v1616 = vmul.f32 1.0, %v1615
    %v1617 = vrcp.pop %v1614
    %v1618 = vmul.f32 1.0, %v1617
    %v1619 = vmul.f32 %v1602, %v1367
    %v1620 = vmul.f32 %v1604, %v1368
    %v1621 = vmul.f32 %v1602, %v1605
    %v1622 = vmul.f32 %v1604, %v1606
    %1625 = vrot.lane.b32.xlu0 %v1621, 64
    %v1626 = vpop.permute.xlu0 %1625
    %1627 = vrot.lane.b32.xlu0 %v1622, 64
    %v1628 = vpop.permute.xlu0 %1627
    %v1631 = vadd.f32 %v1619, %v1626
    %v1632 = vadd.f32 %v1620, %v1628
    %v1633 = vtanh.pop %v1631
    %v1634 = vtanh.pop %v1632
    %v1635 = vmul.f32 %v1616, %v1633
    %v1636 = vmul.f32 %v1618, %v1634
    %v1637 = vld [vmem:[#allocation2 + $0x80] sm:$0xff]
    %v1638 = vld [vmem:[#allocation2 + $0x88] sm:$0xff]
    %v1639 = vld [vmem:[#allocation2 + $0x90] sm:$0xff]
    %v1640 = vld [vmem:[#allocation2 + $0x98] sm:$0xff]
    %v1641 = vsel %vm514, %v1509, 0
    %v1643 = vsel %vm514, %v1511, 0
    %1645 = vmatprep.subr.mxu0 0.0
    %1646 = vmatpush1.msra.mxu0 0.0
    %1647 = vmatprep.subr.mxu0 0.0
    %1648 = vmatpush1.msra.mxu0 0.0
    %1649 = vmatprep.subr.mxu0 0.0
    %1650 = vmatpush1.msra.mxu0 0.0
    %1651 = vmatprep.subr.mxu0 0.0
    %1652 = vmatpush1.msra.mxu0 0.0
    %1653 = vmatprep.subr.mxu0 0.0
    %1654 = vmatpush1.msra.mxu0 0.0
    %1655 = vmatprep.subr.mxu0 0.0
    %1656 = vmatpush1.msra.mxu0 0.0
    %1657 = vmatprep.subr.mxu0 0.0
    %1658 = vmatpush1.msra.mxu0 0.0
    %1659 = vmatprep.subr.mxu0 0.0
    %1660 = vmatpush1.msra.mxu0 0.0
    %1661 = vmatprep.subr.mxu0 %v513
    %1662 = vmatpush1.msra.mxu0 %v512
    %1663 = vmatprep.subr.mxu0 %v511
    %1664 = vmatpush1.msra.mxu0 %v510
    %1665 = vmatprep.subr.mxu0 %v509
    %1666 = vmatpush1.msra.mxu0 %v508
    %1667 = vmatprep.subr.mxu0 %v507
    %1668 = vmatpush1.msra.mxu0 %v506
    %1669 = vmatprep.subr.mxu0 %v505
    %1670 = vmatpush1.msra.mxu0 %v504
    %1671 = vmatprep.subr.mxu0 %v503
    %1672 = vmatpush1.msra.mxu0 %v502
    %1673 = vmatprep.subr.mxu0 %v501
    %1674 = vmatpush1.msra.mxu0 %v500
    %1675 = vmatprep.subr.mxu0 %v499
    %1676 = vmatpush1.msra.mxu0 %v498
    %1677 = vmatprep.subr.mxu0 0.0
    %1678 = vmatpush2.msra.mxu0 0.0
    %1679 = vmatprep.subr.mxu0 0.0
    %1680 = vmatpush2.msra.mxu0 0.0
    %1681 = vmatprep.subr.mxu0 0.0
    %1682 = vmatpush2.msra.mxu0 0.0
    %1683 = vmatprep.subr.mxu0 0.0
    %1684 = vmatpush2.msra.mxu0 0.0
    %1685 = vmatprep.subr.mxu0 0.0
    %1686 = vmatpush2.msra.mxu0 0.0
    %1687 = vmatprep.subr.mxu0 0.0
    %1688 = vmatpush2.msra.mxu0 0.0
    %1689 = vmatprep.subr.mxu0 0.0
    %1690 = vmatpush2.msra.mxu0 0.0
    %1691 = vmatprep.subr.mxu0 0.0
    %1692 = vmatpush2.msra.mxu0 0.0
    %1693 = vmatprep.subr.mxu0 0.0
    %1694 = vmatpush2.msra.mxu0 0.0
    %1695 = vmatprep.subr.mxu0 0.0
    %1696 = vmatpush2.msra.mxu0 0.0
    %1697 = vmatprep.subr.mxu0 0.0
    %1698 = vmatpush2.msra.mxu0 0.0
    %1699 = vmatprep.subr.mxu0 0.0
    %1700 = vmatpush2.msra.mxu0 0.0
    %1701 = vmatprep.subr.mxu0 0.0
    %1702 = vmatpush2.msra.mxu0 0.0
    %1703 = vmatprep.subr.mxu0 0.0
    %1704 = vmatpush2.msra.mxu0 0.0
    %1705 = vmatprep.subr.mxu0 0.0
    %1706 = vmatpush2.msra.mxu0 0.0
    %1707 = vmatprep.subr.mxu0 0.0
    %1708 = vmatpush2.msra.mxu0 0.0
    %1709 = vmatprep.mubr.f32.mxu0 0.0
    %1710 = vmatmul.mubr.f32.gmra.mxu0 %v1641
    %v1711 = vpop.f32.mrf.mxu0
    %v1712 = vadd.f32 0.0, %v1711
    %v1713 = vpop.f32.mrf.mxu0
    %v1714 = vadd.f32 0.0, %v1713
    %1715 = vmatprep.mubr.f32.mxu0 0.0
    %1716 = vmatmul.mubr.f32.gmra.mxu0 %v1643
    %v1717 = vpop.f32.mrf.mxu0
    %v1718 = vadd.f32 0.0, %v1717
    %v1719 = vpop.f32.mrf.mxu0
    %v1720 = vadd.f32 0.0, %v1719
    %1721 = vdwg.mxu0
    %v1722 = vadd.f32 %v1637, %v1712
    %v1723 = vadd.f32 %v1638, %v1714
    %v1724 = vadd.f32 %v1639, %v1718
    %v1725 = vadd.f32 %v1640, %v1720
    %v1726 = vxor.u32 %v1722, 2147483648
    %v1727 = vxor.u32 %v1724, 2147483648
    %v1728 = vmul.f32 %v1726, 1.442695
    %v1729 = vpow.pop %v1728
    %v1730 = vmul.f32 %v1727, 1.442695
    %v1731 = vpow.pop %v1730
    %v1732 = vadd.f32 %v1729, 1.0
    %v1733 = vadd.f32 %v1731, 1.0
    %v1734 = vrcp.pop %v1732
    %v1735 = vmul.f32 1.0, %v1734
    %v1736 = vrcp.pop %v1733
    %v1737 = vmul.f32 1.0, %v1736
    %v1738 = vtanh.pop %v1723
    %v1739 = vtanh.pop %v1725
    %v1740 = vxor.u32 %v1723, 2147483648
    %v1741 = vxor.u32 %v1725, 2147483648
    %v1742 = vmul.f32 %v1740, 1.442695
    %v1743 = vpow.pop %v1742
    %v1744 = vmul.f32 %v1741, 1.442695
    %v1745 = vpow.pop %v1744
    %v1746 = vadd.f32 %v1743, 1.0
    %v1747 = vadd.f32 %v1745, 1.0
    %v1748 = vrcp.pop %v1746
    %v1749 = vmul.f32 1.0, %v1748
    %v1750 = vrcp.pop %v1747
    %v1751 = vmul.f32 1.0, %v1750
    %v1752 = vmul.f32 %v1735, %v1500
    %v1753 = vmul.f32 %v1737, %v1501
    %v1754 = vmul.f32 %v1735, %v1738
    %v1755 = vmul.f32 %v1737, %v1739
    %1758 = vrot.lane.b32.xlu0 %v1754, 64
    %v1759 = vpop.permute.xlu0 %1758
    %1760 = vrot.lane.b32.xlu0 %v1755, 64
    %v1761 = vpop.permute.xlu0 %1760
    %v1764 = vadd.f32 %v1752, %v1759
    %v1765 = vadd.f32 %v1753, %v1761
    %v1766 = vtanh.pop %v1764
    %v1767 = vtanh.pop %v1765
    %v1768 = vmul.f32 %v1749, %v1766
    %v1769 = vmul.f32 %v1751, %v1767
    %1772 = vrot.lane.b32.xlu0 %v1768, 64
    %v1773 = vpop.permute.xlu0 %1772
    %1774 = vrot.lane.b32.xlu0 %v1769, 64
    %v1775 = vpop.permute.xlu0 %1774
    %v1778 = vsel %vm514, %v1773, %v1635
    %v1779 = vsel %vm514, %v1775, %v1636
    %1780 = vmatprep.subr.mxu0 %v703
    %1781 = vmatpush1.msra.mxu0 %v702
    %1782 = vmatprep.subr.mxu0 %v701
    %1783 = vmatpush1.msra.mxu0 %v700
    %1784 = vmatprep.subr.mxu0 %v699
    %1785 = vmatpush1.msra.mxu0 %v698
    %1786 = vmatprep.subr.mxu0 %v697
    %1787 = vmatpush1.msra.mxu0 %v696
    %1788 = vmatprep.subr.mxu0 %v695
    %1789 = vmatpush1.msra.mxu0 %v694
    %1790 = vmatprep.subr.mxu0 %v693
    %1791 = vmatpush1.msra.mxu0 %v692
    %1792 = vmatprep.subr.mxu0 %v691
    %1793 = vmatpush1.msra.mxu0 %v690
    %1794 = vmatprep.subr.mxu0 %v689
    %1795 = vmatpush1.msra.mxu0 %v688
    %1796 = vmatprep.subr.mxu0 %v687
    %1797 = vmatpush1.msra.mxu0 %v686
    %1798 = vmatprep.subr.mxu0 %v685
    %1799 = vmatpush1.msra.mxu0 %v684
    %1800 = vmatprep.subr.mxu0 %v683
    %1801 = vmatpush1.msra.mxu0 %v682
    %1802 = vmatprep.subr.mxu0 %v681
    %1803 = vmatpush1.msra.mxu0 %v680
    %1804 = vmatprep.subr.mxu0 %v679
    %1805 = vmatpush1.msra.mxu0 %v678
    %1806 = vmatprep.subr.mxu0 %v677
    %1807 = vmatpush1.msra.mxu0 %v676
    %1808 = vmatprep.subr.mxu0 %v675
    %1809 = vmatpush1.msra.mxu0 %v674
    %1810 = vmatprep.subr.mxu0 %v673
    %1811 = vmatpush1.msra.mxu0 %v672
    %1812 = vmatprep.subr.mxu0 0.0
    %1813 = vmatpush2.msra.mxu0 0.0
    %1814 = vmatprep.subr.mxu0 0.0
    %1815 = vmatpush2.msra.mxu0 0.0
    %1816 = vmatprep.subr.mxu0 0.0
    %1817 = vmatpush2.msra.mxu0 0.0
    %1818 = vmatprep.subr.mxu0 0.0
    %1819 = vmatpush2.msra.mxu0 0.0
    %1820 = vmatprep.subr.mxu0 0.0
    %1821 = vmatpush2.msra.mxu0 0.0
    %1822 = vmatprep.subr.mxu0 0.0
    %1823 = vmatpush2.msra.mxu0 0.0
    %1824 = vmatprep.subr.mxu0 0.0
    %1825 = vmatpush2.msra.mxu0 0.0
    %1826 = vmatprep.subr.mxu0 0.0
    %1827 = vmatpush2.msra.mxu0 0.0
    %1828 = vmatprep.subr.mxu0 0.0
    %1829 = vmatpush2.msra.mxu0 0.0
    %1830 = vmatprep.subr.mxu0 0.0
    %1831 = vmatpush2.msra.mxu0 0.0
    %1832 = vmatprep.subr.mxu0 0.0
    %1833 = vmatpush2.msra.mxu0 0.0
    %1834 = vmatprep.subr.mxu0 0.0
    %1835 = vmatpush2.msra.mxu0 0.0
    %1836 = vmatprep.subr.mxu0 0.0
    %1837 = vmatpush2.msra.mxu0 0.0
    %1838 = vmatprep.subr.mxu0 0.0
    %1839 = vmatpush2.msra.mxu0 0.0
    %1840 = vmatprep.subr.mxu0 0.0
    %1841 = vmatpush2.msra.mxu0 0.0
    %1842 = vmatprep.subr.mxu0 0.0
    %1843 = vmatpush2.msra.mxu0 0.0
    %1844 = vmatprep.mubr.f32.mxu0 0.0
    %1845 = vmatmul.mubr.f32.gmra.mxu0 %v1778
    %v1846 = vpop.f32.mrf.mxu0
    %v1847 = vadd.f32 %v709, %v1846
    %v1848 = vpop.f32.mrf.mxu0
    %v1849 = vadd.f32 %v713, %v1848
    %1850 = vmatprep.mubr.f32.mxu0 0.0
    %1851 = vmatmul.mubr.f32.gmra.mxu0 %v1779
    %v1852 = vpop.f32.mrf.mxu0
    %v1853 = vadd.f32 %v709, %v1852
    %v1854 = vpop.f32.mrf.mxu0
    %v1855 = vadd.f32 %v713, %v1854
    %1856 = vdwg.mxu0
    %v1857 = vxor.u32 %v1847, 2147483648
    %v1858 = vxor.u32 %v1853, 2147483648
    %v1859 = vmul.f32 %v1857, 1.442695
    %v1860 = vpow.pop %v1859
    %v1861 = vmul.f32 %v1858, 1.442695
    %v1862 = vpow.pop %v1861
    %v1863 = vadd.f32 %v1860, 1.0
    %v1864 = vadd.f32 %v1862, 1.0
    %v1865 = vrcp.pop %v1863
    %v1866 = vmul.f32 1.0, %v1865
    %v1867 = vrcp.pop %v1864
    %v1868 = vmul.f32 1.0, %v1867
    %v1869 = vtanh.pop %v1849
    %v1870 = vtanh.pop %v1855
    %v1871 = vxor.u32 %v1849, 2147483648
    %v1872 = vxor.u32 %v1855, 2147483648
    %v1873 = vmul.f32 %v1871, 1.442695
    %v1874 = vpow.pop %v1873
    %v1875 = vmul.f32 %v1872, 1.442695
    %v1876 = vpow.pop %v1875
    %v1877 = vadd.f32 %v1874, 1.0
    %v1878 = vadd.f32 %v1876, 1.0
    %v1879 = vrcp.pop %v1877
    %v1880 = vmul.f32 1.0, %v1879
    %v1881 = vrcp.pop %v1878
    %v1882 = vmul.f32 1.0, %v1881
    %v1883 = vmul.f32 %v1866, %v1631
    %v1884 = vmul.f32 %v1868, %v1632
    %v1885 = vmul.f32 %v1866, %v1869
    %v1886 = vmul.f32 %v1868, %v1870
    %1889 = vrot.lane.b32.xlu0 %v1885, 64
    %v1890 = vpop.permute.xlu0 %1889
    %1891 = vrot.lane.b32.xlu0 %v1886, 64
    %v1892 = vpop.permute.xlu0 %1891
    %v1895 = vadd.f32 %v1883, %v1890
    %v1896 = vadd.f32 %v1884, %v1892
    %v1897 = vtanh.pop %v1895
    %v1898 = vtanh.pop %v1896
    %v1899 = vmul.f32 %v1880, %v1897
    %v1900 = vmul.f32 %v1882, %v1898
    %v1901 = vld [vmem:[#allocation2 + $0xa0] sm:$0xff]
    %v1902 = vld [vmem:[#allocation2 + $0xa8] sm:$0xff]
    %v1903 = vld [vmem:[#allocation2 + $0xb0] sm:$0xff]
    %v1904 = vld [vmem:[#allocation2 + $0xb8] sm:$0xff]
    %v1905 = vsel %vm514, %v1773, 0
    %v1907 = vsel %vm514, %v1775, 0
    %1909 = vmatprep.subr.mxu0 0.0
    %1910 = vmatpush1.msra.mxu0 0.0
    %1911 = vmatprep.subr.mxu0 0.0
    %1912 = vmatpush1.msra.mxu0 0.0
    %1913 = vmatprep.subr.mxu0 0.0
    %1914 = vmatpush1.msra.mxu0 0.0
    %1915 = vmatprep.subr.mxu0 0.0
    %1916 = vmatpush1.msra.mxu0 0.0
    %1917 = vmatprep.subr.mxu0 0.0
    %1918 = vmatpush1.msra.mxu0 0.0
    %1919 = vmatprep.subr.mxu0 0.0
    %1920 = vmatpush1.msra.mxu0 0.0
    %1921 = vmatprep.subr.mxu0 0.0
    %1922 = vmatpush1.msra.mxu0 0.0
    %1923 = vmatprep.subr.mxu0 0.0
    %1924 = vmatpush1.msra.mxu0 0.0
    %1925 = vmatprep.subr.mxu0 %v513
    %1926 = vmatpush1.msra.mxu0 %v512
    %1927 = vmatprep.subr.mxu0 %v511
    %1928 = vmatpush1.msra.mxu0 %v510
    %1929 = vmatprep.subr.mxu0 %v509
    %1930 = vmatpush1.msra.mxu0 %v508
    %1931 = vmatprep.subr.mxu0 %v507
    %1932 = vmatpush1.msra.mxu0 %v506
    %1933 = vmatprep.subr.mxu0 %v505
    %1934 = vmatpush1.msra.mxu0 %v504
    %1935 = vmatprep.subr.mxu0 %v503
    %1936 = vmatpush1.msra.mxu0 %v502
    %1937 = vmatprep.subr.mxu0 %v501
    %1938 = vmatpush1.msra.mxu0 %v500
    %1939 = vmatprep.subr.mxu0 %v499
    %1940 = vmatpush1.msra.mxu0 %v498
    %1941 = vmatprep.subr.mxu0 0.0
    %1942 = vmatpush2.msra.mxu0 0.0
    %1943 = vmatprep.subr.mxu0 0.0
    %1944 = vmatpush2.msra.mxu0 0.0
    %1945 = vmatprep.subr.mxu0 0.0
    %1946 = vmatpush2.msra.mxu0 0.0
    %1947 = vmatprep.subr.mxu0 0.0
    %1948 = vmatpush2.msra.mxu0 0.0
    %1949 = vmatprep.subr.mxu0 0.0
    %1950 = vmatpush2.msra.mxu0 0.0
    %1951 = vmatprep.subr.mxu0 0.0
    %1952 = vmatpush2.msra.mxu0 0.0
    %1953 = vmatprep.subr.mxu0 0.0
    %1954 = vmatpush2.msra.mxu0 0.0
    %1955 = vmatprep.subr.mxu0 0.0
    %1956 = vmatpush2.msra.mxu0 0.0
    %1957 = vmatprep.subr.mxu0 0.0
    %1958 = vmatpush2.msra.mxu0 0.0
    %1959 = vmatprep.subr.mxu0 0.0
    %1960 = vmatpush2.msra.mxu0 0.0
    %1961 = vmatprep.subr.mxu0 0.0
    %1962 = vmatpush2.msra.mxu0 0.0
    %1963 = vmatprep.subr.mxu0 0.0
    %1964 = vmatpush2.msra.mxu0 0.0
    %1965 = vmatprep.subr.mxu0 0.0
    %1966 = vmatpush2.msra.mxu0 0.0
    %1967 = vmatprep.subr.mxu0 0.0
    %1968 = vmatpush2.msra.mxu0 0.0
    %1969 = vmatprep.subr.mxu0 0.0
    %1970 = vmatpush2.msra.mxu0 0.0
    %1971 = vmatprep.subr.mxu0 0.0
    %1972 = vmatpush2.msra.mxu0 0.0
    %1973 = vmatprep.mubr.f32.mxu0 0.0
    %1974 = vmatmul.mubr.f32.gmra.mxu0 %v1905
    %v1975 = vpop.f32.mrf.mxu0
    %v1976 = vadd.f32 0.0, %v1975
    %v1977 = vpop.f32.mrf.mxu0
    %v1978 = vadd.f32 0.0, %v1977
    %1979 = vmatprep.mubr.f32.mxu0 0.0
    %1980 = vmatmul.mubr.f32.gmra.mxu0 %v1907
    %v1981 = vpop.f32.mrf.mxu0
    %v1982 = vadd.f32 0.0, %v1981
    %v1983 = vpop.f32.mrf.mxu0
    %v1984 = vadd.f32 0.0, %v1983
    %1985 = vdwg.mxu0
    %v1986 = vadd.f32 %v1901, %v1976
    %v1987 = vadd.f32 %v1902, %v1978
    %v1988 = vadd.f32 %v1903, %v1982
    %v1989 = vadd.f32 %v1904, %v1984
    %v1990 = vxor.u32 %v1986, 2147483648
    %v1991 = vxor.u32 %v1988, 2147483648
    %v1992 = vmul.f32 %v1990, 1.442695
    %v1993 = vpow.pop %v1992
    %v1994 = vmul.f32 %v1991, 1.442695
    %v1995 = vpow.pop %v1994
    %v1996 = vadd.f32 %v1993, 1.0
    %v1997 = vadd.f32 %v1995, 1.0
    %v1998 = vrcp.pop %v1996
    %v1999 = vmul.f32 1.0, %v1998
    %v2000 = vrcp.pop %v1997
    %v2001 = vmul.f32 1.0, %v2000
    %v2002 = vtanh.pop %v1987
    %v2003 = vtanh.pop %v1989
    %v2004 = vxor.u32 %v1987, 2147483648
    %v2005 = vxor.u32 %v1989, 2147483648
    %v2006 = vmul.f32 %v2004, 1.442695
    %v2007 = vpow.pop %v2006
    %v2008 = vmul.f32 %v2005, 1.442695
    %v2009 = vpow.pop %v2008
    %v2010 = vadd.f32 %v2007, 1.0
    %v2011 = vadd.f32 %v2009, 1.0
    %v2012 = vrcp.pop %v2010
    %v2013 = vmul.f32 1.0, %v2012
    %v2014 = vrcp.pop %v2011
    %v2015 = vmul.f32 1.0, %v2014
    %v2016 = vmul.f32 %v1999, %v1764
    %v2017 = vmul.f32 %v2001, %v1765
    %v2018 = vmul.f32 %v1999, %v2002
    %v2019 = vmul.f32 %v2001, %v2003
    %2022 = vrot.lane.b32.xlu0 %v2018, 64
    %v2023 = vpop.permute.xlu0 %2022
    %2024 = vrot.lane.b32.xlu0 %v2019, 64
    %v2025 = vpop.permute.xlu0 %2024
    %v2028 = vadd.f32 %v2016, %v2023
    %v2029 = vadd.f32 %v2017, %v2025
    %v2030 = vtanh.pop %v2028
    %v2031 = vtanh.pop %v2029
    %v2032 = vmul.f32 %v2013, %v2030
    %v2033 = vmul.f32 %v2015, %v2031
    %2036 = vrot.lane.b32.xlu0 %v2032, 64
    %v2037 = vpop.permute.xlu0 %2036
    %2038 = vrot.lane.b32.xlu0 %v2033, 64
    %v2039 = vpop.permute.xlu0 %2038
    %v2042 = vsel %vm514, %v2037, %v1899
    %v2043 = vsel %vm514, %v2039, %v1900
    %2044 = vmatprep.subr.mxu0 %v703
    %2045 = vmatpush1.msra.mxu0 %v702
    %2046 = vmatprep.subr.mxu0 %v701
    %2047 = vmatpush1.msra.mxu0 %v700
    %2048 = vmatprep.subr.mxu0 %v699
    %2049 = vmatpush1.msra.mxu0 %v698
    %2050 = vmatprep.subr.mxu0 %v697
    %2051 = vmatpush1.msra.mxu0 %v696
    %2052 = vmatprep.subr.mxu0 %v695
    %2053 = vmatpush1.msra.mxu0 %v694
    %2054 = vmatprep.subr.mxu0 %v693
    %2055 = vmatpush1.msra.mxu0 %v692
    %2056 = vmatprep.subr.mxu0 %v691
    %2057 = vmatpush1.msra.mxu0 %v690
    %2058 = vmatprep.subr.mxu0 %v689
    %2059 = vmatpush1.msra.mxu0 %v688
    %2060 = vmatprep.subr.mxu0 %v687
    %2061 = vmatpush1.msra.mxu0 %v686
    %2062 = vmatprep.subr.mxu0 %v685
    %2063 = vmatpush1.msra.mxu0 %v684
    %2064 = vmatprep.subr.mxu0 %v683
    %2065 = vmatpush1.msra.mxu0 %v682
    %2066 = vmatprep.subr.mxu0 %v681
    %2067 = vmatpush1.msra.mxu0 %v680
    %2068 = vmatprep.subr.mxu0 %v679
    %2069 = vmatpush1.msra.mxu0 %v678
    %2070 = vmatprep.subr.mxu0 %v677
    %2071 = vmatpush1.msra.mxu0 %v676
    %2072 = vmatprep.subr.mxu0 %v675
    %2073 = vmatpush1.msra.mxu0 %v674
    %2074 = vmatprep.subr.mxu0 %v673
    %2075 = vmatpush1.msra.mxu0 %v672
    %2076 = vmatprep.subr.mxu0 0.0
    %2077 = vmatpush2.msra.mxu0 0.0
    %2078 = vmatprep.subr.mxu0 0.0
    %2079 = vmatpush2.msra.mxu0 0.0
    %2080 = vmatprep.subr.mxu0 0.0
    %2081 = vmatpush2.msra.mxu0 0.0
    %2082 = vmatprep.subr.mxu0 0.0
    %2083 = vmatpush2.msra.mxu0 0.0
    %2084 = vmatprep.subr.mxu0 0.0
    %2085 = vmatpush2.msra.mxu0 0.0
    %2086 = vmatprep.subr.mxu0 0.0
    %2087 = vmatpush2.msra.mxu0 0.0
    %2088 = vmatprep.subr.mxu0 0.0
    %2089 = vmatpush2.msra.mxu0 0.0
    %2090 = vmatprep.subr.mxu0 0.0
    %2091 = vmatpush2.msra.mxu0 0.0
    %2092 = vmatprep.subr.mxu0 0.0
    %2093 = vmatpush2.msra.mxu0 0.0
    %2094 = vmatprep.subr.mxu0 0.0
    %2095 = vmatpush2.msra.mxu0 0.0
    %2096 = vmatprep.subr.mxu0 0.0
    %2097 = vmatpush2.msra.mxu0 0.0
    %2098 = vmatprep.subr.mxu0 0.0
    %2099 = vmatpush2.msra.mxu0 0.0
    %2100 = vmatprep.subr.mxu0 0.0
    %2101 = vmatpush2.msra.mxu0 0.0
    %2102 = vmatprep.subr.mxu0 0.0
    %2103 = vmatpush2.msra.mxu0 0.0
    %2104 = vmatprep.subr.mxu0 0.0
    %2105 = vmatpush2.msra.mxu0 0.0
    %2106 = vmatprep.subr.mxu0 0.0
    %2107 = vmatpush2.msra.mxu0 0.0
    %2108 = vmatprep.mubr.f32.mxu0 0.0
    %2109 = vmatmul.mubr.f32.gmra.mxu0 %v2042
    %v2110 = vpop.f32.mrf.mxu0
    %v2111 = vadd.f32 %v709, %v2110
    %v2112 = vpop.f32.mrf.mxu0
    %v2113 = vadd.f32 %v713, %v2112
    %2114 = vmatprep.mubr.f32.mxu0 0.0
    %2115 = vmatmul.mubr.f32.gmra.mxu0 %v2043
    %v2116 = vpop.f32.mrf.mxu0
    %v2117 = vadd.f32 %v709, %v2116
    %v2118 = vpop.f32.mrf.mxu0
    %v2119 = vadd.f32 %v713, %v2118
    %2120 = vdwg.mxu0
    %v2121 = vxor.u32 %v2111, 2147483648
    %v2122 = vxor.u32 %v2117, 2147483648
    %v2123 = vmul.f32 %v2121, 1.442695
    %v2124 = vpow.pop %v2123
    %v2125 = vmul.f32 %v2122, 1.442695
    %v2126 = vpow.pop %v2125
    %v2127 = vadd.f32 %v2124, 1.0
    %v2128 = vadd.f32 %v2126, 1.0
    %v2129 = vrcp.pop %v2127
    %v2130 = vmul.f32 1.0, %v2129
    %v2131 = vrcp.pop %v2128
    %v2132 = vmul.f32 1.0, %v2131
    %v2133 = vtanh.pop %v2113
    %v2134 = vtanh.pop %v2119
    %v2135 = vxor.u32 %v2113, 2147483648
    %v2136 = vxor.u32 %v2119, 2147483648
    %v2137 = vmul.f32 %v2135, 1.442695
    %v2138 = vpow.pop %v2137
    %v2139 = vmul.f32 %v2136, 1.442695
    %v2140 = vpow.pop %v2139
    %v2141 = vadd.f32 %v2138, 1.0
    %v2142 = vadd.f32 %v2140, 1.0
    %v2143 = vrcp.pop %v2141
    %v2144 = vmul.f32 1.0, %v2143
    %v2145 = vrcp.pop %v2142
    %v2146 = vmul.f32 1.0, %v2145
    %v2147 = vmul.f32 %v2130, %v1895
    %v2148 = vmul.f32 %v2132, %v1896
    %v2149 = vmul.f32 %v2130, %v2133
    %v2150 = vmul.f32 %v2132, %v2134
    %2153 = vrot.lane.b32.xlu0 %v2149, 64
    %v2154 = vpop.permute.xlu0 %2153
    %2155 = vrot.lane.b32.xlu0 %v2150, 64
    %v2156 = vpop.permute.xlu0 %2155
    %v2159 = vadd.f32 %v2147, %v2154
    %v2160 = vadd.f32 %v2148, %v2156
    %v2161 = vtanh.pop %v2159
    %v2162 = vtanh.pop %v2160
    %v2163 = vmul.f32 %v2144, %v2161
    %v2164 = vmul.f32 %v2146, %v2162
    %v2165 = vld [vmem:[#allocation2 + $0xc0] sm:$0xff]
    %v2166 = vld [vmem:[#allocation2 + $0xc8] sm:$0xff]
    %v2167 = vld [vmem:[#allocation2 + $0xd0] sm:$0xff]
    %v2168 = vld [vmem:[#allocation2 + $0xd8] sm:$0xff]
    %v2169 = vsel %vm514, %v2037, 0
    %v2171 = vsel %vm514, %v2039, 0
    %2173 = vmatprep.subr.mxu0 0.0
    %2174 = vmatpush1.msra.mxu0 0.0
    %2175 = vmatprep.subr.mxu0 0.0
    %2176 = vmatpush1.msra.mxu0 0.0
    %2177 = vmatprep.subr.mxu0 0.0
    %2178 = vmatpush1.msra.mxu0 0.0
    %2179 = vmatprep.subr.mxu0 0.0
    %2180 = vmatpush1.msra.mxu0 0.0
    %2181 = vmatprep.subr.mxu0 0.0
    %2182 = vmatpush1.msra.mxu0 0.0
    %2183 = vmatprep.subr.mxu0 0.0
    %2184 = vmatpush1.msra.mxu0 0.0
    %2185 = vmatprep.subr.mxu0 0.0
    %2186 = vmatpush1.msra.mxu0 0.0
    %2187 = vmatprep.subr.mxu0 0.0
    %2188 = vmatpush1.msra.mxu0 0.0
    %2189 = vmatprep.subr.mxu0 %v513
    %2190 = vmatpush1.msra.mxu0 %v512
    %2191 = vmatprep.subr.mxu0 %v511
    %2192 = vmatpush1.msra.mxu0 %v510
    %2193 = vmatprep.subr.mxu0 %v509
    %2194 = vmatpush1.msra.mxu0 %v508
    %2195 = vmatprep.subr.mxu0 %v507
    %2196 = vmatpush1.msra.mxu0 %v506
    %2197 = vmatprep.subr.mxu0 %v505
    %2198 = vmatpush1.msra.mxu0 %v504
    %2199 = vmatprep.subr.mxu0 %v503
    %2200 = vmatpush1.msra.mxu0 %v502
    %2201 = vmatprep.subr.mxu0 %v501
    %2202 = vmatpush1.msra.mxu0 %v500
    %2203 = vmatprep.subr.mxu0 %v499
    %2204 = vmatpush1.msra.mxu0 %v498
    %2205 = vmatprep.subr.mxu0 0.0
    %2206 = vmatpush2.msra.mxu0 0.0
    %2207 = vmatprep.subr.mxu0 0.0
    %2208 = vmatpush2.msra.mxu0 0.0
    %2209 = vmatprep.subr.mxu0 0.0
    %2210 = vmatpush2.msra.mxu0 0.0
    %2211 = vmatprep.subr.mxu0 0.0
    %2212 = vmatpush2.msra.mxu0 0.0
    %2213 = vmatprep.subr.mxu0 0.0
    %2214 = vmatpush2.msra.mxu0 0.0
    %2215 = vmatprep.subr.mxu0 0.0
    %2216 = vmatpush2.msra.mxu0 0.0
    %2217 = vmatprep.subr.mxu0 0.0
    %2218 = vmatpush2.msra.mxu0 0.0
    %2219 = vmatprep.subr.mxu0 0.0
    %2220 = vmatpush2.msra.mxu0 0.0
    %2221 = vmatprep.subr.mxu0 0.0
    %2222 = vmatpush2.msra.mxu0 0.0
    %2223 = vmatprep.subr.mxu0 0.0
    %2224 = vmatpush2.msra.mxu0 0.0
    %2225 = vmatprep.subr.mxu0 0.0
    %2226 = vmatpush2.msra.mxu0 0.0
    %2227 = vmatprep.subr.mxu0 0.0
    %2228 = vmatpush2.msra.mxu0 0.0
    %2229 = vmatprep.subr.mxu0 0.0
    %2230 = vmatpush2.msra.mxu0 0.0
    %2231 = vmatprep.subr.mxu0 0.0
    %2232 = vmatpush2.msra.mxu0 0.0
    %2233 = vmatprep.subr.mxu0 0.0
    %2234 = vmatpush2.msra.mxu0 0.0
    %2235 = vmatprep.subr.mxu0 0.0
    %2236 = vmatpush2.msra.mxu0 0.0
    %2237 = vmatprep.mubr.f32.mxu0 0.0
    %2238 = vmatmul.mubr.f32.gmra.mxu0 %v2169
    %v2239 = vpop.f32.mrf.mxu0
    %v2240 = vadd.f32 0.0, %v2239
    %v2241 = vpop.f32.mrf.mxu0
    %v2242 = vadd.f32 0.0, %v2241
    %2243 = vmatprep.mubr.f32.mxu0 0.0
    %2244 = vmatmul.mubr.f32.gmra.mxu0 %v2171
    %v2245 = vpop.f32.mrf.mxu0
    %v2246 = vadd.f32 0.0, %v2245
    %v2247 = vpop.f32.mrf.mxu0
    %v2248 = vadd.f32 0.0, %v2247
    %2249 = vdwg.mxu0
    %v2250 = vadd.f32 %v2165, %v2240
    %v2251 = vadd.f32 %v2166, %v2242
    %v2252 = vadd.f32 %v2167, %v2246
    %v2253 = vadd.f32 %v2168, %v2248
    %v2254 = vxor.u32 %v2250, 2147483648
    %v2255 = vxor.u32 %v2252, 2147483648
    %v2256 = vmul.f32 %v2254, 1.442695
    %v2257 = vpow.pop %v2256
    %v2258 = vmul.f32 %v2255, 1.442695
    %v2259 = vpow.pop %v2258
    %v2260 = vadd.f32 %v2257, 1.0
    %v2261 = vadd.f32 %v2259, 1.0
    %v2262 = vrcp.pop %v2260
    %v2263 = vmul.f32 1.0, %v2262
    %v2264 = vrcp.pop %v2261
    %v2265 = vmul.f32 1.0, %v2264
    %v2266 = vtanh.pop %v2251
    %v2267 = vtanh.pop %v2253
    %v2268 = vxor.u32 %v2251, 2147483648
    %v2269 = vxor.u32 %v2253, 2147483648
    %v2270 = vmul.f32 %v2268, 1.442695
    %v2271 = vpow.pop %v2270
    %v2272 = vmul.f32 %v2269, 1.442695
    %v2273 = vpow.pop %v2272
    %v2274 = vadd.f32 %v2271, 1.0
    %v2275 = vadd.f32 %v2273, 1.0
    %v2276 = vrcp.pop %v2274
    %v2277 = vmul.f32 1.0, %v2276
    %v2278 = vrcp.pop %v2275
    %v2279 = vmul.f32 1.0, %v2278
    %v2280 = vmul.f32 %v2263, %v2028
    %v2281 = vmul.f32 %v2265, %v2029
    %v2282 = vmul.f32 %v2263, %v2266
    %v2283 = vmul.f32 %v2265, %v2267
    %2286 = vrot.lane.b32.xlu0 %v2282, 64
    %v2287 = vpop.permute.xlu0 %2286
    %2288 = vrot.lane.b32.xlu0 %v2283, 64
    %v2289 = vpop.permute.xlu0 %2288
    %v2292 = vadd.f32 %v2280, %v2287
    %v2293 = vadd.f32 %v2281, %v2289
    %v2294 = vtanh.pop %v2292
    %v2295 = vtanh.pop %v2293
    %v2296 = vmul.f32 %v2277, %v2294
    %v2297 = vmul.f32 %v2279, %v2295
    %2300 = vrot.lane.b32.xlu0 %v2296, 64
    %v2301 = vpop.permute.xlu0 %2300
    %2302 = vrot.lane.b32.xlu0 %v2297, 64
    %v2303 = vpop.permute.xlu0 %2302
    %v2306 = vsel %vm514, %v2301, %v2163
    %v2307 = vsel %vm514, %v2303, %v2164
    %2308 = vmatprep.subr.mxu0 %v703
    %2309 = vmatpush1.msra.mxu0 %v702
    %2310 = vmatprep.subr.mxu0 %v701
    %2311 = vmatpush1.msra.mxu0 %v700
    %2312 = vmatprep.subr.mxu0 %v699
    %2313 = vmatpush1.msra.mxu0 %v698
    %2314 = vmatprep.subr.mxu0 %v697
    %2315 = vmatpush1.msra.mxu0 %v696
    %2316 = vmatprep.subr.mxu0 %v695
    %2317 = vmatpush1.msra.mxu0 %v694
    %2318 = vmatprep.subr.mxu0 %v693
    %2319 = vmatpush1.msra.mxu0 %v692
    %2320 = vmatprep.subr.mxu0 %v691
    %2321 = vmatpush1.msra.mxu0 %v690
    %2322 = vmatprep.subr.mxu0 %v689
    %2323 = vmatpush1.msra.mxu0 %v688
    %2324 = vmatprep.subr.mxu0 %v687
    %2325 = vmatpush1.msra.mxu0 %v686
    %2326 = vmatprep.subr.mxu0 %v685
    %2327 = vmatpush1.msra.mxu0 %v684
    %2328 = vmatprep.subr.mxu0 %v683
    %2329 = vmatpush1.msra.mxu0 %v682
    %2330 = vmatprep.subr.mxu0 %v681
    %2331 = vmatpush1.msra.mxu0 %v680
    %2332 = vmatprep.subr.mxu0 %v679
    %2333 = vmatpush1.msra.mxu0 %v678
    %2334 = vmatprep.subr.mxu0 %v677
    %2335 = vmatpush1.msra.mxu0 %v676
    %2336 = vmatprep.subr.mxu0 %v675
    %2337 = vmatpush1.msra.mxu0 %v674
    %2338 = vmatprep.subr.mxu0 %v673
    %2339 = vmatpush1.msra.mxu0 %v672
    %2340 = vmatprep.subr.mxu0 0.0
    %2341 = vmatpush2.msra.mxu0 0.0
    %2342 = vmatprep.subr.mxu0 0.0
    %2343 = vmatpush2.msra.mxu0 0.0
    %2344 = vmatprep.subr.mxu0 0.0
    %2345 = vmatpush2.msra.mxu0 0.0
    %2346 = vmatprep.subr.mxu0 0.0
    %2347 = vmatpush2.msra.mxu0 0.0
    %2348 = vmatprep.subr.mxu0 0.0
    %2349 = vmatpush2.msra.mxu0 0.0
    %2350 = vmatprep.subr.mxu0 0.0
    %2351 = vmatpush2.msra.mxu0 0.0
    %2352 = vmatprep.subr.mxu0 0.0
    %2353 = vmatpush2.msra.mxu0 0.0
    %2354 = vmatprep.subr.mxu0 0.0
    %2355 = vmatpush2.msra.mxu0 0.0
    %2356 = vmatprep.subr.mxu0 0.0
    %2357 = vmatpush2.msra.mxu0 0.0
    %2358 = vmatprep.subr.mxu0 0.0
    %2359 = vmatpush2.msra.mxu0 0.0
    %2360 = vmatprep.subr.mxu0 0.0
    %2361 = vmatpush2.msra.mxu0 0.0
    %2362 = vmatprep.subr.mxu0 0.0
    %2363 = vmatpush2.msra.mxu0 0.0
    %2364 = vmatprep.subr.mxu0 0.0
    %2365 = vmatpush2.msra.mxu0 0.0
    %2366 = vmatprep.subr.mxu0 0.0
    %2367 = vmatpush2.msra.mxu0 0.0
    %2368 = vmatprep.subr.mxu0 0.0
    %2369 = vmatpush2.msra.mxu0 0.0
    %2370 = vmatprep.subr.mxu0 0.0
    %2371 = vmatpush2.msra.mxu0 0.0
    %2372 = vmatprep.mubr.f32.mxu0 0.0
    %2373 = vmatmul.mubr.f32.gmra.mxu0 %v2306
    %v2374 = vpop.f32.mrf.mxu0
    %v2375 = vadd.f32 %v709, %v2374
    %v2376 = vpop.f32.mrf.mxu0
    %v2377 = vadd.f32 %v713, %v2376
    %2378 = vmatprep.mubr.f32.mxu0 0.0
    %2379 = vmatmul.mubr.f32.gmra.mxu0 %v2307
    %v2380 = vpop.f32.mrf.mxu0
    %v2381 = vadd.f32 %v709, %v2380
    %v2382 = vpop.f32.mrf.mxu0
    %v2383 = vadd.f32 %v713, %v2382
    %2384 = vdwg.mxu0
    %v2385 = vxor.u32 %v2375, 2147483648
    %v2386 = vxor.u32 %v2381, 2147483648
    %v2387 = vmul.f32 %v2385, 1.442695
    %v2388 = vpow.pop %v2387
    %v2389 = vmul.f32 %v2386, 1.442695
    %v2390 = vpow.pop %v2389
    %v2391 = vadd.f32 %v2388, 1.0
    %v2392 = vadd.f32 %v2390, 1.0
    %v2393 = vrcp.pop %v2391
    %v2394 = vmul.f32 1.0, %v2393
    %v2395 = vrcp.pop %v2392
    %v2396 = vmul.f32 1.0, %v2395
    %v2397 = vtanh.pop %v2377
    %v2398 = vtanh.pop %v2383
    %v2399 = vxor.u32 %v2377, 2147483648
    %v2400 = vxor.u32 %v2383, 2147483648
    %v2401 = vmul.f32 %v2399, 1.442695
    %v2402 = vpow.pop %v2401
    %v2403 = vmul.f32 %v2400, 1.442695
    %v2404 = vpow.pop %v2403
    %v2405 = vadd.f32 %v2402, 1.0
    %v2406 = vadd.f32 %v2404, 1.0
    %v2407 = vrcp.pop %v2405
    %v2408 = vmul.f32 1.0, %v2407
    %v2409 = vrcp.pop %v2406
    %v2410 = vmul.f32 1.0, %v2409
    %v2411 = vmul.f32 %v2394, %v2159
    %v2412 = vmul.f32 %v2396, %v2160
    %v2413 = vmul.f32 %v2394, %v2397
    %v2414 = vmul.f32 %v2396, %v2398
    %2417 = vrot.lane.b32.xlu0 %v2413, 64
    %v2418 = vpop.permute.xlu0 %2417
    %2419 = vrot.lane.b32.xlu0 %v2414, 64
    %v2420 = vpop.permute.xlu0 %2419
    %v2423 = vadd.f32 %v2411, %v2418
    %v2424 = vadd.f32 %v2412, %v2420
    %v2425 = vtanh.pop %v2423
    %v2426 = vtanh.pop %v2424
    %v2427 = vmul.f32 %v2408, %v2425
    %v2428 = vmul.f32 %v2410, %v2426
    %v2429 = vld [vmem:[#allocation2 + $0xe0] sm:$0xff]
    %v2430 = vld [vmem:[#allocation2 + $0xe8] sm:$0xff]
    %v2431 = vld [vmem:[#allocation2 + $0xf0] sm:$0xff]
    %v2432 = vld [vmem:[#allocation2 + $0xf8] sm:$0xff]
    %v2433 = vsel %vm514, %v2301, 0
    %v2435 = vsel %vm514, %v2303, 0
    %2437 = vmatprep.subr.mxu0 0.0
    %2438 = vmatpush1.msra.mxu0 0.0
    %2439 = vmatprep.subr.mxu0 0.0
    %2440 = vmatpush1.msra.mxu0 0.0
    %2441 = vmatprep.subr.mxu0 0.0
    %2442 = vmatpush1.msra.mxu0 0.0
    %2443 = vmatprep.subr.mxu0 0.0
    %2444 = vmatpush1.msra.mxu0 0.0
    %2445 = vmatprep.subr.mxu0 0.0
    %2446 = vmatpush1.msra.mxu0 0.0
    %2447 = vmatprep.subr.mxu0 0.0
    %2448 = vmatpush1.msra.mxu0 0.0
    %2449 = vmatprep.subr.mxu0 0.0
    %2450 = vmatpush1.msra.mxu0 0.0
    %2451 = vmatprep.subr.mxu0 0.0
    %2452 = vmatpush1.msra.mxu0 0.0
    %2453 = vmatprep.subr.mxu0 %v513
    %2454 = vmatpush1.msra.mxu0 %v512
    %2455 = vmatprep.subr.mxu0 %v511
    %2456 = vmatpush1.msra.mxu0 %v510
    %2457 = vmatprep.subr.mxu0 %v509
    %2458 = vmatpush1.msra.mxu0 %v508
    %2459 = vmatprep.subr.mxu0 %v507
    %2460 = vmatpush1.msra.mxu0 %v506
    %2461 = vmatprep.subr.mxu0 %v505
    %2462 = vmatpush1.msra.mxu0 %v504
    %2463 = vmatprep.subr.mxu0 %v503
    %2464 = vmatpush1.msra.mxu0 %v502
    %2465 = vmatprep.subr.mxu0 %v501
    %2466 = vmatpush1.msra.mxu0 %v500
    %2467 = vmatprep.subr.mxu0 %v499
    %2468 = vmatpush1.msra.mxu0 %v498
    %2469 = vmatprep.subr.mxu0 0.0
    %2470 = vmatpush2.msra.mxu0 0.0
    %2471 = vmatprep.subr.mxu0 0.0
    %2472 = vmatpush2.msra.mxu0 0.0
    %2473 = vmatprep.subr.mxu0 0.0
    %2474 = vmatpush2.msra.mxu0 0.0
    %2475 = vmatprep.subr.mxu0 0.0
    %2476 = vmatpush2.msra.mxu0 0.0
    %2477 = vmatprep.subr.mxu0 0.0
    %2478 = vmatpush2.msra.mxu0 0.0
    %2479 = vmatprep.subr.mxu0 0.0
    %2480 = vmatpush2.msra.mxu0 0.0
    %2481 = vmatprep.subr.mxu0 0.0
    %2482 = vmatpush2.msra.mxu0 0.0
    %2483 = vmatprep.subr.mxu0 0.0
    %2484 = vmatpush2.msra.mxu0 0.0
    %2485 = vmatprep.subr.mxu0 0.0
    %2486 = vmatpush2.msra.mxu0 0.0
    %2487 = vmatprep.subr.mxu0 0.0
    %2488 = vmatpush2.msra.mxu0 0.0
    %2489 = vmatprep.subr.mxu0 0.0
    %2490 = vmatpush2.msra.mxu0 0.0
    %2491 = vmatprep.subr.mxu0 0.0
    %2492 = vmatpush2.msra.mxu0 0.0
    %2493 = vmatprep.subr.mxu0 0.0
    %2494 = vmatpush2.msra.mxu0 0.0
    %2495 = vmatprep.subr.mxu0 0.0
    %2496 = vmatpush2.msra.mxu0 0.0
    %2497 = vmatprep.subr.mxu0 0.0
    %2498 = vmatpush2.msra.mxu0 0.0
    %2499 = vmatprep.subr.mxu0 0.0
    %2500 = vmatpush2.msra.mxu0 0.0
    %2501 = vmatprep.mubr.f32.mxu0 0.0
    %2502 = vmatmul.mubr.f32.gmra.mxu0 %v2433
    %v2503 = vpop.f32.mrf.mxu0
    %v2504 = vadd.f32 0.0, %v2503
    %v2505 = vpop.f32.mrf.mxu0
    %v2506 = vadd.f32 0.0, %v2505
    %2507 = vmatprep.mubr.f32.mxu0 0.0
    %2508 = vmatmul.mubr.f32.gmra.mxu0 %v2435
    %v2509 = vpop.f32.mrf.mxu0
    %v2510 = vadd.f32 0.0, %v2509
    %v2511 = vpop.f32.mrf.mxu0
    %v2512 = vadd.f32 0.0, %v2511
    %2513 = vdwg.mxu0
    %v2514 = vadd.f32 %v2429, %v2504
    %v2515 = vadd.f32 %v2430, %v2506
    %v2516 = vadd.f32 %v2431, %v2510
    %v2517 = vadd.f32 %v2432, %v2512
    %v2518 = vxor.u32 %v2514, 2147483648
    %v2519 = vxor.u32 %v2516, 2147483648
    %v2520 = vmul.f32 %v2518, 1.442695
    %v2521 = vpow.pop %v2520
    %v2522 = vmul.f32 %v2519, 1.442695
    %v2523 = vpow.pop %v2522
    %v2524 = vadd.f32 %v2521, 1.0
    %v2525 = vadd.f32 %v2523, 1.0
    %v2526 = vrcp.pop %v2524
    %v2527 = vmul.f32 1.0, %v2526
    %v2528 = vrcp.pop %v2525
    %v2529 = vmul.f32 1.0, %v2528
    %v2530 = vtanh.pop %v2515
    %v2531 = vtanh.pop %v2517
    %v2532 = vxor.u32 %v2515, 2147483648
    %v2533 = vxor.u32 %v2517, 2147483648
    %v2534 = vmul.f32 %v2532, 1.442695
    %v2535 = vpow.pop %v2534
    %v2536 = vmul.f32 %v2533, 1.442695
    %v2537 = vpow.pop %v2536
    %v2538 = vadd.f32 %v2535, 1.0
    %v2539 = vadd.f32 %v2537, 1.0
    %v2540 = vrcp.pop %v2538
    %v2541 = vmul.f32 1.0, %v2540
    %v2542 = vrcp.pop %v2539
    %v2543 = vmul.f32 1.0, %v2542
    %v2544 = vmul.f32 %v2527, %v2292
    %v2545 = vmul.f32 %v2529, %v2293
    %v2546 = vmul.f32 %v2527, %v2530
    %v2547 = vmul.f32 %v2529, %v2531
    %2550 = vrot.lane.b32.xlu0 %v2546, 64
    %v2551 = vpop.permute.xlu0 %2550
    %2552 = vrot.lane.b32.xlu0 %v2547, 64
    %v2553 = vpop.permute.xlu0 %2552
    %v2556 = vadd.f32 %v2544, %v2551
    %v2557 = vadd.f32 %v2545, %v2553
    %v2558 = vtanh.pop %v2556
    %v2559 = vtanh.pop %v2557
    %v2560 = vmul.f32 %v2541, %v2558
    %v2561 = vmul.f32 %v2543, %v2559
    %2564 = vrot.lane.b32.xlu0 %v2560, 64
    %v2565 = vpop.permute.xlu0 %2564
    %2566 = vrot.lane.b32.xlu0 %v2561, 64
    %v2567 = vpop.permute.xlu0 %2566
    %v2570 = vsel %vm514, %v2565, %v2427
    %v2571 = vsel %vm514, %v2567, %v2428
    %2572 = vmatprep.subr.mxu0 %v703
    %2573 = vmatpush1.msra.mxu0 %v702
    %2574 = vmatprep.subr.mxu0 %v701
    %2575 = vmatpush1.msra.mxu0 %v700
    %2576 = vmatprep.subr.mxu0 %v699
    %2577 = vmatpush1.msra.mxu0 %v698
    %2578 = vmatprep.subr.mxu0 %v697
    %2579 = vmatpush1.msra.mxu0 %v696
    %2580 = vmatprep.subr.mxu0 %v695
    %2581 = vmatpush1.msra.mxu0 %v694
    %2582 = vmatprep.subr.mxu0 %v693
    %2583 = vmatpush1.msra.mxu0 %v692
    %2584 = vmatprep.subr.mxu0 %v691
    %2585 = vmatpush1.msra.mxu0 %v690
    %2586 = vmatprep.subr.mxu0 %v689
    %2587 = vmatpush1.msra.mxu0 %v688
    %2588 = vmatprep.subr.mxu0 %v687
    %2589 = vmatpush1.msra.mxu0 %v686
    %2590 = vmatprep.subr.mxu0 %v685
    %2591 = vmatpush1.msra.mxu0 %v684
    %2592 = vmatprep.subr.mxu0 %v683
    %2593 = vmatpush1.msra.mxu0 %v682
    %2594 = vmatprep.subr.mxu0 %v681
    %2595 = vmatpush1.msra.mxu0 %v680
    %2596 = vmatprep.subr.mxu0 %v679
    %2597 = vmatpush1.msra.mxu0 %v678
    %2598 = vmatprep.subr.mxu0 %v677
    %2599 = vmatpush1.msra.mxu0 %v676
    %2600 = vmatprep.subr.mxu0 %v675
    %2601 = vmatpush1.msra.mxu0 %v674
    %2602 = vmatprep.subr.mxu0 %v673
    %2603 = vmatpush1.msra.mxu0 %v672
    %2604 = vmatprep.subr.mxu0 0.0
    %2605 = vmatpush2.msra.mxu0 0.0
    %2606 = vmatprep.subr.mxu0 0.0
    %2607 = vmatpush2.msra.mxu0 0.0
    %2608 = vmatprep.subr.mxu0 0.0
    %2609 = vmatpush2.msra.mxu0 0.0
    %2610 = vmatprep.subr.mxu0 0.0
    %2611 = vmatpush2.msra.mxu0 0.0
    %2612 = vmatprep.subr.mxu0 0.0
    %2613 = vmatpush2.msra.mxu0 0.0
    %2614 = vmatprep.subr.mxu0 0.0
    %2615 = vmatpush2.msra.mxu0 0.0
    %2616 = vmatprep.subr.mxu0 0.0
    %2617 = vmatpush2.msra.mxu0 0.0
    %2618 = vmatprep.subr.mxu0 0.0
    %2619 = vmatpush2.msra.mxu0 0.0
    %2620 = vmatprep.subr.mxu0 0.0
    %2621 = vmatpush2.msra.mxu0 0.0
    %2622 = vmatprep.subr.mxu0 0.0
    %2623 = vmatpush2.msra.mxu0 0.0
    %2624 = vmatprep.subr.mxu0 0.0
    %2625 = vmatpush2.msra.mxu0 0.0
    %2626 = vmatprep.subr.mxu0 0.0
    %2627 = vmatpush2.msra.mxu0 0.0
    %2628 = vmatprep.subr.mxu0 0.0
    %2629 = vmatpush2.msra.mxu0 0.0
    %2630 = vmatprep.subr.mxu0 0.0
    %2631 = vmatpush2.msra.mxu0 0.0
    %2632 = vmatprep.subr.mxu0 0.0
    %2633 = vmatpush2.msra.mxu0 0.0
    %2634 = vmatprep.subr.mxu0 0.0
    %2635 = vmatpush2.msra.mxu0 0.0
    %2636 = vmatprep.mubr.f32.mxu0 0.0
    %2637 = vmatmul.mubr.f32.gmra.mxu0 %v2570
    %v2638 = vpop.f32.mrf.mxu0
    %v2639 = vadd.f32 %v709, %v2638
    %v2640 = vpop.f32.mrf.mxu0
    %v2641 = vadd.f32 %v713, %v2640
    %2642 = vmatprep.mubr.f32.mxu0 0.0
    %2643 = vmatmul.mubr.f32.gmra.mxu0 %v2571
    %v2644 = vpop.f32.mrf.mxu0
    %v2645 = vadd.f32 %v709, %v2644
    %v2646 = vpop.f32.mrf.mxu0
    %v2647 = vadd.f32 %v713, %v2646
    %2648 = vdwg.mxu0
    %v2649 = vxor.u32 %v2639, 2147483648
    %v2650 = vxor.u32 %v2645, 2147483648
    %v2651 = vmul.f32 %v2649, 1.442695
    %v2652 = vpow.pop %v2651
    %v2653 = vmul.f32 %v2650, 1.442695
    %v2654 = vpow.pop %v2653
    %v2655 = vadd.f32 %v2652, 1.0
    %v2656 = vadd.f32 %v2654, 1.0
    %v2657 = vrcp.pop %v2655
    %v2658 = vmul.f32 1.0, %v2657
    %v2659 = vrcp.pop %v2656
    %v2660 = vmul.f32 1.0, %v2659
    %v2661 = vtanh.pop %v2641
    %v2662 = vtanh.pop %v2647
    %v2663 = vxor.u32 %v2641, 2147483648
    %v2664 = vxor.u32 %v2647, 2147483648
    %v2665 = vmul.f32 %v2663, 1.442695
    %v2666 = vpow.pop %v2665
    %v2667 = vmul.f32 %v2664, 1.442695
    %v2668 = vpow.pop %v2667
    %v2669 = vadd.f32 %v2666, 1.0
    %v2670 = vadd.f32 %v2668, 1.0
    %v2671 = vrcp.pop %v2669
    %v2672 = vmul.f32 1.0, %v2671
    %v2673 = vrcp.pop %v2670
    %v2674 = vmul.f32 1.0, %v2673
    %v2675 = vmul.f32 %v2658, %v2423
    %v2676 = vmul.f32 %v2660, %v2424
    %v2677 = vmul.f32 %v2658, %v2661
    %v2678 = vmul.f32 %v2660, %v2662
    %2681 = vrot.lane.b32.xlu0 %v2677, 64
    %v2682 = vpop.permute.xlu0 %2681
    %2683 = vrot.lane.b32.xlu0 %v2678, 64
    %v2684 = vpop.permute.xlu0 %2683
    %v2687 = vadd.f32 %v2675, %v2682
    %v2688 = vadd.f32 %v2676, %v2684
    %v2689 = vtanh.pop %v2687
    %v2690 = vtanh.pop %v2688
    %v2691 = vmul.f32 %v2672, %v2689
    %v2692 = vmul.f32 %v2674, %v2690
    %v2693 = vld [vmem:[#allocation14] sm:$0xff]
    %v2694 = vld [vmem:[#allocation14 + $0x8] sm:$0xff]
    %v2695 = vld [vmem:[#allocation14 + $0x10] sm:$0xff]
    %v2696 = vld [vmem:[#allocation14 + $0x18] sm:$0xff]
    %v2697 = vld [vmem:[#allocation14 + $0x20] sm:$0xff]
    %v2698 = vld [vmem:[#allocation14 + $0x28] sm:$0xff]
    %v2699 = vld [vmem:[#allocation14 + $0x30] sm:$0xff]
    %v2700 = vld [vmem:[#allocation14 + $0x38] sm:$0xff]
    %v2701 = vld [vmem:[#allocation3] sm:$0xff]
    %v2702 = vld [vmem:[#allocation3 + $0x8] sm:$0xff]
    %v2703 = vld [vmem:[#allocation15] sm:$0xff]
    %v2704 = vld [vmem:[#allocation15 + $0x8] sm:$0xff]
    %v2705 = vld [vmem:[#allocation15 + $0x10] sm:$0xff]
    %v2706 = vld [vmem:[#allocation15 + $0x18] sm:$0x7]
    %vm2707 = vcmask 220160
    %v2709 = vsel %vm2707, %v2701, 0
    %v2712 = vsel %vm2707, %v2702, 0
    %vm2714 = vcmask 1042432
    %v2716 = vsel %vm2714, %v2706, 0
    %2718 = vmatprep.subr.mxu0 0.0
    %2719 = vmatpush1.msra.mxu0 0.0
    %2720 = vmatprep.subr.mxu0 0.0
    %2721 = vmatpush1.msra.mxu0 0.0
    %2722 = vmatprep.subr.mxu0 0.0
    %2723 = vmatpush1.msra.mxu0 0.0
    %2724 = vmatprep.subr.mxu0 0.0
    %2725 = vmatpush1.msra.mxu0 0.0
    %2726 = vmatprep.subr.mxu0 0.0
    %2727 = vmatpush1.msra.mxu0 0.0
    %2728 = vmatprep.subr.mxu0 0.0
    %2729 = vmatpush1.msra.mxu0 0.0
    %2730 = vmatprep.subr.mxu0 0.0
    %2731 = vmatpush1.msra.mxu0 0.0
    %2732 = vmatprep.subr.mxu0 0.0
    %2733 = vmatpush1.msra.mxu0 0.0
    %2734 = vmatprep.subr.mxu0 0.0
    %2735 = vmatpush1.msra.mxu0 0.0
    %2736 = vmatprep.subr.mxu0 0.0
    %2737 = vmatpush1.msra.mxu0 0.0
    %2738 = vmatprep.subr.mxu0 0.0
    %2739 = vmatpush1.msra.mxu0 0.0
    %2740 = vmatprep.subr.mxu0 0.0
    %2741 = vmatpush1.msra.mxu0 0.0
    %2742 = vmatprep.subr.mxu0 0.0
    %2743 = vmatpush1.msra.mxu0 %v2716
    %2744 = vmatprep.subr.mxu0 0.0
    %2745 = vmatpush1.msra.mxu0 %v2705
    %2746 = vmatprep.subr.mxu0 0.0
    %2747 = vmatpush1.msra.mxu0 %v2704
    %2748 = vmatprep.subr.mxu0 0.0
    %2749 = vmatpush1.msra.mxu0 %v2703
    %2750 = vmatprep.subr.mxu0 0.0
    %2751 = vmatpush2.msra.mxu0 0.0
    %2752 = vmatprep.subr.mxu0 0.0
    %2753 = vmatpush2.msra.mxu0 0.0
    %2754 = vmatprep.subr.mxu0 0.0
    %2755 = vmatpush2.msra.mxu0 0.0
    %2756 = vmatprep.subr.mxu0 0.0
    %2757 = vmatpush2.msra.mxu0 0.0
    %2758 = vmatprep.subr.mxu0 0.0
    %2759 = vmatpush2.msra.mxu0 0.0
    %2760 = vmatprep.subr.mxu0 0.0
    %2761 = vmatpush2.msra.mxu0 0.0
    %2762 = vmatprep.subr.mxu0 0.0
    %2763 = vmatpush2.msra.mxu0 0.0
    %2764 = vmatprep.subr.mxu0 0.0
    %2765 = vmatpush2.msra.mxu0 0.0
    %2766 = vmatprep.subr.mxu0 0.0
    %2767 = vmatpush2.msra.mxu0 0.0
    %2768 = vmatprep.subr.mxu0 0.0
    %2769 = vmatpush2.msra.mxu0 0.0
    %2770 = vmatprep.subr.mxu0 0.0
    %2771 = vmatpush2.msra.mxu0 0.0
    %2772 = vmatprep.subr.mxu0 0.0
    %2773 = vmatpush2.msra.mxu0 0.0
    %2774 = vmatprep.subr.mxu0 0.0
    %2775 = vmatpush2.msra.mxu0 0.0
    %2776 = vmatprep.subr.mxu0 0.0
    %2777 = vmatpush2.msra.mxu0 0.0
    %2778 = vmatprep.subr.mxu0 0.0
    %2779 = vmatpush2.msra.mxu0 0.0
    %2780 = vmatprep.subr.mxu0 0.0
    %2781 = vmatpush2.msra.mxu0 0.0
    %2782 = vmatprep.mubr.f32.mxu0 0.0
    %2783 = vmatmul.mubr.f32.gmra.mxu0 %v2709
    %v2784 = vpop.f32.mrf.mxu0
    %v2785 = vadd.f32 0.0, %v2784
    %v2786 = vpop.f32.mrf.mxu0
    %2787 = vmatprep.mubr.f32.mxu0 0.0
    %2788 = vmatmul.mubr.f32.gmra.mxu0 %v2712
    %v2789 = vpop.f32.mrf.mxu0
    %v2790 = vadd.f32 0.0, %v2789
    %v2791 = vpop.f32.mrf.mxu0
    %2792 = vdwg.mxu0
    %2795 = vrot.lane.b32.xlu0 %v2691, 64
    %v2796 = vpop.permute.xlu0 %2795
    %2797 = vrot.lane.b32.xlu0 %v2692, 64
    %v2798 = vpop.permute.xlu0 %2797
    %v2799 = vsel %vm514, %v2796, 0
    %v2801 = vsel %vm514, %v2798, 0
    %2803 = vmatprep.subr.mxu0 0.0
    %2804 = vmatpush1.msra.mxu0 0.0
    %2805 = vmatprep.subr.mxu0 0.0
    %2806 = vmatpush1.msra.mxu0 0.0
    %2807 = vmatprep.subr.mxu0 0.0
    %2808 = vmatpush1.msra.mxu0 0.0
    %2809 = vmatprep.subr.mxu0 0.0
    %2810 = vmatpush1.msra.mxu0 0.0
    %2811 = vmatprep.subr.mxu0 0.0
    %2812 = vmatpush1.msra.mxu0 0.0
    %2813 = vmatprep.subr.mxu0 0.0
    %2814 = vmatpush1.msra.mxu0 0.0
    %2815 = vmatprep.subr.mxu0 0.0
    %2816 = vmatpush1.msra.mxu0 0.0
    %2817 = vmatprep.subr.mxu0 0.0
    %2818 = vmatpush1.msra.mxu0 0.0
    %2819 = vmatprep.subr.mxu0 0.0
    %2820 = vmatpush1.msra.mxu0 %v2700
    %2821 = vmatprep.subr.mxu0 0.0
    %2822 = vmatpush1.msra.mxu0 %v2699
    %2823 = vmatprep.subr.mxu0 0.0
    %2824 = vmatpush1.msra.mxu0 %v2698
    %2825 = vmatprep.subr.mxu0 0.0
    %2826 = vmatpush1.msra.mxu0 %v2697
    %2827 = vmatprep.subr.mxu0 0.0
    %2828 = vmatpush1.msra.mxu0 %v2696
    %2829 = vmatprep.subr.mxu0 0.0
    %2830 = vmatpush1.msra.mxu0 %v2695
    %2831 = vmatprep.subr.mxu0 0.0
    %2832 = vmatpush1.msra.mxu0 %v2694
    %2833 = vmatprep.subr.mxu0 0.0
    %2834 = vmatpush1.msra.mxu0 %v2693
    %2835 = vmatprep.subr.mxu0 0.0
    %2836 = vmatpush2.msra.mxu0 0.0
    %2837 = vmatprep.subr.mxu0 0.0
    %2838 = vmatpush2.msra.mxu0 0.0
    %2839 = vmatprep.subr.mxu0 0.0
    %2840 = vmatpush2.msra.mxu0 0.0
    %2841 = vmatprep.subr.mxu0 0.0
    %2842 = vmatpush2.msra.mxu0 0.0
    %2843 = vmatprep.subr.mxu0 0.0
    %2844 = vmatpush2.msra.mxu0 0.0
    %2845 = vmatprep.subr.mxu0 0.0
    %2846 = vmatpush2.msra.mxu0 0.0
    %2847 = vmatprep.subr.mxu0 0.0
    %2848 = vmatpush2.msra.mxu0 0.0
    %2849 = vmatprep.subr.mxu0 0.0
    %2850 = vmatpush2.msra.mxu0 0.0
    %2851 = vmatprep.subr.mxu0 0.0
    %2852 = vmatpush2.msra.mxu0 0.0
    %2853 = vmatprep.subr.mxu0 0.0
    %2854 = vmatpush2.msra.mxu0 0.0
    %2855 = vmatprep.subr.mxu0 0.0
    %2856 = vmatpush2.msra.mxu0 0.0
    %2857 = vmatprep.subr.mxu0 0.0
    %2858 = vmatpush2.msra.mxu0 0.0
    %2859 = vmatprep.subr.mxu0 0.0
    %2860 = vmatpush2.msra.mxu0 0.0
    %2861 = vmatprep.subr.mxu0 0.0
    %2862 = vmatpush2.msra.mxu0 0.0
    %2863 = vmatprep.subr.mxu0 0.0
    %2864 = vmatpush2.msra.mxu0 0.0
    %2865 = vmatprep.subr.mxu0 0.0
    %2866 = vmatpush2.msra.mxu0 0.0
    %2867 = vmatprep.mubr.f32.mxu0 0.0
    %2868 = vmatmul.mubr.f32.gmra.mxu0 %v2799
    %v2869 = vpop.f32.mrf.mxu0
    %v2870 = vadd.f32 %v2785, %v2869
    %v2871 = vpop.f32.mrf.mxu0
    %2872 = vmatprep.mubr.f32.mxu0 0.0
    %2873 = vmatmul.mubr.f32.gmra.mxu0 %v2801
    %v2874 = vpop.f32.mrf.mxu0
    %v2875 = vadd.f32 %v2790, %v2874
    %v2876 = vpop.f32.mrf.mxu0
    %2877 = vdwg.mxu0
    %v2878 = vld [vmem:[%s11] sm:$0x1]
    %v2880 = vlaneseq
    %v2881 = vshrl.u32 %v2880, 7
    %v2882 = vsub.s32 0, %v2881
    %v2883 = vrot.slane %v2878, %v2882
    %v2885 = vadd.f32 %v2870, %v2883
    %v2886 = vadd.f32 %v2875, %v2883
    %v2887 = vld [vmem:[%s12] sm:$0xff]
    %v2888 = vld [vmem:[%s12 + $0x8] sm:$0xff]
    %v2889 = vld [vmem:[%s12 + $0x10] sm:$0xff]
    %v2890 = vld [vmem:[%s12 + $0x18] sm:$0xff]
    %v2891 = vld [vmem:[%s12 + $0x20] sm:$0xff]
    %v2892 = vld [vmem:[%s12 + $0x28] sm:$0xff]
    %v2893 = vld [vmem:[%s12 + $0x30] sm:$0xff]
    %v2894 = vld [vmem:[%s12 + $0x38] sm:$0xff]
    %v2895 = vld [vmem:[#allocation17] sm:$0x1]
    %v2897 = vlaneseq
    %v2898 = vshrl.u32 %v2897, 7
    %v2899 = vsub.s32 0, %v2898
    %v2900 = vrot.slane %v2895, %v2899
    %v2903 = vsel %vm514, %v2885, 0
    %v2906 = vsel %vm514, %v2886, 0
    %2908 = vmatprep.subr.mxu0 0.0
    %2909 = vmatpush1.msra.mxu0 0.0
    %2910 = vmatprep.subr.mxu0 0.0
    %2911 = vmatpush1.msra.mxu0 0.0
    %2912 = vmatprep.subr.mxu0 0.0
    %2913 = vmatpush1.msra.mxu0 0.0
    %2914 = vmatprep.subr.mxu0 0.0
    %2915 = vmatpush1.msra.mxu0 0.0
    %2916 = vmatprep.subr.mxu0 0.0
    %2917 = vmatpush1.msra.mxu0 0.0
    %2918 = vmatprep.subr.mxu0 0.0
    %2919 = vmatpush1.msra.mxu0 0.0
    %2920 = vmatprep.subr.mxu0 0.0
    %2921 = vmatpush1.msra.mxu0 0.0
    %2922 = vmatprep.subr.mxu0 0.0
    %2923 = vmatpush1.msra.mxu0 0.0
    %2924 = vmatprep.subr.mxu0 0.0
    %2925 = vmatpush1.msra.mxu0 %v2894
    %2926 = vmatprep.subr.mxu0 0.0
    %2927 = vmatpush1.msra.mxu0 %v2893
    %2928 = vmatprep.subr.mxu0 0.0
    %2929 = vmatpush1.msra.mxu0 %v2892
    %2930 = vmatprep.subr.mxu0 0.0
    %2931 = vmatpush1.msra.mxu0 %v2891
    %2932 = vmatprep.subr.mxu0 0.0
    %2933 = vmatpush1.msra.mxu0 %v2890
    %2934 = vmatprep.subr.mxu0 0.0
    %2935 = vmatpush1.msra.mxu0 %v2889
    %2936 = vmatprep.subr.mxu0 0.0
    %2937 = vmatpush1.msra.mxu0 %v2888
    %2938 = vmatprep.subr.mxu0 0.0
    %2939 = vmatpush1.msra.mxu0 %v2887
    %2940 = vmatprep.subr.mxu0 0.0
    %2941 = vmatpush2.msra.mxu0 0.0
    %2942 = vmatprep.subr.mxu0 0.0
    %2943 = vmatpush2.msra.mxu0 0.0
    %2944 = vmatprep.subr.mxu0 0.0
    %2945 = vmatpush2.msra.mxu0 0.0
    %2946 = vmatprep.subr.mxu0 0.0
    %2947 = vmatpush2.msra.mxu0 0.0
    %2948 = vmatprep.subr.mxu0 0.0
    %2949 = vmatpush2.msra.mxu0 0.0
    %2950 = vmatprep.subr.mxu0 0.0
    %2951 = vmatpush2.msra.mxu0 0.0
    %2952 = vmatprep.subr.mxu0 0.0
    %2953 = vmatpush2.msra.mxu0 0.0
    %2954 = vmatprep.subr.mxu0 0.0
    %2955 = vmatpush2.msra.mxu0 0.0
    %2956 = vmatprep.subr.mxu0 0.0
    %2957 = vmatpush2.msra.mxu0 0.0
    %2958 = vmatprep.subr.mxu0 0.0
    %2959 = vmatpush2.msra.mxu0 0.0
    %2960 = vmatprep.subr.mxu0 0.0
    %2961 = vmatpush2.msra.mxu0 0.0
    %2962 = vmatprep.subr.mxu0 0.0
    %2963 = vmatpush2.msra.mxu0 0.0
    %2964 = vmatprep.subr.mxu0 0.0
    %2965 = vmatpush2.msra.mxu0 0.0
    %2966 = vmatprep.subr.mxu0 0.0
    %2967 = vmatpush2.msra.mxu0 0.0
    %2968 = vmatprep.subr.mxu0 0.0
    %2969 = vmatpush2.msra.mxu0 0.0
    %2970 = vmatprep.subr.mxu0 0.0
    %2971 = vmatpush2.msra.mxu0 0.0
    %2972 = vmatprep.mubr.f32.mxu0 0.0
    %2973 = vmatmul.mubr.f32.gmra.mxu0 %v2903
    %v2974 = vpop.f32.mrf.mxu0
    %v2975 = vadd.f32 %v2900, %v2974
    %v2976 = vpop.f32.mrf.mxu0
    %2977 = vmatprep.mubr.f32.mxu0 0.0
    %2978 = vmatmul.mubr.f32.gmra.mxu0 %v2906
    %v2979 = vpop.f32.mrf.mxu0
    %v2980 = vadd.f32 %v2900, %v2979
    %v2981 = vpop.f32.mrf.mxu0
    %2982 = vdwg.mxu0
    %v2983 = vld [vmem:[%s14] sm:$0xff]
    %v2984 = vld [vmem:[%s14 + $0x8] sm:$0xff]
    %v2985 = vld [vmem:[%s14 + $0x10] sm:$0xff]
    %v2986 = vld [vmem:[%s14 + $0x18] sm:$0xff]
    %v2987 = vld [vmem:[#allocation18] sm:$0x1]
    %v2989 = vlaneseq
    %v2990 = vshrl.u32 %v2989, 7
    %v2991 = vsub.s32 0, %v2990
    %v2992 = vrot.slane %v2987, %v2991
    %vm2994 = vcmask 261120
    %v2996 = vsel %vm2994, %v2975, 0
    %v2999 = vsel %vm2994, %v2980, 0
    %3001 = vmatprep.subr.mxu0 0.0
    %3002 = vmatpush1.msra.mxu0 0.0
    %3003 = vmatprep.subr.mxu0 0.0
    %3004 = vmatpush1.msra.mxu0 0.0
    %3005 = vmatprep.subr.mxu0 0.0
    %3006 = vmatpush1.msra.mxu0 0.0
    %3007 = vmatprep.subr.mxu0 0.0
    %3008 = vmatpush1.msra.mxu0 0.0
    %3009 = vmatprep.subr.mxu0 0.0
    %3010 = vmatpush1.msra.mxu0 0.0
    %3011 = vmatprep.subr.mxu0 0.0
    %3012 = vmatpush1.msra.mxu0 0.0
    %3013 = vmatprep.subr.mxu0 0.0
    %3014 = vmatpush1.msra.mxu0 0.0
    %3015 = vmatprep.subr.mxu0 0.0
    %3016 = vmatpush1.msra.mxu0 0.0
    %3017 = vmatprep.subr.mxu0 0.0
    %3018 = vmatpush1.msra.mxu0 0.0
    %3019 = vmatprep.subr.mxu0 0.0
    %3020 = vmatpush1.msra.mxu0 0.0
    %3021 = vmatprep.subr.mxu0 0.0
    %3022 = vmatpush1.msra.mxu0 0.0
    %3023 = vmatprep.subr.mxu0 0.0
    %3024 = vmatpush1.msra.mxu0 0.0
    %3025 = vmatprep.subr.mxu0 0.0
    %3026 = vmatpush1.msra.mxu0 %v2986
    %3027 = vmatprep.subr.mxu0 0.0
    %3028 = vmatpush1.msra.mxu0 %v2985
    %3029 = vmatprep.subr.mxu0 0.0
    %3030 = vmatpush1.msra.mxu0 %v2984
    %3031 = vmatprep.subr.mxu0 0.0
    %3032 = vmatpush1.msra.mxu0 %v2983
    %3033 = vmatprep.subr.mxu0 0.0
    %3034 = vmatpush2.msra.mxu0 0.0
    %3035 = vmatprep.subr.mxu0 0.0
    %3036 = vmatpush2.msra.mxu0 0.0
    %3037 = vmatprep.subr.mxu0 0.0
    %3038 = vmatpush2.msra.mxu0 0.0
    %3039 = vmatprep.subr.mxu0 0.0
    %3040 = vmatpush2.msra.mxu0 0.0
    %3041 = vmatprep.subr.mxu0 0.0
    %3042 = vmatpush2.msra.mxu0 0.0
    %3043 = vmatprep.subr.mxu0 0.0
    %3044 = vmatpush2.msra.mxu0 0.0
    %3045 = vmatprep.subr.mxu0 0.0
    %3046 = vmatpush2.msra.mxu0 0.0
    %3047 = vmatprep.subr.mxu0 0.0
    %3048 = vmatpush2.msra.mxu0 0.0
    %3049 = vmatprep.subr.mxu0 0.0
    %3050 = vmatpush2.msra.mxu0 0.0
    %3051 = vmatprep.subr.mxu0 0.0
    %3052 = vmatpush2.msra.mxu0 0.0
    %3053 = vmatprep.subr.mxu0 0.0
    %3054 = vmatpush2.msra.mxu0 0.0
    %3055 = vmatprep.subr.mxu0 0.0
    %3056 = vmatpush2.msra.mxu0 0.0
    %3057 = vmatprep.subr.mxu0 0.0
    %3058 = vmatpush2.msra.mxu0 0.0
    %3059 = vmatprep.subr.mxu0 0.0
    %3060 = vmatpush2.msra.mxu0 0.0
    %3061 = vmatprep.subr.mxu0 0.0
    %3062 = vmatpush2.msra.mxu0 0.0
    %3063 = vmatprep.subr.mxu0 0.0
    %3064 = vmatpush2.msra.mxu0 0.0
    %3065 = vmatprep.mubr.f32.mxu0 0.0
    %3066 = vmatmul.mubr.f32.gmra.mxu0 %v2996
    %v3067 = vpop.f32.mrf.mxu0
    %v3068 = vadd.f32 %v2992, %v3067
    %v3069 = vpop.f32.mrf.mxu0
    %3070 = vmatprep.mubr.f32.mxu0 0.0
    %3071 = vmatmul.mubr.f32.gmra.mxu0 %v2999
    %v3072 = vpop.f32.mrf.mxu0
    %v3073 = vadd.f32 %v2992, %v3072
    %v3074 = vpop.f32.mrf.mxu0
    %3075 = vdwg.mxu0
    %v3076 = vld [vmem:[#allocation20] sm:$0xff]
    %v3077 = vld [vmem:[#allocation20 + $0x8] sm:$0xff]
    %v3078 = vld [vmem:[%s17] sm:$0x1]
    %v3080 = vlaneseq
    %v3081 = vshrl.u32 %v3080, 7
    %v3082 = vsub.s32 0, %v3081
    %v3083 = vrot.slane %v3078, %v3082
    %vm3085 = vcmask 130048
    %v3087 = vsel %vm3085, %v3068, 0
    %v3090 = vsel %vm3085, %v3073, 0
    %3092 = vmatprep.subr.mxu0 0.0
    %3093 = vmatpush1.msra.mxu0 0.0
    %3094 = vmatprep.subr.mxu0 0.0
    %3095 = vmatpush1.msra.mxu0 0.0
    %3096 = vmatprep.subr.mxu0 0.0
    %3097 = vmatpush1.msra.mxu0 0.0
    %3098 = vmatprep.subr.mxu0 0.0
    %3099 = vmatpush1.msra.mxu0 0.0
    %3100 = vmatprep.subr.mxu0 0.0
    %3101 = vmatpush1.msra.mxu0 0.0
    %3102 = vmatprep.subr.mxu0 0.0
    %3103 = vmatpush1.msra.mxu0 0.0
    %3104 = vmatprep.subr.mxu0 0.0
    %3105 = vmatpush1.msra.mxu0 0.0
    %3106 = vmatprep.subr.mxu0 0.0
    %3107 = vmatpush1.msra.mxu0 0.0
    %3108 = vmatprep.subr.mxu0 0.0
    %3109 = vmatpush1.msra.mxu0 0.0
    %3110 = vmatprep.subr.mxu0 0.0
    %3111 = vmatpush1.msra.mxu0 0.0
    %3112 = vmatprep.subr.mxu0 0.0
    %3113 = vmatpush1.msra.mxu0 0.0
    %3114 = vmatprep.subr.mxu0 0.0
    %3115 = vmatpush1.msra.mxu0 0.0
    %3116 = vmatprep.subr.mxu0 0.0
    %3117 = vmatpush1.msra.mxu0 0.0
    %3118 = vmatprep.subr.mxu0 0.0
    %3119 = vmatpush1.msra.mxu0 0.0
    %3120 = vmatprep.subr.mxu0 0.0
    %3121 = vmatpush1.msra.mxu0 %v3077
    %3122 = vmatprep.subr.mxu0 0.0
    %3123 = vmatpush1.msra.mxu0 %v3076
    %3124 = vmatprep.subr.mxu0 0.0
    %3125 = vmatpush2.msra.mxu0 0.0
    %3126 = vmatprep.subr.mxu0 0.0
    %3127 = vmatpush2.msra.mxu0 0.0
    %3128 = vmatprep.subr.mxu0 0.0
    %3129 = vmatpush2.msra.mxu0 0.0
    %3130 = vmatprep.subr.mxu0 0.0
    %3131 = vmatpush2.msra.mxu0 0.0
    %3132 = vmatprep.subr.mxu0 0.0
    %3133 = vmatpush2.msra.mxu0 0.0
    %3134 = vmatprep.subr.mxu0 0.0
    %3135 = vmatpush2.msra.mxu0 0.0
    %3136 = vmatprep.subr.mxu0 0.0
    %3137 = vmatpush2.msra.mxu0 0.0
    %3138 = vmatprep.subr.mxu0 0.0
    %3139 = vmatpush2.msra.mxu0 0.0
    %3140 = vmatprep.subr.mxu0 0.0
    %3141 = vmatpush2.msra.mxu0 0.0
    %3142 = vmatprep.subr.mxu0 0.0
    %3143 = vmatpush2.msra.mxu0 0.0
    %3144 = vmatprep.subr.mxu0 0.0
    %3145 = vmatpush2.msra.mxu0 0.0
    %3146 = vmatprep.subr.mxu0 0.0
    %3147 = vmatpush2.msra.mxu0 0.0
    %3148 = vmatprep.subr.mxu0 0.0
    %3149 = vmatpush2.msra.mxu0 0.0
    %3150 = vmatprep.subr.mxu0 0.0
    %3151 = vmatpush2.msra.mxu0 0.0
    %3152 = vmatprep.subr.mxu0 0.0
    %3153 = vmatpush2.msra.mxu0 0.0
    %3154 = vmatprep.subr.mxu0 0.0
    %3155 = vmatpush2.msra.mxu0 0.0
    %3156 = vmatprep.mubr.f32.mxu0 0.0
    %3157 = vmatmul.mubr.f32.gmra.mxu0 %v3087
    %v3158 = vpop.f32.mrf.mxu0
    %v3159 = vadd.f32 %v3083, %v3158
    %v3160 = vpop.f32.mrf.mxu0
    %3161 = vmatprep.mubr.f32.mxu0 0.0
    %3162 = vmatmul.mubr.f32.gmra.mxu0 %v3090
    %v3163 = vpop.f32.mrf.mxu0
    %v3164 = vadd.f32 %v3083, %v3163
    %v3165 = vpop.f32.mrf.mxu0
    %3166 = vdwg.mxu0
    %vm3167 = vcmask 56320
    %v3168 = vsel %vm3167, %v3159, 0.0
    %v3169 = vsel %vm3167, %v3164, 0.0
    %v3170 = vadd.f32 %v3168, %v3169
    %3171 = vadd.xlane.f32.xlu0 %v3170
    %v3172 = vpop.xlane.xlu0 %3171
    %v3173 = vrot.slane %v3172, 4
    %v3174 = vadd.f32 %v3172, %v3173
    %v3175 = vrot.slane %v3174, 2
    %v3176 = vadd.f32 %v3174, %v3175
    %v3177 = vrot.slane %v3176, 1
    %v3178 = vadd.f32 %v3176, %v3177
    %s3179 = vtos %v3178
    %v3180 = vstv %s3179
    %v3181 = vrcp.pop 112.0
    %v3182 = vmul.f32 %v3180, %v3181
    %v3183 = vsub.f32 %v3159, %v3182
    %v3184 = vsub.f32 %v3164, %v3182
    %v3185 = vmul.f32 %v3183, %v3183
    %v3186 = vmul.f32 %v3184, %v3184
    %v3187 = vsel %vm3167, %v3185, 0.0
    %v3188 = vsel %vm3167, %v3186, 0.0
    %v3189 = vadd.f32 %v3187, %v3188
    %3190 = vadd.xlane.f32.xlu0 %v3189
    %v3191 = vpop.xlane.xlu0 %3190
    %v3192 = vrot.slane %v3191, 4
    %v3193 = vadd.f32 %v3191, %v3192
    %v3194 = vrot.slane %v3193, 2
    %v3195 = vadd.f32 %v3193, %v3194
    %v3196 = vrot.slane %v3195, 1
    %v3197 = vadd.f32 %v3195, %v3196
    %s3198 = vtos %v3197
    %v3199 = vstv %s3198
    %v3200 = vmul.f32 %v3199, %v3181
    %v3201 = vadd.f32 %v3200, 1e-05
    %v3202 = vrsqrt.pop %v3201
    %3205 = vrot.lane.b32.xlu0 %v3159, 121
    %v3206 = vpop.permute.xlu0 %3205
    %3207 = vrot.lane.b32.xlu0 %v3164, 121
    %v3208 = vpop.permute.xlu0 %3207
    %vm3211 = vcmask 15360
    %v3212 = vsel %vm3211, %v3206, 0.0
    %v3213 = vsel %vm3211, %v3208, 0.0
    %v3214 = vadd.f32 %v3212, %v3213
    %3215 = vadd.xlane.f32.xlu0 %v3214
    %v3216 = vpop.xlane.xlu0 %3215
    %v3217 = vrot.slane %v3216, 4
    %v3218 = vadd.f32 %v3216, %v3217
    %v3219 = vrot.slane %v3218, 2
    %v3220 = vadd.f32 %v3218, %v3219
    %v3221 = vrot.slane %v3220, 1
    %v3222 = vadd.f32 %v3220, %v3221
    %s3223 = vtos %v3222
    %v3224 = vstv %s3223
    %v3225 = vrcp.pop 32.0
    %v3226 = vmul.f32 %v3224, %v3225
    %v3227 = vsub.f32 %v3159, %v3226
    %v3228 = vsub.f32 %v3164, %v3226
    %v3229 = vmul.f32 %v3227, %v3227
    %v3230 = vmul.f32 %v3228, %v3228
    %3233 = vrot.lane.b32.xlu0 %v3229, 121
    %v3234 = vpop.permute.xlu0 %3233
    %3235 = vrot.lane.b32.xlu0 %v3230, 121
    %v3236 = vpop.permute.xlu0 %3235
    %v3239 = vsel %vm3211, %v3234, 0.0
    %v3240 = vsel %vm3211, %v3236, 0.0
    %v3241 = vadd.f32 %v3239, %v3240
    %3242 = vadd.xlane.f32.xlu0 %v3241
    %v3243 = vpop.xlane.xlu0 %3242
    %v3244 = vrot.slane %v3243, 4
    %v3245 = vadd.f32 %v3243, %v3244
    %v3246 = vrot.slane %v3245, 2
    %v3247 = vadd.f32 %v3245, %v3246
    %v3248 = vrot.slane %v3247, 1
    %v3249 = vadd.f32 %v3247, %v3248
    %s3250 = vtos %v3249
    %v3251 = vstv %s3250
    %v3252 = vmul.f32 %v3251, %v3225
    %v3253 = vadd.f32 %v3252, 1e-05
    %v3254 = vrsqrt.pop %v3253
    %v3255 = vlaneseq
    %v3256 = vand.u32 %v3255, 127
    %vm3257 = vcmp.lt.s32.totalorder %v3256, 7
    %vm3258 = vcmp.lt.s32.totalorder %v3256, 9
    %v3259 = vsel %vm3258, %v3226, 0.0
    %v3260 = vsel %vm3257, %v3182, %v3259
    %v3261 = vsel %vm3258, %v3254, 0.0
    %v3262 = vsel %vm3257, %v3202, %v3261
    %v3263 = vsub.f32 %v3159, %v3260
    %v3264 = vsub.f32 %v3164, %v3260
    %v3265 = vmul.f32 %v3263, %v3262
    %v3266 = vmul.f32 %v3264, %v3262
    %3267 = vst [vmem:[#allocation21] sm:$0xff] %v3265
    %3268 = vst [vmem:[#allocation21 + $0x8] sm:$0xff] %v3266
    // Predicated region
    $region118: #{tpu_custom_call.1} parent=1 // pred_check
      _
    $region119: #{tpu_custom_call.1} parent=1 // pred_check_branch
      %3270 = sbr.rel (0) target = $region121
    $region120: #{tpu_custom_call.1} parent=1 // pred_region
      %s3272 = ssub.s32 256, 256
      %3273 = vsyncadd [#allocation5], %s3272
      %s3274 = sshll.u32 [#allocation21], 4
      %s3275 = int_to_ptr.vmem [resolvable:$true] %s3274
      %3280 = dma.vmem_to_hbm [thread:$0]  %s3275, 256, %s18, [#allocation5], 128, 128, 8
    $region121: #{tpu_custom_call.1} parent=1 // pred_fallthru
      _
    // Predicated region
    $region122: #{tpu_custom_call.1} parent=1 // pred_check
      _
    $region123: #{tpu_custom_call.1} parent=1 // pred_check_branch
      %3282 = sbr.rel (0) target = $region125
    $region124: #{tpu_custom_call.1} parent=1 // pred_region
      %3283 = dma.done [#allocation5], 256
    $region125: #{tpu_custom_call.1} parent=1 // pred_fallthru
      _
    %3284 = vsyncpa [#allocation4], 1
    %3285 = vsyncpa [#allocation7], 1
    %3286 = vsyncpa [#allocation10], 1
    %3287 = vsyncpa [#allocation13], 1
    %3288 = vsyncpa [#allocation16], 1
    %3289 = vsyncpa [#allocation19], 1
    %3290 = vsyncpa [#allocation5], 1

</llo_original>
